<compile_context>
chip_gen: v5e
topology: v5e:2x2
jax: 0.10.0
libtpu: 0.0.40
codegen_flags: <defaults>
</compile_context>

<pallas_src>
import functools
import math

import jax
import jax.numpy as jnp
from jax.experimental import pallas as pl
from jax.experimental.pallas import tpu as pltpu


# ----------------------------------------------------------------------------
# Lane-axis tiling helper: full block when small, 2048-wide tiles when large.
# ----------------------------------------------------------------------------
_TM_MAX = 2048  # multiple of 128 -> lane-aligned blocks


def _lane_block(m):
    if m <= _TM_MAX:
        return m, m                              # single full block, no pad
    m_pad = pl.cdiv(m, _TM_MAX) * _TM_MAX
    return _TM_MAX, m_pad


# ----------------------------------------------------------------------------
# Pallas kernels
# ----------------------------------------------------------------------------
def _wxa_bias_act_kernel(w_ref, a_ref, b_ref, o_ref, *, relu):
    """o = act(W @ A + b); W:(Cout,K) A:(K,tm) b:(Cout,1) -> o:(Cout,tm)."""
    acc = jnp.dot(w_ref[...], a_ref[...], preferred_element_type=jnp.float32)
    acc = acc + b_ref[...]                       # lane-broadcast of the bias
    if relu:
        acc = jnp.maximum(acc, 0.0)
    o_ref[...] = acc.astype(o_ref.dtype)


def wxa_bias_act(w, a_t, bias, *, relu=False):
    """Transposed GEMM: act(w @ a_t + bias[:, None]) -> (Cout, M).

    M (the big flattened spatial dim) sits on the lane axis, so stores are
    lane-dense.  Operands are bf16, accumulation f32.
    """
    cout, k = w.shape
    k2, m = a_t.shape
    assert k == k2
    tm, m_pad = _lane_block(m)
    if m_pad != m:
        a_t = jnp.pad(a_t, ((0, 0), (0, m_pad - m)))

    out = pl.pallas_call(
        functools.partial(_wxa_bias_act_kernel, relu=relu),
        out_shape=jax.ShapeDtypeStruct((cout, m_pad), jnp.float32),
        grid_spec=pltpu.PrefetchScalarGridSpec(
            num_scalar_prefetch=0,
            grid=(m_pad // tm,),
            in_specs=[
                pl.BlockSpec((cout, k), lambda i: (0, 0)),
                pl.BlockSpec((k, tm), lambda i: (0, i)),
                pl.BlockSpec((cout, 1), lambda i: (0, 0)),
            ],
            out_specs=pl.BlockSpec((cout, tm), lambda i: (0, i)),
        ),
        compiler_params=pltpu.CompilerParams(
            dimension_semantics=("parallel",)),
    )(w.astype(jnp.bfloat16), a_t.astype(jnp.bfloat16),
      bias.reshape(cout, 1).astype(jnp.float32))
    return out if m_pad == m else out[:, :m]


def _melspec_db_kernel(cs_ref, fb_ref, f_ref, o_ref, *, nfp):
    """Fused windowed-DFT power spectrogram + mel projection + dB.

    cs: (2*nfp, n_fft) packed [cos; -sin], window & normalization folded in
    fb: (n_mels, nfp)  mel filterbank (transposed, zero-padded freq rows)
    f : (n_fft, tm)    audio frames, one frame per lane column
    o : (n_mels, tm)   10*log10(mel power)
    """
    z = jnp.dot(cs_ref[...], f_ref[...], preferred_element_type=jnp.float32)
    re = z[:nfp, :]
    im = z[nfp:, :]
    power = re * re + im * im
    mel = jnp.dot(fb_ref[...], power, preferred_element_type=jnp.float32)
    o_ref[...] = (10.0 / math.log(10.0)) * jnp.log(jnp.maximum(mel, 1e-10))


def melspec_db(frames_t, cs, fb_t):
    """frames_t: (n_fft, M) -> mel power spectrogram in dB, (n_mels, M)."""
    n_fft, m = frames_t.shape
    two_nfp = cs.shape[0]
    nfp = two_nfp // 2
    n_mels = fb_t.shape[0]
    tm, m_pad = _lane_block(m)
    if m_pad != m:
        frames_t = jnp.pad(frames_t, ((0, 0), (0, m_pad - m)))

    out = pl.pallas_call(
        functools.partial(_melspec_db_kernel, nfp=nfp),
        out_shape=jax.ShapeDtypeStruct((n_mels, m_pad), jnp.float32),
        grid_spec=pltpu.PrefetchScalarGridSpec(
            num_scalar_prefetch=0,
            grid=(m_pad // tm,),
            in_specs=[
                pl.BlockSpec((two_nfp, n_fft), lambda i: (0, 0)),
                pl.BlockSpec((n_mels, nfp), lambda i: (0, 0)),
                pl.BlockSpec((n_fft, tm), lambda i: (0, i)),
            ],
            out_specs=pl.BlockSpec((n_mels, tm), lambda i: (0, i)),
        ),
        compiler_params=pltpu.CompilerParams(
            dimension_semantics=("parallel",)),
    )(cs.astype(jnp.bfloat16), fb_t.astype(jnp.float32),
      frames_t.astype(jnp.bfloat16))
    return out if m_pad == m else out[:, :m]


# ----------------------------------------------------------------------------
# Glue ops (plain JAX) -- framing, pooling, dropout, tiny affine ops
# ----------------------------------------------------------------------------
def hann_window(win_length):
    n = jnp.arange(win_length, dtype=jnp.float32)
    return 0.5 * (1.0 - jnp.cos(2.0 * jnp.pi * n / win_length))


def melscale_fbanks_htk(n_freqs, sample_rate, n_mels):
    """torchaudio melscale_fbanks (mel_scale='htk', norm=None, f_min=0)."""
    def hz_to_mel(f):
        return 2595.0 * jnp.log10(1.0 + f / 700.0)

    def mel_to_hz(m):
        return 700.0 * (10.0 ** (m / 2595.0) - 1.0)

    all_freqs = jnp.linspace(0.0, sample_rate / 2.0, n_freqs)
    m_pts = jnp.linspace(hz_to_mel(jnp.float32(0.0)),
                         hz_to_mel(jnp.float32(sample_rate / 2.0)),
                         n_mels + 2)
    f_pts = mel_to_hz(m_pts)
    f_diff = f_pts[1:] - f_pts[:-1]                      # (n_mels+1,)
    slopes = f_pts[None, :] - all_freqs[:, None]         # (n_freqs, n_mels+2)
    down = -slopes[:, :-2] / f_diff[:-1]
    up = slopes[:, 2:] / f_diff[1:]
    fb = jnp.maximum(0.0, jnp.minimum(down, up))         # (n_freqs, n_mels)
    return fb.astype(jnp.float32)


def mel_spectrogram_db(x, hp):
    """x: (B, 1, T) -> channel-first dB mel spec (1, B, n_mels, n_frames)."""
    B = x.shape[0]
    n_fft = hp["n_fft"]
    win_length = n_fft // 2
    hop = hp["hop_len"]
    n_mels = hp["n_mels"]
    n_freqs = n_fft // 2 + 1
    nfp = ((n_freqs + 7) // 8) * 8          # pad freq rows to sublane multiple

    # window padded to n_fft (torch.stft centers the window); normalized=True
    win = hann_window(win_length)
    lpad = (n_fft - win_length) // 2
    win_pad = jnp.pad(win, (lpad, n_fft - win_length - lpad))
    norm_scale = 1.0 / jnp.sqrt(jnp.sum(win_pad ** 2))

    # packed [cos; -sin] DFT matrix with window + normalization folded in
    k = jnp.arange(n_freqs, dtype=jnp.float32)[:, None]
    n = jnp.arange(n_fft, dtype=jnp.float32)[None, :]
    ang = 2.0 * jnp.pi * k * n / n_fft
    c = jnp.cos(ang) * win_pad[None, :] * norm_scale
    s = -jnp.sin(ang) * win_pad[None, :] * norm_scale
    c = jnp.pad(c, ((0, nfp - n_freqs), (0, 0)))
    s = jnp.pad(s, ((0, nfp - n_freqs), (0, 0)))
    cs = jnp.concatenate([c, s], axis=0)                 # (2*nfp, n_fft)

    fb = melscale_fbanks_htk(n_freqs, hp["sample_rate"], n_mels)
    fb_t = jnp.pad(fb.T, ((0, 0), (0, nfp - n_freqs)))   # (n_mels, nfp)

    # center / reflect padding + framing; one frame per lane column
    pad = n_fft // 2
    x_pad = jnp.pad(x[:, 0, :], ((0, 0), (pad, pad)), mode="reflect")
    n_frames = 1 + (x_pad.shape[-1] - n_fft) // hop
    idx = jnp.arange(n_fft)[:, None] + hop * jnp.arange(n_frames)[None, :]
    frames = x_pad[:, idx]                               # (B, n_fft, n_frames)
    frames_t = frames.transpose(1, 0, 2).reshape(n_fft, B * n_frames)

    mel_db = melspec_db(frames_t, cs, fb_t)              # (n_mels, B*n_frames)
    mel_db = mel_db.reshape(n_mels, B, n_frames).transpose(1, 0, 2)
    return mel_db[None]                                  # (1, B, n_mels, frames)


def amplitude_clamp_top_db(x_db_cf, top_db):
    # per-(channel, sample) clamp, matching torchaudio's AmplitudeToDB top_db
    max_db = jnp.max(x_db_cf, axis=(2, 3), keepdims=True)
    return jnp.maximum(x_db_cf, max_db - top_db)


def batchnorm2d_eval_cf(x_cf, weight, bias, running_mean, running_var, eps=1e-5):
    # channel-first layout (C, B, H, W): channel axis is axis 0
    w = weight.reshape(-1, 1, 1, 1)
    b = bias.reshape(-1, 1, 1, 1)
    rm = running_mean.reshape(-1, 1, 1, 1)
    rv = running_var.reshape(-1, 1, 1, 1)
    return (x_cf - rm) / jnp.sqrt(rv + eps) * w + b


def conv2d_cf(x_cf, w, b, *, relu=True):
    """Valid conv, stride 1, on channel-first (Cin, B, H, W) activations.

    im2col is built directly in the transposed-GEMM layout (K, B*Ho*Wo) in
    bf16 (no relayout transposes); GEMM + bias + ReLU run in Pallas and the
    (Cout, B, Ho, Wo) result is already in the layout the next layer needs.
    """
    cin, bsz, h, wd = x_cf.shape
    cout, cin2, kh, kw = w.shape
    assert cin == cin2
    ho, wo = h - kh + 1, wd - kw + 1
    x_bf = x_cf.astype(jnp.bfloat16)
    taps = [x_bf[:, :, i:i + ho, j:j + wo]
            for i in range(kh) for j in range(kw)]       # each (Cin, B, Ho, Wo)
    a_t = jnp.stack(taps, axis=0).reshape(kh * kw * cin, bsz * ho * wo)
    w_ct = w.transpose(0, 2, 3, 1).reshape(cout, kh * kw * cin)
    out = wxa_bias_act(w_ct, a_t, b, relu=relu)          # (Cout, B*Ho*Wo)
    return out.reshape(cout, bsz, ho, wo)


def max_pool2d_cf(x_cf, p):
    c, bsz, h, w = x_cf.shape
    ho, wo = h // p, w // p
    x_cf = x_cf[:, :, :ho * p, :wo * p].reshape(c, bsz, ho, p, wo, p)
    return jnp.max(x_cf, axis=(3, 5))


def dropout(x, key, p=0.2):
    keep = jax.random.bernoulli(key, 1.0 - p, x.shape)
    return jnp.where(keep, x / (1.0 - p), 0.0)


# ----------------------------------------------------------------------------
# Model
# ----------------------------------------------------------------------------
def init_params(key, hp):
    ks = jax.random.split(key, 8)

    def conv_init(k, spec):
        cin, cout, kh, kw = spec
        fan_in = cin * kh * kw
        bound = 1.0 / math.sqrt(fan_in)
        kw_, kb_ = jax.random.split(k)
        w = jax.random.uniform(kw_, (cout, cin, kh, kw), jnp.float32,
                               -bound, bound)
        b = jax.random.uniform(kb_, (cout,), jnp.float32, -bound, bound)
        return w, b

    p = {}
    p["conv0_w"], p["conv0_b"] = conv_init(ks[0], hp["conv0"])
    p["conv1_w"], p["conv1_b"] = conv_init(ks[1], hp["conv1"])
    p["conv2_w"], p["conv2_b"] = conv_init(ks[2], hp["conv2"])

    fin, fout = hp["fc"]
    bound = 1.0 / math.sqrt(fin)
    p["fc_w"] = jax.random.uniform(ks[3], (fout, fin), jnp.float32,
                                   -bound, bound)
    p["fc_b"] = jax.random.uniform(ks[4], (fout,), jnp.float32, -bound, bound)

    # BatchNorm2d(1) defaults
    p["bn0_w"] = jnp.ones((1,), jnp.float32)
    p["bn0_b"] = jnp.zeros((1,), jnp.float32)
    p["bn0_rm"] = jnp.zeros((1,), jnp.float32)
    p["bn0_rv"] = jnp.ones((1,), jnp.float32)
    return p


def simple_conv_net_forward(params, x, hp, dropout_key):
    k0, k1, k2 = jax.random.split(dropout_key, 3)

    x = mel_spectrogram_db(x, hp)                 # (1, B, n_mels, frames), dB
    x = amplitude_clamp_top_db(x, hp["top_db"])
    x = batchnorm2d_eval_cf(x, params["bn0_w"], params["bn0_b"],
                            params["bn0_rm"], params["bn0_rv"])

    x = conv2d_cf(x, params["conv0_w"], params["conv0_b"], relu=True)
    x = max_pool2d_cf(x, 2)
    x = dropout(x, k0, 0.2)

    x = conv2d_cf(x, params["conv1_w"], params["conv1_b"], relu=True)
    x = max_pool2d_cf(x, 3)
    x = dropout(x, k1, 0.2)

    x = conv2d_cf(x, params["conv2_w"], params["conv2_b"], relu=True)
    x = max_pool2d_cf(x, 3)
    x = dropout(x, k2, 0.2)

    # torch.flatten(x, 1) feature ordering is (c, h, w); keep the transposed
    # layout (features on rows, batch on lanes) for the FC GEMM.
    c, bsz, h, w = x.shape
    feat_t = x.transpose(0, 2, 3, 1).reshape(c * h * w, bsz)
    out_t = wxa_bias_act(params["fc_w"], feat_t, params["fc_b"], relu=False)
    return out_t.T                                # (B, num_classes)


# ----------------------------------------------------------------------------
if __name__ == "__main__":
    hparams = {
        "sample_rate": 16000,
        "n_fft": 128,          # win_length = 64
        "hop_len": 32,
        "n_mels": 64,
        "top_db": 80.0,
        "conv0": (1, 8, 3, 3),
        "conv1": (8, 16, 3, 3),
        "conv2": (16, 32, 3, 3),
        "fc": (384, 10),       # 32 ch * 2 * 6 after the conv/pool stack
    }

    # deterministic input: (B, 1, T) waveform -> 128 STFT frames
    x_audio = jax.random.normal(jax.random.PRNGKey(0), (2, 1, 4064),
                                dtype=jnp.float32)
    params = init_params(jax.random.PRNGKey(42), hparams)

    fwd = jax.jit(functools.partial(simple_conv_net_forward, hp=hparams))
    out = fwd(params, x_audio, dropout_key=jax.random.PRNGKey(1234))
    out = jax.block_until_ready(out)
    assert out.shape == (2, hparams["fc"][1])
    assert bool(jnp.all(jnp.isfinite(out)))
    print("KERNEL_OK")
</pallas_src>

<mosaic_0001>
module attributes {stable_mosaic.version = 11 : i64} {
  func.func @_melspec_db_kernel(%arg0: i32, %arg1: memref<144x128xbf16, #tpu.memory_space<vmem>>, %arg2: memref<64x72xf32, #tpu.memory_space<vmem>>, %arg3: memref<128x256xbf16, #tpu.memory_space<vmem>>, %arg4: memref<64x256xf32, #tpu.memory_space<vmem>>) attributes {dimension_semantics = [#tpu.dimension_semantics<parallel>], iteration_bounds = array<i64: 1>, scalar_prefetch = 0 : i64, scratch_operands = 0 : i64, tpu.core_type = #tpu.core_type<tc>, window_params = [{pipeline_mode = #tpu.pipeline_mode<synchronous>, transform_indices = @transform_0, window_bounds = array<i64: 144, 128>}, {pipeline_mode = #tpu.pipeline_mode<synchronous>, transform_indices = @transform_1, window_bounds = array<i64: 64, 72>}, {transform_indices = @transform_2, window_bounds = array<i64: 128, 256>}, {transform_indices = @transform_3, window_bounds = array<i64: 64, 256>}]} {
    %c0 = arith.constant 0 : index
    %c0_0 = arith.constant 0 : index
    %0 = vector.load %arg1[%c0, %c0_0] : memref<144x128xbf16, #tpu.memory_space<vmem>>, vector<144x128xbf16>
    %c0_1 = arith.constant 0 : index
    %c0_2 = arith.constant 0 : index
    %1 = vector.load %arg3[%c0_1, %c0_2] : memref<128x256xbf16, #tpu.memory_space<vmem>>, vector<128x256xbf16>
    %cst = arith.constant dense<0.000000e+00> : vector<144x256xf32>
    %2 = tpu.matmul %0, %1, %cst {dimension_numbers = #tpu.dot_dimension_numbers<[1], [0], [0], [1], [0, 0, 1, 1], [], []>} : vector<144x128xbf16>, vector<128x256xbf16>, vector<144x256xf32> -> vector<144x256xf32>
    %3 = vector.extract_strided_slice %2 {offsets = [0, 0], sizes = [72, 256], strides = [1, 1]} : vector<144x256xf32> to vector<72x256xf32>
    %4 = vector.extract_strided_slice %2 {offsets = [72, 0], sizes = [72, 256], strides = [1, 1]} : vector<144x256xf32> to vector<72x256xf32>
    %5 = arith.mulf %3, %3 : vector<72x256xf32>
    %6 = arith.mulf %4, %4 : vector<72x256xf32>
    %7 = arith.addf %5, %6 : vector<72x256xf32>
    %c0_3 = arith.constant 0 : index
    %c0_4 = arith.constant 0 : index
    %8 = vector.load %arg2[%c0_3, %c0_4] : memref<64x72xf32, #tpu.memory_space<vmem>>, vector<64x72xf32>
    %cst_5 = arith.constant dense<0.000000e+00> : vector<64x256xf32>
    %9 = tpu.matmul %8, %7, %cst_5 {dimension_numbers = #tpu.dot_dimension_numbers<[1], [0], [0], [1], [0, 0, 1, 1], [], []>} : vector<64x72xf32>, vector<72x256xf32>, vector<64x256xf32> -> vector<64x256xf32>
    %cst_6 = arith.constant 1.000000e-10 : f32
    %10 = vector.broadcast %cst_6 : f32 to vector<64x256xf32>
    %11 = arith.maximumf %9, %10 : vector<64x256xf32>
    %12 = math.log %11 : vector<64x256xf32>
    %cst_7 = arith.constant 4.34294462 : f32
    %13 = vector.broadcast %cst_7 : f32 to vector<64x256xf32>
    %14 = arith.mulf %13, %12 : vector<64x256xf32>
    %c0_8 = arith.constant 0 : index
    %c0_9 = arith.constant 0 : index
    %15 = vector.load %arg4[%c0_8, %c0_9] : memref<64x256xf32, #tpu.memory_space<vmem>>, vector<64x256xf32>
    tpu.vector_store %arg4[%c0_8, %c0_9], %14 {strides = array<i32>} : memref<64x256xf32, #tpu.memory_space<vmem>>, vector<64x256xf32>,
    return
  }
  func.func @transform_0(%arg0: i32) -> (i32, i32) {
    %c0_i32 = arith.constant 0 : i32
    %c0_i32_0 = arith.constant 0 : i32
    %c0_i32_1 = arith.constant 0 : i32
    return %c0_i32, %c0_i32_0 : i32, i32
  }
  func.func @transform_1(%arg0: i32) -> (i32, i32) {
    %c0_i32 = arith.constant 0 : i32
    %c0_i32_0 = arith.constant 0 : i32
    %c0_i32_1 = arith.constant 0 : i32
    return %c0_i32, %c0_i32_0 : i32, i32
  }
  func.func @transform_2(%arg0: i32) -> (i32, i32) {
    %c0_i32 = arith.constant 0 : i32
    %c0_i32_0 = arith.constant 0 : i32
    return %c0_i32, %arg0 : i32, i32
  }
  func.func @transform_3(%arg0: i32) -> (i32, i32) {
    %c0_i32 = arith.constant 0 : i32
    %c0_i32_0 = arith.constant 0 : i32
    return %c0_i32, %arg0 : i32, i32
  }
}

module attributes {stable_mosaic.version = 11 : i64} {
  func.func @_wxa_bias_act_kernel(%arg0: i32, %arg1: memref<8x9xbf16, #tpu.memory_space<vmem>>, %arg2: memref<9x2048xbf16, #tpu.memory_space<vmem>>, %arg3: memref<8x1xf32, #tpu.memory_space<vmem>>, %arg4: memref<8x2048xf32, #tpu.memory_space<vmem>>) attributes {dimension_semantics = [#tpu.dimension_semantics<parallel>], iteration_bounds = array<i64: 8>, scalar_prefetch = 0 : i64, scratch_operands = 0 : i64, tpu.core_type = #tpu.core_type<tc>, window_params = [{pipeline_mode = #tpu.pipeline_mode<synchronous>, transform_indices = @transform_0, window_bounds = array<i64: 8, 9>}, {transform_indices = @transform_1, window_bounds = array<i64: 9, 2048>}, {pipeline_mode = #tpu.pipeline_mode<synchronous>, transform_indices = @transform_2, window_bounds = array<i64: 8, 1>}, {transform_indices = @transform_3, window_bounds = array<i64: 8, 2048>}]} {
    %c0 = arith.constant 0 : index
    %c0_0 = arith.constant 0 : index
    %0 = vector.load %arg1[%c0, %c0_0] : memref<8x9xbf16, #tpu.memory_space<vmem>>, vector<8x9xbf16>
    %c0_1 = arith.constant 0 : index
    %c0_2 = arith.constant 0 : index
    %1 = vector.load %arg2[%c0_1, %c0_2] : memref<9x2048xbf16, #tpu.memory_space<vmem>>, vector<9x2048xbf16>
    %cst = arith.constant dense<0.000000e+00> : vector<8x2048xf32>
    %2 = tpu.matmul %0, %1, %cst {dimension_numbers = #tpu.dot_dimension_numbers<[1], [0], [0], [1], [0, 0, 1, 1], [], []>} : vector<8x9xbf16>, vector<9x2048xbf16>, vector<8x2048xf32> -> vector<8x2048xf32>
    %c0_3 = arith.constant 0 : index
    %c0_4 = arith.constant 0 : index
    %3 = vector.load %arg3[%c0_3, %c0_4] : memref<8x1xf32, #tpu.memory_space<vmem>>, vector<8x1xf32>
    %4 = vector.broadcast %3 : vector<8x1xf32> to vector<8x2048xf32>
    %5 = arith.addf %2, %4 : vector<8x2048xf32>
    %cst_5 = arith.constant 0.000000e+00 : f32
    %6 = vector.broadcast %cst_5 : f32 to vector<8x2048xf32>
    %7 = arith.maximumf %5, %6 : vector<8x2048xf32>
    %c0_6 = arith.constant 0 : index
    %c0_7 = arith.constant 0 : index
    %8 = vector.load %arg4[%c0_6, %c0_7] : memref<8x2048xf32, #tpu.memory_space<vmem>>, vector<8x2048xf32>
    tpu.vector_store %arg4[%c0_6, %c0_7], %7 {strides = array<i32>} : memref<8x2048xf32, #tpu.memory_space<vmem>>, vector<8x2048xf32>,
    return
  }
  func.func @transform_0(%arg0: i32) -> (i32, i32) {
    %c0_i32 = arith.constant 0 : i32
    %c0_i32_0 = arith.constant 0 : i32
    %c0_i32_1 = arith.constant 0 : i32
    return %c0_i32, %c0_i32_0 : i32, i32
  }
  func.func @transform_1(%arg0: i32) -> (i32, i32) {
    %c0_i32 = arith.constant 0 : i32
    %c0_i32_0 = arith.constant 0 : i32
    return %c0_i32, %arg0 : i32, i32
  }
  func.func @transform_2(%arg0: i32) -> (i32, i32) {
    %c0_i32 = arith.constant 0 : i32
    %c0_i32_0 = arith.constant 0 : i32
    %c0_i32_1 = arith.constant 0 : i32
    return %c0_i32, %c0_i32_0 : i32, i32
  }
  func.func @transform_3(%arg0: i32) -> (i32, i32) {
    %c0_i32 = arith.constant 0 : i32
    %c0_i32_0 = arith.constant 0 : i32
    return %c0_i32, %arg0 : i32, i32
  }
}

module attributes {stable_mosaic.version = 11 : i64} {
  func.func @_wxa_bias_act_kernel(%arg0: i32, %arg1: memref<16x72xbf16, #tpu.memory_space<vmem>>, %arg2: memref<72x2048xbf16, #tpu.memory_space<vmem>>, %arg3: memref<16x1xf32, #tpu.memory_space<vmem>>, %arg4: memref<16x2048xf32, #tpu.memory_space<vmem>>) attributes {dimension_semantics = [#tpu.dimension_semantics<parallel>], iteration_bounds = array<i64: 2>, scalar_prefetch = 0 : i64, scratch_operands = 0 : i64, tpu.core_type = #tpu.core_type<tc>, window_params = [{pipeline_mode = #tpu.pipeline_mode<synchronous>, transform_indices = @transform_0, window_bounds = array<i64: 16, 72>}, {transform_indices = @transform_1, window_bounds = array<i64: 72, 2048>}, {pipeline_mode = #tpu.pipeline_mode<synchronous>, transform_indices = @transform_2, window_bounds = array<i64: 16, 1>}, {transform_indices = @transform_3, window_bounds = array<i64: 16, 2048>}]} {
    %c0 = arith.constant 0 : index
    %c0_0 = arith.constant 0 : index
    %0 = vector.load %arg1[%c0, %c0_0] : memref<16x72xbf16, #tpu.memory_space<vmem>>, vector<16x72xbf16>
    %c0_1 = arith.constant 0 : index
    %c0_2 = arith.constant 0 : index
    %1 = vector.load %arg2[%c0_1, %c0_2] : memref<72x2048xbf16, #tpu.memory_space<vmem>>, vector<72x2048xbf16>
    %cst = arith.constant dense<0.000000e+00> : vector<16x2048xf32>
    %2 = tpu.matmul %0, %1, %cst {dimension_numbers = #tpu.dot_dimension_numbers<[1], [0], [0], [1], [0, 0, 1, 1], [], []>} : vector<16x72xbf16>, vector<72x2048xbf16>, vector<16x2048xf32> -> vector<16x2048xf32>
    %c0_3 = arith.constant 0 : index
    %c0_4 = arith.constant 0 : index
    %3 = vector.load %arg3[%c0_3, %c0_4] : memref<16x1xf32, #tpu.memory_space<vmem>>, vector<16x1xf32>
    %4 = vector.broadcast %3 : vector<16x1xf32> to vector<16x2048xf32>
    %5 = arith.addf %2, %4 : vector<16x2048xf32>
    %cst_5 = arith.constant 0.000000e+00 : f32
    %6 = vector.broadcast %cst_5 : f32 to vector<16x2048xf32>
    %7 = arith.maximumf %5, %6 : vector<16x2048xf32>
    %c0_6 = arith.constant 0 : index
    %c0_7 = arith.constant 0 : index
    %8 = vector.load %arg4[%c0_6, %c0_7] : memref<16x2048xf32, #tpu.memory_space<vmem>>, vector<16x2048xf32>
    tpu.vector_store %arg4[%c0_6, %c0_7], %7 {strides = array<i32>} : memref<16x2048xf32, #tpu.memory_space<vmem>>, vector<16x2048xf32>,
    return
  }
  func.func @transform_0(%arg0: i32) -> (i32, i32) {
    %c0_i32 = arith.constant 0 : i32
    %c0_i32_0 = arith.constant 0 : i32
    %c0_i32_1 = arith.constant 0 : i32
    return %c0_i32, %c0_i32_0 : i32, i32
  }
  func.func @transform_1(%arg0: i32) -> (i32, i32) {
    %c0_i32 = arith.constant 0 : i32
    %c0_i32_0 = arith.constant 0 : i32
    return %c0_i32, %arg0 : i32, i32
  }
  func.func @transform_2(%arg0: i32) -> (i32, i32) {
    %c0_i32 = arith.constant 0 : i32
    %c0_i32_0 = arith.constant 0 : i32
    %c0_i32_1 = arith.constant 0 : i32
    return %c0_i32, %c0_i32_0 : i32, i32
  }
  func.func @transform_3(%arg0: i32) -> (i32, i32) {
    %c0_i32 = arith.constant 0 : i32
    %c0_i32_0 = arith.constant 0 : i32
    return %c0_i32, %arg0 : i32, i32
  }
}

module attributes {stable_mosaic.version = 11 : i64} {
  func.func @_wxa_bias_act_kernel(%arg0: i32, %arg1: memref<32x144xbf16, #tpu.memory_space<vmem>>, %arg2: memref<144x252xbf16, #tpu.memory_space<vmem>>, %arg3: memref<32x1xf32, #tpu.memory_space<vmem>>, %arg4: memref<32x252xf32, #tpu.memory_space<vmem>>) attributes {dimension_semantics = [#tpu.dimension_semantics<parallel>], iteration_bounds = array<i64: 1>, scalar_prefetch = 0 : i64, scratch_operands = 0 : i64, tpu.core_type = #tpu.core_type<tc>, window_params = [{pipeline_mode = #tpu.pipeline_mode<synchronous>, transform_indices = @transform_0, window_bounds = array<i64: 32, 144>}, {transform_indices = @transform_1, window_bounds = array<i64: 144, 252>}, {pipeline_mode = #tpu.pipeline_mode<synchronous>, transform_indices = @transform_2, window_bounds = array<i64: 32, 1>}, {transform_indices = @transform_3, window_bounds = array<i64: 32, 252>}]} {
    %c0 = arith.constant 0 : index
    %c0_0 = arith.constant 0 : index
    %0 = vector.load %arg1[%c0, %c0_0] : memref<32x144xbf16, #tpu.memory_space<vmem>>, vector<32x144xbf16>
    %c0_1 = arith.constant 0 : index
    %c0_2 = arith.constant 0 : index
    %1 = vector.load %arg2[%c0_1, %c0_2] : memref<144x252xbf16, #tpu.memory_space<vmem>>, vector<144x252xbf16>
    %cst = arith.constant dense<0.000000e+00> : vector<32x252xf32>
    %2 = tpu.matmul %0, %1, %cst {dimension_numbers = #tpu.dot_dimension_numbers<[1], [0], [0], [1], [0, 0, 1, 1], [], []>} : vector<32x144xbf16>, vector<144x252xbf16>, vector<32x252xf32> -> vector<32x252xf32>
    %c0_3 = arith.constant 0 : index
    %c0_4 = arith.constant 0 : index
    %3 = vector.load %arg3[%c0_3, %c0_4] : memref<32x1xf32, #tpu.memory_space<vmem>>, vector<32x1xf32>
    %4 = vector.broadcast %3 : vector<32x1xf32> to vector<32x252xf32>
    %5 = arith.addf %2, %4 : vector<32x252xf32>
    %cst_5 = arith.constant 0.000000e+00 : f32
    %6 = vector.broadcast %cst_5 : f32 to vector<32x252xf32>
    %7 = arith.maximumf %5, %6 : vector<32x252xf32>
    %c0_6 = arith.constant 0 : index
    %c0_7 = arith.constant 0 : index
    %8 = vector.load %arg4[%c0_6, %c0_7] : memref<32x252xf32, #tpu.memory_space<vmem>>, vector<32x252xf32>
    tpu.vector_store %arg4[%c0_6, %c0_7], %7 {strides = array<i32>} : memref<32x252xf32, #tpu.memory_space<vmem>>, vector<32x252xf32>,
    return
  }
  func.func @transform_0(%arg0: i32) -> (i32, i32) {
    %c0_i32 = arith.constant 0 : i32
    %c0_i32_0 = arith.constant 0 : i32
    %c0_i32_1 = arith.constant 0 : i32
    return %c0_i32, %c0_i32_0 : i32, i32
  }
  func.func @transform_1(%arg0: i32) -> (i32, i32) {
    %c0_i32 = arith.constant 0 : i32
    %c0_i32_0 = arith.constant 0 : i32
    return %c0_i32, %arg0 : i32, i32
  }
  func.func @transform_2(%arg0: i32) -> (i32, i32) {
    %c0_i32 = arith.constant 0 : i32
    %c0_i32_0 = arith.constant 0 : i32
    %c0_i32_1 = arith.constant 0 : i32
    return %c0_i32, %c0_i32_0 : i32, i32
  }
  func.func @transform_3(%arg0: i32) -> (i32, i32) {
    %c0_i32 = arith.constant 0 : i32
    %c0_i32_0 = arith.constant 0 : i32
    return %c0_i32, %arg0 : i32, i32
  }
}

module attributes {stable_mosaic.version = 11 : i64} {
  func.func @_wxa_bias_act_kernel(%arg0: i32, %arg1: memref<10x384xbf16, #tpu.memory_space<vmem>>, %arg2: memref<384x2xbf16, #tpu.memory_space<vmem>>, %arg3: memref<10x1xf32, #tpu.memory_space<vmem>>, %arg4: memref<10x2xf32, #tpu.memory_space<vmem>>) attributes {dimension_semantics = [#tpu.dimension_semantics<parallel>], iteration_bounds = array<i64: 1>, scalar_prefetch = 0 : i64, scratch_operands = 0 : i64, tpu.core_type = #tpu.core_type<tc>, window_params = [{pipeline_mode = #tpu.pipeline_mode<synchronous>, transform_indices = @transform_0, window_bounds = array<i64: 10, 384>}, {transform_indices = @transform_1, window_bounds = array<i64: 384, 2>}, {pipeline_mode = #tpu.pipeline_mode<synchronous>, transform_indices = @transform_2, window_bounds = array<i64: 10, 1>}, {transform_indices = @transform_3, window_bounds = array<i64: 10, 2>}]} {
    %c0 = arith.constant 0 : index
    %c0_0 = arith.constant 0 : index
    %0 = vector.load %arg1[%c0, %c0_0] : memref<10x384xbf16, #tpu.memory_space<vmem>>, vector<10x384xbf16>
    %c0_1 = arith.constant 0 : index
    %c0_2 = arith.constant 0 : index
    %1 = vector.load %arg2[%c0_1, %c0_2] : memref<384x2xbf16, #tpu.memory_space<vmem>>, vector<384x2xbf16>
    %cst = arith.constant dense<0.000000e+00> : vector<10x2xf32>
    %2 = tpu.matmul %0, %1, %cst {dimension_numbers = #tpu.dot_dimension_numbers<[1], [0], [0], [1], [0, 0, 1, 1], [], []>} : vector<10x384xbf16>, vector<384x2xbf16>, vector<10x2xf32> -> vector<10x2xf32>
    %c0_3 = arith.constant 0 : index
    %c0_4 = arith.constant 0 : index
    %3 = vector.load %arg3[%c0_3, %c0_4] : memref<10x1xf32, #tpu.memory_space<vmem>>, vector<10x1xf32>
    %4 = vector.broadcast %3 : vector<10x1xf32> to vector<10x2xf32>
    %5 = arith.addf %2, %4 : vector<10x2xf32>
    %c0_5 = arith.constant 0 : index
    %c0_6 = arith.constant 0 : index
    %6 = vector.load %arg4[%c0_5, %c0_6] : memref<10x2xf32, #tpu.memory_space<vmem>>, vector<10x2xf32>
    tpu.vector_store %arg4[%c0_5, %c0_6], %5 {strides = array<i32>} : memref<10x2xf32, #tpu.memory_space<vmem>>, vector<10x2xf32>,
    return
  }
  func.func @transform_0(%arg0: i32) -> (i32, i32) {
    %c0_i32 = arith.constant 0 : i32
    %c0_i32_0 = arith.constant 0 : i32
    %c0_i32_1 = arith.constant 0 : i32
    return %c0_i32, %c0_i32_0 : i32, i32
  }
  func.func @transform_1(%arg0: i32) -> (i32, i32) {
    %c0_i32 = arith.constant 0 : i32
    %c0_i32_0 = arith.constant 0 : i32
    return %c0_i32, %arg0 : i32, i32
  }
  func.func @transform_2(%arg0: i32) -> (i32, i32) {
    %c0_i32 = arith.constant 0 : i32
    %c0_i32_0 = arith.constant 0 : i32
    %c0_i32_1 = arith.constant 0 : i32
    return %c0_i32, %c0_i32_0 : i32, i32
  }
  func.func @transform_3(%arg0: i32) -> (i32, i32) {
    %c0_i32 = arith.constant 0 : i32
    %c0_i32_0 = arith.constant 0 : i32
    return %c0_i32, %arg0 : i32, i32
  }
}

</mosaic_0001>

<llo_original>
// kernel: simple_conv_net_forward.7
$region0: #{simple_conv_net_forward.7}
  #allocation0 [shape = 'u32[]', space=smem, size = 0x4, offset = 0x4, fixed_abs, tag = 'smem constant byte address 0x4 - core index']
  #allocation1 [shape = 'u32[72,128]{1,0:T(1,128)}', space=vmem, size = 0x9000, scoped, tag = 'internal scratch']
  %s0 = inlined_call_operand.vmem [shape: bf16[144,128], index: 0, kind: input, shape index: {}]
  %s1 = inlined_call_operand.vmem [shape: f32[64,72], index: 1, kind: input, shape index: {}]
  %s2 = inlined_call_operand.vmem [shape: bf16[128,256], index: 2, kind: input, shape index: {}]
  %s3 = inlined_call_operand.vmem [shape: f32[64,256], index: 3, kind: output, shape index: {}]
  %s4 = sld [smem:[#allocation0]]
  $region22: #{simple_conv_net_forward.7} parent=0
    _
  %s6 = ssub.s32 1, %s4
  %s7 = scalar_select 0, %s6, %s4
  // Predicated region
  $region2: #{simple_conv_net_forward.7} parent=0 // pred_check
    _
  $region3: #{simple_conv_net_forward.7} parent=0 // pred_check_branch
    %9 = sbr.rel (0) target = $region5
  $region4: #{simple_conv_net_forward.7} parent=0 // pred_region
    _
  $region5: #{simple_conv_net_forward.7} parent=0 // pred_fallthru
    _
  // Predicated region
  $region6: #{simple_conv_net_forward.7} parent=0 // pred_check
    _
  $region7: #{simple_conv_net_forward.7} parent=0 // pred_check_branch
    %11 = sbr.rel (0) target = $region9
  $region8: #{simple_conv_net_forward.7} parent=0 // pred_region
    _
  $region9: #{simple_conv_net_forward.7} parent=0 // pred_fallthru
    _
  // Predicated region
  $region10: #{simple_conv_net_forward.7} parent=0 // pred_check
    _
  $region11: #{simple_conv_net_forward.7} parent=0 // pred_check_branch
    %13 = sbr.rel (0) target = $region13
  $region12: #{simple_conv_net_forward.7} parent=0 // pred_region
    _
  $region13: #{simple_conv_net_forward.7} parent=0 // pred_fallthru
    _
  %v14 = vld [vmem:[%s0] sm:$0xf]
  %v15 = vld [vmem:[%s0 + $0x4] sm:$0xf]
  %v16 = vld [vmem:[%s0 + $0x8] sm:$0xf]
  %v17 = vld [vmem:[%s0 + $0xc] sm:$0xf]
  %v18 = vld [vmem:[%s0 + $0x10] sm:$0xf]
  %v19 = vld [vmem:[%s0 + $0x14] sm:$0xf]
  %v20 = vld [vmem:[%s0 + $0x18] sm:$0xf]
  %v21 = vld [vmem:[%s0 + $0x1c] sm:$0xf]
  %v22 = vld [vmem:[%s0 + $0x20] sm:$0xf]
  %v23 = vld [vmem:[%s0 + $0x24] sm:$0xf]
  %v24 = vld [vmem:[%s0 + $0x28] sm:$0xf]
  %v25 = vld [vmem:[%s0 + $0x2c] sm:$0xf]
  %v26 = vld [vmem:[%s0 + $0x30] sm:$0xf]
  %v27 = vld [vmem:[%s0 + $0x34] sm:$0xf]
  %v28 = vld [vmem:[%s0 + $0x38] sm:$0xf]
  %v29 = vld [vmem:[%s0 + $0x3c] sm:$0xf]
  %v30 = vld [vmem:[%s0 + $0x40] sm:$0xf]
  %v31 = vld [vmem:[%s0 + $0x44] sm:$0xf]
  %v32 = vld [vmem:[%s2] sm:$0xff]
  %v33 = vld [vmem:[%s2 + $0x8] sm:$0xff]
  %v34 = vld [vmem:[%s2 + $0x10] sm:$0xff]
  %v35 = vld [vmem:[%s2 + $0x18] sm:$0xff]
  %v36 = vld [vmem:[%s2 + $0x20] sm:$0xff]
  %v37 = vld [vmem:[%s2 + $0x28] sm:$0xff]
  %v38 = vld [vmem:[%s2 + $0x30] sm:$0xff]
  %v39 = vld [vmem:[%s2 + $0x38] sm:$0xff]
  %v40 = vld [vmem:[%s2 + $0x40] sm:$0xff]
  %v41 = vld [vmem:[%s2 + $0x48] sm:$0xff]
  %v42 = vld [vmem:[%s2 + $0x50] sm:$0xff]
  %v43 = vld [vmem:[%s2 + $0x58] sm:$0xff]
  %v44 = vld [vmem:[%s2 + $0x60] sm:$0xff]
  %v45 = vld [vmem:[%s2 + $0x68] sm:$0xff]
  %v46 = vld [vmem:[%s2 + $0x70] sm:$0xff]
  %v47 = vld [vmem:[%s2 + $0x78] sm:$0xff]
  %v66 = vunpack.c.l.b16 %v14
  %v67 = vunpack.c.l.b16 %v15
  %v68 = vunpack.c.l.b16 %v16
  %v69 = vunpack.c.l.b16 %v17
  %v70 = vunpack.c.l.b16 %v18
  %v71 = vunpack.c.l.b16 %v19
  %v72 = vunpack.c.l.b16 %v20
  %v73 = vunpack.c.l.b16 %v21
  %v74 = vunpack.c.l.b16 %v22
  %v75 = vunpack.c.l.b16 %v23
  %v76 = vunpack.c.l.b16 %v24
  %v77 = vunpack.c.l.b16 %v25
  %v78 = vunpack.c.l.b16 %v26
  %v79 = vunpack.c.l.b16 %v27
  %v80 = vunpack.c.l.b16 %v28
  %v81 = vunpack.c.l.b16 %v29
  %v82 = vunpack.c.l.b16 %v30
  %v83 = vunpack.c.l.b16 %v31
  %v84 = vpack.c.b16 %v67, %v66
  %v85 = vpack.c.b16 %v69, %v68
  %v86 = vpack.c.b16 %v71, %v70
  %v87 = vpack.c.b16 %v73, %v72
  %v88 = vpack.c.b16 %v75, %v74
  %v89 = vpack.c.b16 %v77, %v76
  %v90 = vpack.c.b16 %v79, %v78
  %v91 = vpack.c.b16 %v81, %v80
  %v92 = vpack.c.b16 %v83, %v82
  %v118 = vunpack.c.l.b16 %v32
  %v119 = vunpack.c.h.b16 %v32
  %v120 = vunpack.c.l.b16 %v33
  %v121 = vunpack.c.h.b16 %v33
  %v122 = vunpack.c.l.b16 %v34
  %v123 = vunpack.c.h.b16 %v34
  %v124 = vunpack.c.l.b16 %v35
  %v125 = vunpack.c.h.b16 %v35
  %v126 = vunpack.c.l.b16 %v36
  %v127 = vunpack.c.h.b16 %v36
  %v128 = vunpack.c.l.b16 %v37
  %v129 = vunpack.c.h.b16 %v37
  %v130 = vunpack.c.l.b16 %v38
  %v131 = vunpack.c.h.b16 %v38
  %v132 = vunpack.c.l.b16 %v39
  %v133 = vunpack.c.h.b16 %v39
  %v134 = vunpack.c.l.b16 %v40
  %v135 = vunpack.c.h.b16 %v40
  %v136 = vunpack.c.l.b16 %v41
  %v137 = vunpack.c.h.b16 %v41
  %v138 = vunpack.c.l.b16 %v42
  %v139 = vunpack.c.h.b16 %v42
  %v140 = vunpack.c.l.b16 %v43
  %v141 = vunpack.c.h.b16 %v43
  %v142 = vunpack.c.l.b16 %v44
  %v143 = vunpack.c.h.b16 %v44
  %v144 = vunpack.c.l.b16 %v45
  %v145 = vunpack.c.h.b16 %v45
  %v146 = vunpack.c.l.b16 %v46
  %v147 = vunpack.c.h.b16 %v46
  %v148 = vunpack.c.l.b16 %v47
  %v149 = vunpack.c.h.b16 %v47
  %v150 = vpack.c.b16 %v120, %v118
  %v151 = vpack.c.b16 %v121, %v119
  %v152 = vpack.c.b16 %v124, %v122
  %v153 = vpack.c.b16 %v125, %v123
  %v154 = vpack.c.b16 %v128, %v126
  %v155 = vpack.c.b16 %v129, %v127
  %v156 = vpack.c.b16 %v132, %v130
  %v157 = vpack.c.b16 %v133, %v131
  %v158 = vpack.c.b16 %v136, %v134
  %v159 = vpack.c.b16 %v137, %v135
  %v160 = vpack.c.b16 %v140, %v138
  %v161 = vpack.c.b16 %v141, %v139
  %v162 = vpack.c.b16 %v144, %v142
  %v163 = vpack.c.b16 %v145, %v143
  %v164 = vpack.c.b16 %v148, %v146
  %v165 = vpack.c.b16 %v149, %v147
  %182 = vmatpush.bf16.msra.mxu0 %v164
  %183 = vmatpush.bf16.msra.mxu0 %v162
  %184 = vmatpush.bf16.msra.mxu0 %v160
  %185 = vmatpush.bf16.msra.mxu0 %v158
  %186 = vmatpush.bf16.msra.mxu0 %v156
  %187 = vmatpush.bf16.msra.mxu0 %v154
  %188 = vmatpush.bf16.msra.mxu0 %v152
  %189 = vmatpush.bf16.msra.mxu0 %v150
  %190 = vmatmul.bf16.gmra.mxu0 %v84
  %v191 = vpop.f32.mrf.mxu0
  %v192 = vadd.f32 0.0, %v191
  %v193 = vpop.f32.mrf.mxu0
  %v194 = vadd.f32 0.0, %v193
  %195 = vmatmul.bf16.gmra.mxu0 %v85
  %v196 = vpop.f32.mrf.mxu0
  %v197 = vadd.f32 0.0, %v196
  %v198 = vpop.f32.mrf.mxu0
  %v199 = vadd.f32 0.0, %v198
  %200 = vmatmul.bf16.gmra.mxu0 %v86
  %v201 = vpop.f32.mrf.mxu0
  %v202 = vadd.f32 0.0, %v201
  %v203 = vpop.f32.mrf.mxu0
  %v204 = vadd.f32 0.0, %v203
  %205 = vmatmul.bf16.gmra.mxu0 %v87
  %v206 = vpop.f32.mrf.mxu0
  %v207 = vadd.f32 0.0, %v206
  %v208 = vpop.f32.mrf.mxu0
  %v209 = vadd.f32 0.0, %v208
  %210 = vmatmul.bf16.gmra.mxu0 %v88
  %v211 = vpop.f32.mrf.mxu0
  %v212 = vadd.f32 0.0, %v211
  %v213 = vpop.f32.mrf.mxu0
  %v214 = vadd.f32 0.0, %v213
  %215 = vmatmul.bf16.gmra.mxu0 %v89
  %v216 = vpop.f32.mrf.mxu0
  %v217 = vadd.f32 0.0, %v216
  %v218 = vpop.f32.mrf.mxu0
  %v219 = vadd.f32 0.0, %v218
  %220 = vmatmul.bf16.gmra.mxu0 %v90
  %v221 = vpop.f32.mrf.mxu0
  %v222 = vadd.f32 0.0, %v221
  %v223 = vpop.f32.mrf.mxu0
  %v224 = vadd.f32 0.0, %v223
  %225 = vmatmul.bf16.gmra.mxu0 %v91
  %v226 = vpop.f32.mrf.mxu0
  %v227 = vadd.f32 0.0, %v226
  %v228 = vpop.f32.mrf.mxu0
  %v229 = vadd.f32 0.0, %v228
  %230 = vmatmul.bf16.gmra.mxu0 %v92
  %v231 = vpop.f32.mrf.mxu0
  %v232 = vadd.f32 0.0, %v231
  %v233 = vpop.f32.mrf.mxu0
  %v234 = vadd.f32 0.0, %v233
  %235 = vdwg.mxu0
  %236 = vmatpush.bf16.msra.mxu0 %v165
  %237 = vmatpush.bf16.msra.mxu0 %v163
  %238 = vmatpush.bf16.msra.mxu0 %v161
  %239 = vmatpush.bf16.msra.mxu0 %v159
  %240 = vmatpush.bf16.msra.mxu0 %v157
  %241 = vmatpush.bf16.msra.mxu0 %v155
  %242 = vmatpush.bf16.msra.mxu0 %v153
  %243 = vmatpush.bf16.msra.mxu0 %v151
  %244 = vmatmul.bf16.gmra.mxu0 %v84
  %v245 = vpop.f32.mrf.mxu0
  %v246 = vadd.f32 0.0, %v245
  %v247 = vpop.f32.mrf.mxu0
  %v248 = vadd.f32 0.0, %v247
  %249 = vmatmul.bf16.gmra.mxu0 %v85
  %v250 = vpop.f32.mrf.mxu0
  %v251 = vadd.f32 0.0, %v250
  %v252 = vpop.f32.mrf.mxu0
  %v253 = vadd.f32 0.0, %v252
  %254 = vmatmul.bf16.gmra.mxu0 %v86
  %v255 = vpop.f32.mrf.mxu0
  %v256 = vadd.f32 0.0, %v255
  %v257 = vpop.f32.mrf.mxu0
  %v258 = vadd.f32 0.0, %v257
  %259 = vmatmul.bf16.gmra.mxu0 %v87
  %v260 = vpop.f32.mrf.mxu0
  %v261 = vadd.f32 0.0, %v260
  %v262 = vpop.f32.mrf.mxu0
  %v263 = vadd.f32 0.0, %v262
  %264 = vmatmul.bf16.gmra.mxu0 %v88
  %v265 = vpop.f32.mrf.mxu0
  %v266 = vadd.f32 0.0, %v265
  %v267 = vpop.f32.mrf.mxu0
  %v268 = vadd.f32 0.0, %v267
  %269 = vmatmul.bf16.gmra.mxu0 %v89
  %v270 = vpop.f32.mrf.mxu0
  %v271 = vadd.f32 0.0, %v270
  %v272 = vpop.f32.mrf.mxu0
  %v273 = vadd.f32 0.0, %v272
  %274 = vmatmul.bf16.gmra.mxu0 %v90
  %v275 = vpop.f32.mrf.mxu0
  %v276 = vadd.f32 0.0, %v275
  %v277 = vpop.f32.mrf.mxu0
  %v278 = vadd.f32 0.0, %v277
  %279 = vmatmul.bf16.gmra.mxu0 %v91
  %v280 = vpop.f32.mrf.mxu0
  %v281 = vadd.f32 0.0, %v280
  %v282 = vpop.f32.mrf.mxu0
  %v283 = vadd.f32 0.0, %v282
  %284 = vmatmul.bf16.gmra.mxu0 %v92
  %v285 = vpop.f32.mrf.mxu0
  %v286 = vadd.f32 0.0, %v285
  %v287 = vpop.f32.mrf.mxu0
  %v288 = vadd.f32 0.0, %v287
  %289 = vdwg.mxu0
  %v290 = vmul.f32 %v192, %v192
  %v291 = vmul.f32 %v246, %v246
  %v292 = vmul.f32 %v194, %v194
  %v293 = vmul.f32 %v248, %v248
  %v294 = vmul.f32 %v197, %v197
  %v295 = vmul.f32 %v251, %v251
  %v296 = vmul.f32 %v199, %v199
  %v297 = vmul.f32 %v253, %v253
  %v298 = vmul.f32 %v202, %v202
  %v299 = vmul.f32 %v256, %v256
  %v300 = vmul.f32 %v204, %v204
  %v301 = vmul.f32 %v258, %v258
  %v302 = vmul.f32 %v207, %v207
  %v303 = vmul.f32 %v261, %v261
  %v304 = vmul.f32 %v209, %v209
  %v305 = vmul.f32 %v263, %v263
  %v306 = vmul.f32 %v212, %v212
  %v307 = vmul.f32 %v266, %v266
  %v308 = vmul.f32 %v214, %v214
  %v309 = vmul.f32 %v268, %v268
  %v310 = vmul.f32 %v217, %v217
  %v311 = vmul.f32 %v271, %v271
  %v312 = vmul.f32 %v219, %v219
  %v313 = vmul.f32 %v273, %v273
  %v314 = vmul.f32 %v222, %v222
  %v315 = vmul.f32 %v276, %v276
  %v316 = vmul.f32 %v224, %v224
  %v317 = vmul.f32 %v278, %v278
  %v318 = vmul.f32 %v227, %v227
  %v319 = vmul.f32 %v281, %v281
  %v320 = vmul.f32 %v229, %v229
  %v321 = vmul.f32 %v283, %v283
  %v322 = vmul.f32 %v232, %v232
  %v323 = vmul.f32 %v286, %v286
  %v324 = vmul.f32 %v234, %v234
  %v325 = vmul.f32 %v288, %v288
  %v326 = vadd.f32 %v290, %v308
  %v327 = vadd.f32 %v291, %v309
  %v328 = vadd.f32 %v292, %v310
  %v329 = vadd.f32 %v293, %v311
  %v330 = vadd.f32 %v294, %v312
  %v331 = vadd.f32 %v295, %v313
  %v332 = vadd.f32 %v296, %v314
  %v333 = vadd.f32 %v297, %v315
  %v334 = vadd.f32 %v298, %v316
  %v335 = vadd.f32 %v299, %v317
  %v336 = vadd.f32 %v300, %v318
  %v337 = vadd.f32 %v301, %v319
  %v338 = vadd.f32 %v302, %v320
  %v339 = vadd.f32 %v303, %v321
  %v340 = vadd.f32 %v304, %v322
  %v341 = vadd.f32 %v305, %v323
  %v342 = vadd.f32 %v306, %v324
  %v343 = vadd.f32 %v307, %v325
  %v344 = vld [vmem:[%s1] sm:$0xff]
  %v345 = vld [vmem:[%s1 + $0x8] sm:$0xff]
  %v346 = vld [vmem:[%s1 + $0x10] sm:$0xff]
  %v347 = vld [vmem:[%s1 + $0x18] sm:$0xff]
  %v348 = vld [vmem:[%s1 + $0x20] sm:$0xff]
  %v349 = vld [vmem:[%s1 + $0x28] sm:$0xff]
  %v350 = vld [vmem:[%s1 + $0x30] sm:$0xff]
  %v351 = vld [vmem:[%s1 + $0x38] sm:$0xff]
  %vm352 = vcmask 588800
  %v354 = vsel %vm352, %v344, 0
  %v357 = vsel %vm352, %v345, 0
  %v360 = vsel %vm352, %v346, 0
  %v363 = vsel %vm352, %v347, 0
  %v366 = vsel %vm352, %v348, 0
  %v369 = vsel %vm352, %v349, 0
  %v372 = vsel %vm352, %v350, 0
  %v375 = vsel %vm352, %v351, 0
  %377 = vmatpush.msra.mxu0 0.0
  %378 = vmatpush.msra.mxu0 0.0
  %379 = vmatpush.msra.mxu0 0.0
  %380 = vmatpush.msra.mxu0 0.0
  %381 = vmatpush.msra.mxu0 0.0
  %382 = vmatpush.msra.mxu0 0.0
  %383 = vmatpush.msra.mxu0 0.0
  %384 = vmatpush.msra.mxu0 %v342
  %385 = vmatpush.msra.mxu0 %v340
  %386 = vmatpush.msra.mxu0 %v338
  %387 = vmatpush.msra.mxu0 %v336
  %388 = vmatpush.msra.mxu0 %v334
  %389 = vmatpush.msra.mxu0 %v332
  %390 = vmatpush.msra.mxu0 %v330
  %391 = vmatpush.msra.mxu0 %v328
  %392 = vmatpush.msra.mxu0 %v326
  %393 = vmatmul.f32.gmra.mxu0 %v354
  %v394 = vpop.f32.mrf.mxu0
  %v395 = vadd.f32 0.0, %v394
  %396 = vmatmul.f32.gmra.mxu0 %v357
  %v397 = vpop.f32.mrf.mxu0
  %v398 = vadd.f32 0.0, %v397
  %399 = vmatmul.f32.gmra.mxu0 %v360
  %v400 = vpop.f32.mrf.mxu0
  %v401 = vadd.f32 0.0, %v400
  %402 = vmatmul.f32.gmra.mxu0 %v363
  %v403 = vpop.f32.mrf.mxu0
  %v404 = vadd.f32 0.0, %v403
  %405 = vmatmul.f32.gmra.mxu0 %v366
  %v406 = vpop.f32.mrf.mxu0
  %v407 = vadd.f32 0.0, %v406
  %408 = vmatmul.f32.gmra.mxu0 %v369
  %v409 = vpop.f32.mrf.mxu0
  %v410 = vadd.f32 0.0, %v409
  %411 = vmatmul.f32.gmra.mxu0 %v372
  %v412 = vpop.f32.mrf.mxu0
  %v413 = vadd.f32 0.0, %v412
  %414 = vmatmul.f32.gmra.mxu0 %v375
  %v415 = vpop.f32.mrf.mxu0
  %v416 = vadd.f32 0.0, %v415
  %417 = vdwg.mxu0
  %418 = vmatpush.msra.mxu0 0.0
  %419 = vmatpush.msra.mxu0 0.0
  %420 = vmatpush.msra.mxu0 0.0
  %421 = vmatpush.msra.mxu0 0.0
  %422 = vmatpush.msra.mxu0 0.0
  %423 = vmatpush.msra.mxu0 0.0
  %424 = vmatpush.msra.mxu0 0.0
  %425 = vmatpush.msra.mxu0 %v343
  %426 = vmatpush.msra.mxu0 %v341
  %427 = vmatpush.msra.mxu0 %v339
  %428 = vmatpush.msra.mxu0 %v337
  %429 = vmatpush.msra.mxu0 %v335
  %430 = vmatpush.msra.mxu0 %v333
  %431 = vmatpush.msra.mxu0 %v331
  %432 = vmatpush.msra.mxu0 %v329
  %433 = vmatpush.msra.mxu0 %v327
  %434 = vmatmul.f32.gmra.mxu0 %v354
  %v435 = vpop.f32.mrf.mxu0
  %v436 = vadd.f32 0.0, %v435
  %437 = vmatmul.f32.gmra.mxu0 %v357
  %v438 = vpop.f32.mrf.mxu0
  %v439 = vadd.f32 0.0, %v438
  %440 = vmatmul.f32.gmra.mxu0 %v360
  %v441 = vpop.f32.mrf.mxu0
  %v442 = vadd.f32 0.0, %v441
  %443 = vmatmul.f32.gmra.mxu0 %v363
  %v444 = vpop.f32.mrf.mxu0
  %v445 = vadd.f32 0.0, %v444
  %446 = vmatmul.f32.gmra.mxu0 %v366
  %v447 = vpop.f32.mrf.mxu0
  %v448 = vadd.f32 0.0, %v447
  %449 = vmatmul.f32.gmra.mxu0 %v369
  %v450 = vpop.f32.mrf.mxu0
  %v451 = vadd.f32 0.0, %v450
  %452 = vmatmul.f32.gmra.mxu0 %v372
  %v453 = vpop.f32.mrf.mxu0
  %v454 = vadd.f32 0.0, %v453
  %455 = vmatmul.f32.gmra.mxu0 %v375
  %v456 = vpop.f32.mrf.mxu0
  %v457 = vadd.f32 0.0, %v456
  %458 = vdwg.mxu0
  %v459 = vmax.f32 %v395, 1e-10
  %v460 = vmax.f32 %v436, 1e-10
  %v461 = vmax.f32 %v398, 1e-10
  %v462 = vmax.f32 %v439, 1e-10
  %v463 = vmax.f32 %v401, 1e-10
  %v464 = vmax.f32 %v442, 1e-10
  %v465 = vmax.f32 %v404, 1e-10
  %v466 = vmax.f32 %v445, 1e-10
  %v467 = vmax.f32 %v407, 1e-10
  %v468 = vmax.f32 %v448, 1e-10
  %v469 = vmax.f32 %v410, 1e-10
  %v470 = vmax.f32 %v451, 1e-10
  %v471 = vmax.f32 %v413, 1e-10
  %v472 = vmax.f32 %v454, 1e-10
  %v473 = vmax.f32 %v416, 1e-10
  %v474 = vmax.f32 %v457, 1e-10
  %v475 = vlog2.pop %v459
  %v476 = vmul.f32 %v475, 0.6931472
  %v477 = vlog2.pop %v460
  %v478 = vmul.f32 %v477, 0.6931472
  %v479 = vlog2.pop %v461
  %v480 = vmul.f32 %v479, 0.6931472
  %v481 = vlog2.pop %v462
  %v482 = vmul.f32 %v481, 0.6931472
  %v483 = vlog2.pop %v463
  %v484 = vmul.f32 %v483, 0.6931472
  %v485 = vlog2.pop %v464
  %v486 = vmul.f32 %v485, 0.6931472
  %v487 = vlog2.pop %v465
  %v488 = vmul.f32 %v487, 0.6931472
  %v489 = vlog2.pop %v466
  %v490 = vmul.f32 %v489, 0.6931472
  %v491 = vlog2.pop %v467
  %v492 = vmul.f32 %v491, 0.6931472
  %v493 = vlog2.pop %v468
  %v494 = vmul.f32 %v493, 0.6931472
  %v495 = vlog2.pop %v469
  %v496 = vmul.f32 %v495, 0.6931472
  %v497 = vlog2.pop %v470
  %v498 = vmul.f32 %v497, 0.6931472
  %v499 = vlog2.pop %v471
  %v500 = vmul.f32 %v499, 0.6931472
  %v501 = vlog2.pop %v472
  %v502 = vmul.f32 %v501, 0.6931472
  %v503 = vlog2.pop %v473
  %v504 = vmul.f32 %v503, 0.6931472
  %v505 = vlog2.pop %v474
  %v506 = vmul.f32 %v505, 0.6931472
  %v507 = vmul.f32 %v476, 4.3429446
  %v508 = vmul.f32 %v478, 4.3429446
  %v509 = vmul.f32 %v480, 4.3429446
  %v510 = vmul.f32 %v482, 4.3429446
  %v511 = vmul.f32 %v484, 4.3429446
  %v512 = vmul.f32 %v486, 4.3429446
  %v513 = vmul.f32 %v488, 4.3429446
  %v514 = vmul.f32 %v490, 4.3429446
  %v515 = vmul.f32 %v492, 4.3429446
  %v516 = vmul.f32 %v494, 4.3429446
  %v517 = vmul.f32 %v496, 4.3429446
  %v518 = vmul.f32 %v498, 4.3429446
  %v519 = vmul.f32 %v500, 4.3429446
  %v520 = vmul.f32 %v502, 4.3429446
  %v521 = vmul.f32 %v504, 4.3429446
  %v522 = vmul.f32 %v506, 4.3429446
  %523 = vst [vmem:[%s3] sm:$0xff] %v507
  %524 = vst [vmem:[%s3 + $0x8] sm:$0xff] %v508
  %525 = vst [vmem:[%s3 + $0x10] sm:$0xff] %v509
  %526 = vst [vmem:[%s3 + $0x18] sm:$0xff] %v510
  %527 = vst [vmem:[%s3 + $0x20] sm:$0xff] %v511
  %528 = vst [vmem:[%s3 + $0x28] sm:$0xff] %v512
  %529 = vst [vmem:[%s3 + $0x30] sm:$0xff] %v513
  %530 = vst [vmem:[%s3 + $0x38] sm:$0xff] %v514
  %531 = vst [vmem:[%s3 + $0x40] sm:$0xff] %v515
  %532 = vst [vmem:[%s3 + $0x48] sm:$0xff] %v516
  %533 = vst [vmem:[%s3 + $0x50] sm:$0xff] %v517
  %534 = vst [vmem:[%s3 + $0x58] sm:$0xff] %v518
  %535 = vst [vmem:[%s3 + $0x60] sm:$0xff] %v519
  %536 = vst [vmem:[%s3 + $0x68] sm:$0xff] %v520
  %537 = vst [vmem:[%s3 + $0x70] sm:$0xff] %v521
  %538 = vst [vmem:[%s3 + $0x78] sm:$0xff] %v522
  // Predicated region
  $region14: #{simple_conv_net_forward.7} parent=0 // pred_check
    _
  $region15: #{simple_conv_net_forward.7} parent=0 // pred_check_branch
    %540 = sbr.rel (0) target = $region17
  $region16: #{simple_conv_net_forward.7} parent=0 // pred_region
    _
  $region17: #{simple_conv_net_forward.7} parent=0 // pred_fallthru
    _
  // Predicated region
  $region18: #{simple_conv_net_forward.7} parent=0 // pred_check
    _
  $region19: #{simple_conv_net_forward.7} parent=0 // pred_check_branch
    %542 = sbr.rel (0) target = $region21
  $region20: #{simple_conv_net_forward.7} parent=0 // pred_region
    _
  $region21: #{simple_conv_net_forward.7} parent=0 // pred_fallthru
    _

// kernel: simple_conv_net_forward.8
$region0: #{simple_conv_net_forward.8}
  #allocation0 [shape = 'u32[]', space=smem, size = 0x4, offset = 0x4, fixed_abs, tag = 'smem constant byte address 0x4 - core index']
  #allocation1 [shape = 'u32[72,128]{1,0:T(1,128)}', space=vmem, size = 0x9000, scoped, tag = 'internal scratch']
  %s0 = inlined_call_operand.vmem [shape: bf16[8,9], index: 0, kind: input, shape index: {}]
  %s1 = inlined_call_operand.vmem [shape: bf16[9,16384], index: 1, kind: input, shape index: {}]
  %s2 = inlined_call_operand.vmem [shape: f32[8,1], index: 2, kind: input, shape index: {}]
  %s3 = inlined_call_operand.vmem [shape: f32[8,16384], index: 3, kind: output, shape index: {}]
  %s4 = sld [smem:[#allocation0]]
  $region68: #{simple_conv_net_forward.8} parent=0
    _
  %s6 = ssub.s32 1, %s4
  %s7 = scalar_select 0, %s6, %s4
  $region1: #{simple_conv_net_forward.8} parent=0
    #allocation2 [shape = 'u8[131072]{0}', space=vmem, size = 0x20000, scoped, tag = 'input window, operand 1']
    loop: start=0, step=1, limit=10
    $region2: #{simple_conv_net_forward.8} parent=1 // loop_pre_header
      _
    $region3: #{simple_conv_net_forward.8} parent=1 // loop_header
      %s9 = sphi 0, %s13
      %p10 = scmp.ge.s32.totalorder %s9, 10
      %s17 = sphi 0, %s17
      %s19 = sphi 0, %s17
      %s20 = sphi 0, %s19
      %s34 = sphi 0, %s20
      %s40 = sphi 0, %s42
      %s43 = sphi 0, %s40
      %s44 = sphi 0, %s43
      %s60 = sphi 0, %s44
      %s64 = sphi 0, %s64
      %s66 = sphi 0, %s64
      %s67 = sphi 0, %s66
      %s81 = sphi 0, %s67
      %s87 = sphi 0, %s89
      %s90 = sphi 0, %s87
      %s91 = sphi 0, %s90
      %s107 = sphi 0, %s91
    $region4: #{simple_conv_net_forward.8} parent=1 // loop_header_branch
      %12 = sbr.rel (%p10) target = $region8
    $region5: #{simple_conv_net_forward.8} parent=1 // loop_body
      %s14 = ssub.s32 %s9, 1
      %s15 = ssub.s32 %s9, 2
      %s16 = sadd.s32 %s9, 1
      %s18 = sadd.s32 %s17, 1
      %p21 = scmp.eq.s32.totalorder %s9, 7
      %p22 = scmp.ne.s32.totalorder %s17, %s19
      %p23 = scmp.eq.s32.totalorder %s9, 0
      %p24 = por %p22, %p23
      %p25 = scmp.ne.s32.totalorder %s17, %s19
      %p26 = scmp.eq.s32.totalorder %s14, 7
      %p27 = por %p25, %p26
      %p28 = scmp.ne.s32.totalorder %s19, %s20
      %p29 = scmp.eq.s32.totalorder %s14, 0
      %p30 = por %p28, %p29
      %p31 = scmp.ne.s32.totalorder %s19, %s20
      %p32 = scmp.eq.s32.totalorder %s15, 7
      %p33 = por %p31, %p32
      %p35 = scmp.ne.s32.totalorder %s20, %s34
      %p36 = scmp.eq.s32.totalorder %s15, 0
      %p37 = por %p35, %p36
      %s38 = ssub.s32 %s9, %s16
      %p39 = scmp.eq.s32.totalorder %s38, 0
      %s41 = sadd.s32 %s40, 1
      %s42 = scalar_select %p39, %s40, %s41
      %p45 = pneg %p39
      %p46 = scmp.eq.s32.totalorder %s9, 7
      %p47 = por %p45, %p46
      %p48 = scmp.ne.s32.totalorder %s40, %s43
      %p49 = scmp.eq.s32.totalorder %s9, 0
      %p50 = por %p48, %p49
      %p51 = scmp.ne.s32.totalorder %s40, %s43
      %p52 = scmp.eq.s32.totalorder %s14, 7
      %p53 = por %p51, %p52
      %p54 = scmp.ne.s32.totalorder %s43, %s44
      %p55 = scmp.eq.s32.totalorder %s14, 0
      %p56 = por %p54, %p55
      %p57 = scmp.ne.s32.totalorder %s43, %s44
      %p58 = scmp.eq.s32.totalorder %s15, 7
      %p59 = por %p57, %p58
      %p61 = scmp.ne.s32.totalorder %s44, %s60
      %p62 = scmp.eq.s32.totalorder %s15, 0
      %p63 = por %p61, %p62
      %s65 = sadd.s32 %s64, 1
      %p68 = scmp.eq.s32.totalorder %s9, 7
      %p69 = scmp.ne.s32.totalorder %s64, %s66
      %p70 = scmp.eq.s32.totalorder %s9, 0
      %p71 = por %p69, %p70
      %p72 = scmp.ne.s32.totalorder %s64, %s66
      %p73 = scmp.eq.s32.totalorder %s14, 7
      %p74 = por %p72, %p73
      %p75 = scmp.ne.s32.totalorder %s66, %s67
      %p76 = scmp.eq.s32.totalorder %s14, 0
      %p77 = por %p75, %p76
      %p78 = scmp.ne.s32.totalorder %s66, %s67
      %p79 = scmp.eq.s32.totalorder %s15, 7
      %p80 = por %p78, %p79
      %p82 = scmp.ne.s32.totalorder %s67, %s81
      %p83 = scmp.eq.s32.totalorder %s15, 0
      %p84 = por %p82, %p83
      %s85 = ssub.s32 %s9, %s16
      %p86 = scmp.eq.s32.totalorder %s85, 0
      %s88 = sadd.s32 %s87, 1
      %s89 = scalar_select %p86, %s87, %s88
      %p92 = pneg %p86
      %p93 = scmp.eq.s32.totalorder %s9, 7
      %p94 = por %p92, %p93
      %p95 = scmp.ne.s32.totalorder %s87, %s90
      %p96 = scmp.eq.s32.totalorder %s9, 0
      %p97 = por %p95, %p96
      %p98 = scmp.ne.s32.totalorder %s87, %s90
      %p99 = scmp.eq.s32.totalorder %s14, 7
      %p100 = por %p98, %p99
      %p101 = scmp.ne.s32.totalorder %s90, %s91
      %p102 = scmp.eq.s32.totalorder %s14, 0
      %p103 = por %p101, %p102
      %p104 = scmp.ne.s32.totalorder %s90, %s91
      %p105 = scmp.eq.s32.totalorder %s15, 7
      %p106 = por %p104, %p105
      %p108 = scmp.ne.s32.totalorder %s91, %s107
      %p109 = scmp.eq.s32.totalorder %s15, 0
      %p110 = por %p108, %p109
      %p111 = scmp.le.s32.totalorder 1, %s9
      %p112 = scmp.lt.s32.totalorder %s9, 9
      %p113 = pnand %p111, %p112
      %p114 = pneg %p113
      // Predicated region
      $region9: #{simple_conv_net_forward.8} parent=5 // pred_check
        _
      $region10: #{simple_conv_net_forward.8} parent=5 // pred_check_branch
        %116 = sbr.rel (%p113) target = $region12
      $region11: #{simple_conv_net_forward.8} parent=5 // pred_region
        %s117 = ssub.s32 %s9, 1
        // Predicated region
        $region13: #{simple_conv_net_forward.8} parent=11 // pred_check
          %p118 = pneg %p30
        $region14: #{simple_conv_net_forward.8} parent=11 // pred_check_branch
          %120 = sbr.rel (%p118) target = $region16
        $region15: #{simple_conv_net_forward.8} parent=11 // pred_region
          _
        $region16: #{simple_conv_net_forward.8} parent=11 // pred_fallthru
          _
        // Predicated region
        $region17: #{simple_conv_net_forward.8} parent=11 // pred_check
          %p121 = pneg %p77
        $region18: #{simple_conv_net_forward.8} parent=11 // pred_check_branch
          %123 = sbr.rel (%p121) target = $region20
        $region19: #{simple_conv_net_forward.8} parent=11 // pred_region
          _
        $region20: #{simple_conv_net_forward.8} parent=11 // pred_fallthru
          _
      $region12: #{simple_conv_net_forward.8} parent=5 // pred_fallthru
        _
      %p124 = scmp.lt.s32.totalorder %s9, 8
      // Predicated region
      $region21: #{simple_conv_net_forward.8} parent=5 // pred_check
        %p125 = pneg %p124
      $region22: #{simple_conv_net_forward.8} parent=5 // pred_check_branch
        %127 = sbr.rel (%p125) target = $region24
      $region23: #{simple_conv_net_forward.8} parent=5 // pred_region
        // Predicated region
        $region25: #{simple_conv_net_forward.8} parent=23 // pred_check
          %p128 = pneg %p50
        $region26: #{simple_conv_net_forward.8} parent=23 // pred_check_branch
          %130 = sbr.rel (%p128) target = $region28
        $region27: #{simple_conv_net_forward.8} parent=23 // pred_region
          %s131 = sand.u32 %s40, 1
          %s132 = sand.u32 %s40, 1
          %s133 = smul.addr %s132, 128
          %s134 = scalar_lea.vmem [#allocation2], %s133
          %s135 = smul.u32 16, %s9
          %s136 = smul.addr %s135, 4
          %s137 = scalar_lea.vmem %s1, %s136
          // Predicated region
          $region29: #{simple_conv_net_forward.8} parent=27 // pred_check
            _
          $region30: #{simple_conv_net_forward.8} parent=27 // pred_check_branch
            %139 = sbr.rel (0) target = $region32
          $region31: #{simple_conv_net_forward.8} parent=27 // pred_region
            // Predicated region
            $region33: #{simple_conv_net_forward.8} parent=31 // pred_check
              _
            $region34: #{simple_conv_net_forward.8} parent=31 // pred_check_branch
              %141 = sbr.rel (0) target = $region36
            $region35: #{simple_conv_net_forward.8} parent=31 // pred_region
              loop: start=0, step=1, limit=1
              $region37: #{simple_conv_net_forward.8} parent=35 // loop_pre_header
                _
              $region38: #{simple_conv_net_forward.8} parent=35 // loop_header
                %s143 = sphi 0, %s147
                %p144 = scmp.ge.s32.totalorder %s143, 1
                %s148 = sphi %s137, %s137
                %s149 = sphi %s134, %s134
              $region39: #{simple_conv_net_forward.8} parent=35 // loop_header_branch
                %146 = sbr.rel (%p144) target = $region43
              $region40: #{simple_conv_net_forward.8} parent=35 // loop_body
                %v150 = vld [vmem:[%s148] sm:$0xff]
                %151 = vst [vmem:[%s149] sm:$0xff] %v150
                %v152 = vld [vmem:[%s148 + $0x8] sm:$0xff]
                %153 = vst [vmem:[%s149 + $0x8] sm:$0xff] %v152
                %v154 = vld [vmem:[%s148 + $0x10] sm:$0xff]
                %155 = vst [vmem:[%s149 + $0x10] sm:$0xff] %v154
                %v156 = vld [vmem:[%s148 + $0x18] sm:$0xff]
                %157 = vst [vmem:[%s149 + $0x18] sm:$0xff] %v156
                %v158 = vld [vmem:[%s148 + $0x20] sm:$0xff]
                %159 = vst [vmem:[%s149 + $0x20] sm:$0xff] %v158
                %v160 = vld [vmem:[%s148 + $0x28] sm:$0xff]
                %161 = vst [vmem:[%s149 + $0x28] sm:$0xff] %v160
                %v162 = vld [vmem:[%s148 + $0x30] sm:$0xff]
                %163 = vst [vmem:[%s149 + $0x30] sm:$0xff] %v162
                %v164 = vld [vmem:[%s148 + $0x38] sm:$0xff]
                %165 = vst [vmem:[%s149 + $0x38] sm:$0xff] %v164
                %v166 = vld [vmem:[%s148 + $0x200] sm:$0xff]
                %167 = vst [vmem:[%s149 + $0x40] sm:$0xff] %v166
                %v168 = vld [vmem:[%s148 + $0x208] sm:$0xff]
                %169 = vst [vmem:[%s149 + $0x48] sm:$0xff] %v168
                %v170 = vld [vmem:[%s148 + $0x210] sm:$0xff]
                %171 = vst [vmem:[%s149 + $0x50] sm:$0xff] %v170
                %v172 = vld [vmem:[%s148 + $0x218] sm:$0xff]
                %173 = vst [vmem:[%s149 + $0x58] sm:$0xff] %v172
                %v174 = vld [vmem:[%s148 + $0x220] sm:$0xff]
                %175 = vst [vmem:[%s149 + $0x60] sm:$0xff] %v174
                %v176 = vld [vmem:[%s148 + $0x228] sm:$0xff]
                %177 = vst [vmem:[%s149 + $0x68] sm:$0xff] %v176
                %v178 = vld [vmem:[%s148 + $0x230] sm:$0xff]
                %179 = vst [vmem:[%s149 + $0x70] sm:$0xff] %v178
                %v180 = vld [vmem:[%s148 + $0x238] sm:$0xff]
                %181 = vst [vmem:[%s149 + $0x78] sm:$0xff] %v180
              $region41: #{simple_conv_net_forward.8} parent=35 // loop_footer
                %s147 = sadd.s32 1, %s143
              $region42: #{simple_conv_net_forward.8} parent=35 // loop_footer_branch
                %142 = sbr.rel target = $region38
              $region43: #{simple_conv_net_forward.8} parent=35 // loop_exit
                _
            $region36: #{simple_conv_net_forward.8} parent=31 // pred_fallthru
              _
            // Predicated region
            $region44: #{simple_conv_net_forward.8} parent=31 // pred_check
              _
            $region45: #{simple_conv_net_forward.8} parent=31 // pred_check_branch
              %183 = sbr.rel target = $region47
            $region46: #{simple_conv_net_forward.8} parent=31 // pred_region
              _
            $region47: #{simple_conv_net_forward.8} parent=31 // pred_fallthru
              _
          $region32: #{simple_conv_net_forward.8} parent=27 // pred_fallthru
            _
          %184 = vnop
        $region28: #{simple_conv_net_forward.8} parent=23 // pred_fallthru
          _
      $region24: #{simple_conv_net_forward.8} parent=5 // pred_fallthru
        _
      %p185 = scmp.le.s32.totalorder 1, %s9
      %p186 = scmp.lt.s32.totalorder %s9, 9
      %p187 = pnand %p185, %p186
      %p188 = pneg %p187
      // Predicated region
      $region48: #{simple_conv_net_forward.8} parent=5 // pred_check
        _
      $region49: #{simple_conv_net_forward.8} parent=5 // pred_check_branch
        %190 = sbr.rel (%p187) target = $region51
      $region50: #{simple_conv_net_forward.8} parent=5 // pred_region
        %s191 = ssub.s32 %s9, 1
        %s192 = sand.u32 %s43, 1
        %s193 = sand.u32 %s43, 1
        %s194 = smul.addr %s193, 128
        %s195 = scalar_lea.vmem [#allocation2], %s194
        // Predicated region
        $region52: #{simple_conv_net_forward.8} parent=50 // pred_check
          %p196 = pneg %p56
        $region53: #{simple_conv_net_forward.8} parent=50 // pred_check_branch
          %198 = sbr.rel (%p196) target = $region55
        $region54: #{simple_conv_net_forward.8} parent=50 // pred_region
          _
        $region55: #{simple_conv_net_forward.8} parent=50 // pred_fallthru
          _
        %p199 = pneg %p30
        %p200 = pneg %p27
        %s201 = sand.u32 %s43, 1
        %s202 = sand.u32 %s43, 1
        %s203 = smul.addr %s202, 128
        %s204 = scalar_lea.vmem [#allocation2], %s203
        %p205 = pneg %p56
        %p206 = pneg %p53
        %p207 = pneg %p77
        %p208 = pneg %p74
        %p209 = pneg %p103
        %p210 = pneg %p100
        %s211 = smul.u32 16, %s14
        %p212 = scmp.lt.s32.totalorder %s211, 127
        %s213 = scalar_select %p212, %s211, 127
        %s214 = smul.addr %s213, 8
        %s215 = scalar_lea.vmem %s3, %s214
        %s216 = smul.u32 16, %s14
        %s217 = smul.u32 16, %s14
        %p218 = scmp.lt.s32.totalorder %s217, 127
        %s219 = scalar_select %p218, %s217, 127
        %s220 = smul.addr %s219, 8
        %s221 = scalar_lea.vmem %s3, %s220
        %s222 = smul.u32 16, %s14
        %v224 = vld [vmem:[%s0] sm:$0xf]
        %v225 = vld [vmem:[%s195] sm:$0xff]
        %v226 = vld [vmem:[%s195 + $0x8] sm:$0xff]
        %v227 = vld [vmem:[%s195 + $0x10] sm:$0xff]
        %v228 = vld [vmem:[%s195 + $0x18] sm:$0xff]
        %v229 = vld [vmem:[%s195 + $0x20] sm:$0xff]
        %v230 = vld [vmem:[%s195 + $0x28] sm:$0xff]
        %v231 = vld [vmem:[%s195 + $0x30] sm:$0xff]
        %v232 = vld [vmem:[%s195 + $0x38] sm:$0xff]
        %v233 = vld [vmem:[%s195 + $0x40] sm:$0x11]
        %v234 = vld [vmem:[%s195 + $0x48] sm:$0x11]
        %v235 = vld [vmem:[%s195 + $0x50] sm:$0x11]
        %v236 = vld [vmem:[%s195 + $0x58] sm:$0x11]
        %v237 = vld [vmem:[%s195 + $0x60] sm:$0x11]
        %v238 = vld [vmem:[%s195 + $0x68] sm:$0x11]
        %v239 = vld [vmem:[%s195 + $0x70] sm:$0x11]
        %v240 = vld [vmem:[%s195 + $0x78] sm:$0x11]
        %v241 = vld [vmem:[%s2] sm:$0xff]
        %243 = vset.pattern.permute.xlu0 0
        %244 = vperm.xlu0 %243, %v241
        %v245 = vpop.permute.xlu0 %244
        %v263 = vunpack.c.l.b16 %v225
        %v264 = vunpack.c.h.b16 %v225
        %v265 = vunpack.c.l.b16 %v226
        %v266 = vunpack.c.h.b16 %v226
        %v267 = vunpack.c.l.b16 %v227
        %v268 = vunpack.c.h.b16 %v227
        %v269 = vunpack.c.l.b16 %v228
        %v270 = vunpack.c.h.b16 %v228
        %v271 = vunpack.c.l.b16 %v229
        %v272 = vunpack.c.h.b16 %v229
        %v273 = vunpack.c.l.b16 %v230
        %v274 = vunpack.c.h.b16 %v230
        %v275 = vunpack.c.l.b16 %v231
        %v276 = vunpack.c.h.b16 %v231
        %v277 = vunpack.c.l.b16 %v232
        %v278 = vunpack.c.h.b16 %v232
        %v279 = vunpack.c.l.b16 %v233
        %v280 = vunpack.c.h.b16 %v233
        %v281 = vunpack.c.l.b16 %v234
        %v282 = vunpack.c.h.b16 %v234
        %v283 = vunpack.c.l.b16 %v235
        %v284 = vunpack.c.h.b16 %v235
        %v285 = vunpack.c.l.b16 %v236
        %v286 = vunpack.c.h.b16 %v236
        %v287 = vunpack.c.l.b16 %v237
        %v288 = vunpack.c.h.b16 %v237
        %v289 = vunpack.c.l.b16 %v238
        %v290 = vunpack.c.h.b16 %v238
        %v291 = vunpack.c.l.b16 %v239
        %v292 = vunpack.c.h.b16 %v239
        %v293 = vunpack.c.l.b16 %v240
        %v294 = vunpack.c.h.b16 %v240
        %v295 = vpack.c.b16 %v279, %v263
        %v296 = vpack.c.b16 %v280, %v264
        %v297 = vpack.c.b16 %v281, %v265
        %v298 = vpack.c.b16 %v282, %v266
        %v299 = vpack.c.b16 %v283, %v267
        %v300 = vpack.c.b16 %v284, %v268
        %v301 = vpack.c.b16 %v285, %v269
        %v302 = vpack.c.b16 %v286, %v270
        %v303 = vpack.c.b16 %v287, %v271
        %v304 = vpack.c.b16 %v288, %v272
        %v305 = vpack.c.b16 %v289, %v273
        %v306 = vpack.c.b16 %v290, %v274
        %v307 = vpack.c.b16 %v291, %v275
        %v308 = vpack.c.b16 %v292, %v276
        %v309 = vpack.c.b16 %v293, %v277
        %v310 = vpack.c.b16 %v294, %v278
        %vm311 = vcmask 72704
        %v313 = vsel %vm311, %v224, 0
        %vm315 = vcmask 1043456
        %vm316 = vcmask 1044480
        %v317 = vsel %vm315, 4294967295, 65535
        %v318 = vsel %vm316, %v317, 0
        %v320 = vand.u32 %v295, %v318
        %v323 = vand.u32 %v296, %v318
        %v326 = vand.u32 %v297, %v318
        %v329 = vand.u32 %v298, %v318
        %v332 = vand.u32 %v299, %v318
        %v335 = vand.u32 %v300, %v318
        %v338 = vand.u32 %v301, %v318
        %v341 = vand.u32 %v302, %v318
        %v344 = vand.u32 %v303, %v318
        %v347 = vand.u32 %v304, %v318
        %v350 = vand.u32 %v305, %v318
        %v353 = vand.u32 %v306, %v318
        %v356 = vand.u32 %v307, %v318
        %v359 = vand.u32 %v308, %v318
        %v362 = vand.u32 %v309, %v318
        %v365 = vand.u32 %v310, %v318
        %367 = vmatpush.bf16.msra.mxu0 0
        %368 = vmatpush.bf16.msra.mxu0 0
        %369 = vmatpush.bf16.msra.mxu0 0
        %370 = vmatpush.bf16.msra.mxu0 0
        %371 = vmatpush.bf16.msra.mxu0 0
        %372 = vmatpush.bf16.msra.mxu0 0
        %373 = vmatpush.bf16.msra.mxu0 0
        %374 = vmatpush.bf16.msra.mxu0 %v320
        %375 = vmatmul.bf16.gmra.mxu0 %v313
        %v376 = vpop.f32.mrf.mxu0
        %v377 = vadd.f32 %v245, %v376
        %v378 = vpop.f32.mrf.mxu0
        %379 = vdwg.mxu0
        %380 = vmatpush.bf16.msra.mxu0 0
        %381 = vmatpush.bf16.msra.mxu0 0
        %382 = vmatpush.bf16.msra.mxu0 0
        %383 = vmatpush.bf16.msra.mxu0 0
        %384 = vmatpush.bf16.msra.mxu0 0
        %385 = vmatpush.bf16.msra.mxu0 0
        %386 = vmatpush.bf16.msra.mxu0 0
        %387 = vmatpush.bf16.msra.mxu0 %v323
        %388 = vmatmul.bf16.gmra.mxu0 %v313
        %v389 = vpop.f32.mrf.mxu0
        %v390 = vadd.f32 %v245, %v389
        %v391 = vpop.f32.mrf.mxu0
        %392 = vdwg.mxu0
        %393 = vmatpush.bf16.msra.mxu0 0
        %394 = vmatpush.bf16.msra.mxu0 0
        %395 = vmatpush.bf16.msra.mxu0 0
        %396 = vmatpush.bf16.msra.mxu0 0
        %397 = vmatpush.bf16.msra.mxu0 0
        %398 = vmatpush.bf16.msra.mxu0 0
        %399 = vmatpush.bf16.msra.mxu0 0
        %400 = vmatpush.bf16.msra.mxu0 %v326
        %401 = vmatmul.bf16.gmra.mxu0 %v313
        %v402 = vpop.f32.mrf.mxu0
        %v403 = vadd.f32 %v245, %v402
        %v404 = vpop.f32.mrf.mxu0
        %405 = vdwg.mxu0
        %406 = vmatpush.bf16.msra.mxu0 0
        %407 = vmatpush.bf16.msra.mxu0 0
        %408 = vmatpush.bf16.msra.mxu0 0
        %409 = vmatpush.bf16.msra.mxu0 0
        %410 = vmatpush.bf16.msra.mxu0 0
        %411 = vmatpush.bf16.msra.mxu0 0
        %412 = vmatpush.bf16.msra.mxu0 0
        %413 = vmatpush.bf16.msra.mxu0 %v329
        %414 = vmatmul.bf16.gmra.mxu0 %v313
        %v415 = vpop.f32.mrf.mxu0
        %v416 = vadd.f32 %v245, %v415
        %v417 = vpop.f32.mrf.mxu0
        %418 = vdwg.mxu0
        %419 = vmatpush.bf16.msra.mxu0 0
        %420 = vmatpush.bf16.msra.mxu0 0
        %421 = vmatpush.bf16.msra.mxu0 0
        %422 = vmatpush.bf16.msra.mxu0 0
        %423 = vmatpush.bf16.msra.mxu0 0
        %424 = vmatpush.bf16.msra.mxu0 0
        %425 = vmatpush.bf16.msra.mxu0 0
        %426 = vmatpush.bf16.msra.mxu0 %v332
        %427 = vmatmul.bf16.gmra.mxu0 %v313
        %v428 = vpop.f32.mrf.mxu0
        %v429 = vadd.f32 %v245, %v428
        %v430 = vpop.f32.mrf.mxu0
        %431 = vdwg.mxu0
        %432 = vmatpush.bf16.msra.mxu0 0
        %433 = vmatpush.bf16.msra.mxu0 0
        %434 = vmatpush.bf16.msra.mxu0 0
        %435 = vmatpush.bf16.msra.mxu0 0
        %436 = vmatpush.bf16.msra.mxu0 0
        %437 = vmatpush.bf16.msra.mxu0 0
        %438 = vmatpush.bf16.msra.mxu0 0
        %439 = vmatpush.bf16.msra.mxu0 %v335
        %440 = vmatmul.bf16.gmra.mxu0 %v313
        %v441 = vpop.f32.mrf.mxu0
        %v442 = vadd.f32 %v245, %v441
        %v443 = vpop.f32.mrf.mxu0
        %444 = vdwg.mxu0
        %445 = vmatpush.bf16.msra.mxu0 0
        %446 = vmatpush.bf16.msra.mxu0 0
        %447 = vmatpush.bf16.msra.mxu0 0
        %448 = vmatpush.bf16.msra.mxu0 0
        %449 = vmatpush.bf16.msra.mxu0 0
        %450 = vmatpush.bf16.msra.mxu0 0
        %451 = vmatpush.bf16.msra.mxu0 0
        %452 = vmatpush.bf16.msra.mxu0 %v338
        %453 = vmatmul.bf16.gmra.mxu0 %v313
        %v454 = vpop.f32.mrf.mxu0
        %v455 = vadd.f32 %v245, %v454
        %v456 = vpop.f32.mrf.mxu0
        %457 = vdwg.mxu0
        %458 = vmatpush.bf16.msra.mxu0 0
        %459 = vmatpush.bf16.msra.mxu0 0
        %460 = vmatpush.bf16.msra.mxu0 0
        %461 = vmatpush.bf16.msra.mxu0 0
        %462 = vmatpush.bf16.msra.mxu0 0
        %463 = vmatpush.bf16.msra.mxu0 0
        %464 = vmatpush.bf16.msra.mxu0 0
        %465 = vmatpush.bf16.msra.mxu0 %v341
        %466 = vmatmul.bf16.gmra.mxu0 %v313
        %v467 = vpop.f32.mrf.mxu0
        %v468 = vadd.f32 %v245, %v467
        %v469 = vpop.f32.mrf.mxu0
        %470 = vdwg.mxu0
        %471 = vmatpush.bf16.msra.mxu0 0
        %472 = vmatpush.bf16.msra.mxu0 0
        %473 = vmatpush.bf16.msra.mxu0 0
        %474 = vmatpush.bf16.msra.mxu0 0
        %475 = vmatpush.bf16.msra.mxu0 0
        %476 = vmatpush.bf16.msra.mxu0 0
        %477 = vmatpush.bf16.msra.mxu0 0
        %478 = vmatpush.bf16.msra.mxu0 %v344
        %479 = vmatmul.bf16.gmra.mxu0 %v313
        %v480 = vpop.f32.mrf.mxu0
        %v481 = vadd.f32 %v245, %v480
        %v482 = vpop.f32.mrf.mxu0
        %483 = vdwg.mxu0
        %484 = vmatpush.bf16.msra.mxu0 0
        %485 = vmatpush.bf16.msra.mxu0 0
        %486 = vmatpush.bf16.msra.mxu0 0
        %487 = vmatpush.bf16.msra.mxu0 0
        %488 = vmatpush.bf16.msra.mxu0 0
        %489 = vmatpush.bf16.msra.mxu0 0
        %490 = vmatpush.bf16.msra.mxu0 0
        %491 = vmatpush.bf16.msra.mxu0 %v347
        %492 = vmatmul.bf16.gmra.mxu0 %v313
        %v493 = vpop.f32.mrf.mxu0
        %v494 = vadd.f32 %v245, %v493
        %v495 = vpop.f32.mrf.mxu0
        %496 = vdwg.mxu0
        %497 = vmatpush.bf16.msra.mxu0 0
        %498 = vmatpush.bf16.msra.mxu0 0
        %499 = vmatpush.bf16.msra.mxu0 0
        %500 = vmatpush.bf16.msra.mxu0 0
        %501 = vmatpush.bf16.msra.mxu0 0
        %502 = vmatpush.bf16.msra.mxu0 0
        %503 = vmatpush.bf16.msra.mxu0 0
        %504 = vmatpush.bf16.msra.mxu0 %v350
        %505 = vmatmul.bf16.gmra.mxu0 %v313
        %v506 = vpop.f32.mrf.mxu0
        %v507 = vadd.f32 %v245, %v506
        %v508 = vpop.f32.mrf.mxu0
        %509 = vdwg.mxu0
        %510 = vmatpush.bf16.msra.mxu0 0
        %511 = vmatpush.bf16.msra.mxu0 0
        %512 = vmatpush.bf16.msra.mxu0 0
        %513 = vmatpush.bf16.msra.mxu0 0
        %514 = vmatpush.bf16.msra.mxu0 0
        %515 = vmatpush.bf16.msra.mxu0 0
        %516 = vmatpush.bf16.msra.mxu0 0
        %517 = vmatpush.bf16.msra.mxu0 %v353
        %518 = vmatmul.bf16.gmra.mxu0 %v313
        %v519 = vpop.f32.mrf.mxu0
        %v520 = vadd.f32 %v245, %v519
        %v521 = vpop.f32.mrf.mxu0
        %522 = vdwg.mxu0
        %523 = vmatpush.bf16.msra.mxu0 0
        %524 = vmatpush.bf16.msra.mxu0 0
        %525 = vmatpush.bf16.msra.mxu0 0
        %526 = vmatpush.bf16.msra.mxu0 0
        %527 = vmatpush.bf16.msra.mxu0 0
        %528 = vmatpush.bf16.msra.mxu0 0
        %529 = vmatpush.bf16.msra.mxu0 0
        %530 = vmatpush.bf16.msra.mxu0 %v356
        %531 = vmatmul.bf16.gmra.mxu0 %v313
        %v532 = vpop.f32.mrf.mxu0
        %v533 = vadd.f32 %v245, %v532
        %v534 = vpop.f32.mrf.mxu0
        %535 = vdwg.mxu0
        %536 = vmatpush.bf16.msra.mxu0 0
        %537 = vmatpush.bf16.msra.mxu0 0
        %538 = vmatpush.bf16.msra.mxu0 0
        %539 = vmatpush.bf16.msra.mxu0 0
        %540 = vmatpush.bf16.msra.mxu0 0
        %541 = vmatpush.bf16.msra.mxu0 0
        %542 = vmatpush.bf16.msra.mxu0 0
        %543 = vmatpush.bf16.msra.mxu0 %v359
        %544 = vmatmul.bf16.gmra.mxu0 %v313
        %v545 = vpop.f32.mrf.mxu0
        %v546 = vadd.f32 %v245, %v545
        %v547 = vpop.f32.mrf.mxu0
        %548 = vdwg.mxu0
        %549 = vmatpush.bf16.msra.mxu0 0
        %550 = vmatpush.bf16.msra.mxu0 0
        %551 = vmatpush.bf16.msra.mxu0 0
        %552 = vmatpush.bf16.msra.mxu0 0
        %553 = vmatpush.bf16.msra.mxu0 0
        %554 = vmatpush.bf16.msra.mxu0 0
        %555 = vmatpush.bf16.msra.mxu0 0
        %556 = vmatpush.bf16.msra.mxu0 %v362
        %557 = vmatmul.bf16.gmra.mxu0 %v313
        %v558 = vpop.f32.mrf.mxu0
        %v559 = vadd.f32 %v245, %v558
        %v560 = vpop.f32.mrf.mxu0
        %561 = vdwg.mxu0
        %562 = vmatpush.bf16.msra.mxu0 0
        %563 = vmatpush.bf16.msra.mxu0 0
        %564 = vmatpush.bf16.msra.mxu0 0
        %565 = vmatpush.bf16.msra.mxu0 0
        %566 = vmatpush.bf16.msra.mxu0 0
        %567 = vmatpush.bf16.msra.mxu0 0
        %568 = vmatpush.bf16.msra.mxu0 0
        %569 = vmatpush.bf16.msra.mxu0 %v365
        %570 = vmatmul.bf16.gmra.mxu0 %v313
        %v571 = vpop.f32.mrf.mxu0
        %v572 = vadd.f32 %v245, %v571
        %v573 = vpop.f32.mrf.mxu0
        %574 = vdwg.mxu0
        %v575 = vmax.f32 %v377, 0.0
        %v576 = vmax.f32 %v390, 0.0
        %v577 = vmax.f32 %v403, 0.0
        %v578 = vmax.f32 %v416, 0.0
        %v579 = vmax.f32 %v429, 0.0
        %v580 = vmax.f32 %v442, 0.0
        %v581 = vmax.f32 %v455, 0.0
        %v582 = vmax.f32 %v468, 0.0
        %v583 = vmax.f32 %v481, 0.0
        %v584 = vmax.f32 %v494, 0.0
        %v585 = vmax.f32 %v507, 0.0
        %v586 = vmax.f32 %v520, 0.0
        %v587 = vmax.f32 %v533, 0.0
        %v588 = vmax.f32 %v546, 0.0
        %v589 = vmax.f32 %v559, 0.0
        %v590 = vmax.f32 %v572, 0.0
        %591 = vst [vmem:[%s221] sm:$0xff] %v575
        %592 = vst [vmem:[%s221 + $0x8] sm:$0xff] %v576
        %593 = vst [vmem:[%s221 + $0x10] sm:$0xff] %v577
        %594 = vst [vmem:[%s221 + $0x18] sm:$0xff] %v578
        %595 = vst [vmem:[%s221 + $0x20] sm:$0xff] %v579
        %596 = vst [vmem:[%s221 + $0x28] sm:$0xff] %v580
        %597 = vst [vmem:[%s221 + $0x30] sm:$0xff] %v581
        %598 = vst [vmem:[%s221 + $0x38] sm:$0xff] %v582
        %599 = vst [vmem:[%s221 + $0x40] sm:$0xff] %v583
        %600 = vst [vmem:[%s221 + $0x48] sm:$0xff] %v584
        %601 = vst [vmem:[%s221 + $0x50] sm:$0xff] %v585
        %602 = vst [vmem:[%s221 + $0x58] sm:$0xff] %v586
        %603 = vst [vmem:[%s221 + $0x60] sm:$0xff] %v587
        %604 = vst [vmem:[%s221 + $0x68] sm:$0xff] %v588
        %605 = vst [vmem:[%s221 + $0x70] sm:$0xff] %v589
        %606 = vst [vmem:[%s221 + $0x78] sm:$0xff] %v590
        %s607 = smul.u32 16, %s14
        %p608 = scmp.lt.s32.totalorder %s607, 127
        %s609 = scalar_select %p608, %s607, 127
        %s610 = smul.addr %s609, 8
        %s611 = scalar_lea.vmem %s3, %s610
        // Predicated region
        $region56: #{simple_conv_net_forward.8} parent=50 // pred_check
          %p612 = pneg %p100
        $region57: #{simple_conv_net_forward.8} parent=50 // pred_check_branch
          %614 = sbr.rel (%p612) target = $region59
        $region58: #{simple_conv_net_forward.8} parent=50 // pred_region
          %s615 = smul.u32 16, %s14
        $region59: #{simple_conv_net_forward.8} parent=50 // pred_fallthru
          _
      $region51: #{simple_conv_net_forward.8} parent=5 // pred_fallthru
        _
      %p616 = scmp.le.s32.totalorder 2, %s9
      // Predicated region
      $region60: #{simple_conv_net_forward.8} parent=5 // pred_check
        %p617 = pneg %p616
      $region61: #{simple_conv_net_forward.8} parent=5 // pred_check_branch
        %619 = sbr.rel (%p617) target = $region63
      $region62: #{simple_conv_net_forward.8} parent=5 // pred_region
        %s620 = ssub.s32 %s9, 2
        // Predicated region
        $region64: #{simple_conv_net_forward.8} parent=62 // pred_check
          %p621 = pneg %p106
        $region65: #{simple_conv_net_forward.8} parent=62 // pred_check_branch
          %623 = sbr.rel (%p621) target = $region67
        $region66: #{simple_conv_net_forward.8} parent=62 // pred_region
          %s624 = smul.u32 16, %s15
          %p625 = scmp.lt.s32.totalorder %s624, 127
          %s626 = scalar_select %p625, %s624, 127
          %s627 = smul.addr %s626, 8
          %s628 = scalar_lea.vmem %s3, %s627
        $region67: #{simple_conv_net_forward.8} parent=62 // pred_fallthru
          _
      $region63: #{simple_conv_net_forward.8} parent=5 // pred_fallthru
        _
    $region6: #{simple_conv_net_forward.8} parent=1 // loop_footer
      %s13 = sadd.s32 1, %s9
    $region7: #{simple_conv_net_forward.8} parent=1 // loop_footer_branch
      %8 = sbr.rel target = $region3
    $region8: #{simple_conv_net_forward.8} parent=1 // loop_exit
      _

// kernel: simple_conv_net_forward.9
$region0: #{simple_conv_net_forward.9}
  #allocation0 [shape = 'u32[]', space=smem, size = 0x4, offset = 0x4, fixed_abs, tag = 'smem constant byte address 0x4 - core index']
  #allocation1 [shape = 'u32[72,128]{1,0:T(1,128)}', space=vmem, size = 0x9000, scoped, tag = 'internal scratch']
  %s0 = inlined_call_operand.vmem [shape: bf16[16,72], index: 0, kind: input, shape index: {}]
  %s1 = inlined_call_operand.vmem [shape: bf16[72,4096], index: 1, kind: input, shape index: {}]
  %s2 = inlined_call_operand.vmem [shape: f32[16,1], index: 2, kind: input, shape index: {}]
  %s3 = inlined_call_operand.vmem [shape: f32[16,4096], index: 3, kind: output, shape index: {}]
  %s4 = sld [smem:[#allocation0]]
  $region87: #{simple_conv_net_forward.9} parent=0
    _
  %s6 = ssub.s32 1, %s4
  %s7 = scalar_select 0, %s6, %s4
  $region1: #{simple_conv_net_forward.9} parent=0
    #allocation2 [shape = 'u8[589824]{0}', space=vmem, size = 0x90000, scoped, tag = 'input window, operand 1']
    #allocation3 [shape = 'u8[262144]{0}', space=vmem, size = 0x40000, scoped, tag = 'output window, operand 0']
    loop: start=0, step=1, limit=4
    $region2: #{simple_conv_net_forward.9} parent=1 // loop_pre_header
      _
    $region3: #{simple_conv_net_forward.9} parent=1 // loop_header
      %s9 = sphi 0, %s13
      %p10 = scmp.ge.s32.totalorder %s9, 4
      %s17 = sphi 0, %s17
      %s19 = sphi 0, %s17
      %s20 = sphi 0, %s19
      %s34 = sphi 0, %s20
      %s40 = sphi 0, %s42
      %s43 = sphi 0, %s40
      %s44 = sphi 0, %s43
      %s60 = sphi 0, %s44
      %s64 = sphi 0, %s64
      %s66 = sphi 0, %s64
      %s67 = sphi 0, %s66
      %s81 = sphi 0, %s67
      %s87 = sphi 0, %s89
      %s90 = sphi 0, %s87
      %s91 = sphi 0, %s90
      %s107 = sphi 0, %s91
    $region4: #{simple_conv_net_forward.9} parent=1 // loop_header_branch
      %12 = sbr.rel (%p10) target = $region8
    $region5: #{simple_conv_net_forward.9} parent=1 // loop_body
      %s14 = ssub.s32 %s9, 1
      %s15 = ssub.s32 %s9, 2
      %s16 = sadd.s32 %s9, 1
      %s18 = sadd.s32 %s17, 1
      %p21 = scmp.eq.s32.totalorder %s9, 1
      %p22 = scmp.ne.s32.totalorder %s17, %s19
      %p23 = scmp.eq.s32.totalorder %s9, 0
      %p24 = por %p22, %p23
      %p25 = scmp.ne.s32.totalorder %s17, %s19
      %p26 = scmp.eq.s32.totalorder %s14, 1
      %p27 = por %p25, %p26
      %p28 = scmp.ne.s32.totalorder %s19, %s20
      %p29 = scmp.eq.s32.totalorder %s14, 0
      %p30 = por %p28, %p29
      %p31 = scmp.ne.s32.totalorder %s19, %s20
      %p32 = scmp.eq.s32.totalorder %s15, 1
      %p33 = por %p31, %p32
      %p35 = scmp.ne.s32.totalorder %s20, %s34
      %p36 = scmp.eq.s32.totalorder %s15, 0
      %p37 = por %p35, %p36
      %s38 = ssub.s32 %s9, %s16
      %p39 = scmp.eq.s32.totalorder %s38, 0
      %s41 = sadd.s32 %s40, 1
      %s42 = scalar_select %p39, %s40, %s41
      %p45 = pneg %p39
      %p46 = scmp.eq.s32.totalorder %s9, 1
      %p47 = por %p45, %p46
      %p48 = scmp.ne.s32.totalorder %s40, %s43
      %p49 = scmp.eq.s32.totalorder %s9, 0
      %p50 = por %p48, %p49
      %p51 = scmp.ne.s32.totalorder %s40, %s43
      %p52 = scmp.eq.s32.totalorder %s14, 1
      %p53 = por %p51, %p52
      %p54 = scmp.ne.s32.totalorder %s43, %s44
      %p55 = scmp.eq.s32.totalorder %s14, 0
      %p56 = por %p54, %p55
      %p57 = scmp.ne.s32.totalorder %s43, %s44
      %p58 = scmp.eq.s32.totalorder %s15, 1
      %p59 = por %p57, %p58
      %p61 = scmp.ne.s32.totalorder %s44, %s60
      %p62 = scmp.eq.s32.totalorder %s15, 0
      %p63 = por %p61, %p62
      %s65 = sadd.s32 %s64, 1
      %p68 = scmp.eq.s32.totalorder %s9, 1
      %p69 = scmp.ne.s32.totalorder %s64, %s66
      %p70 = scmp.eq.s32.totalorder %s9, 0
      %p71 = por %p69, %p70
      %p72 = scmp.ne.s32.totalorder %s64, %s66
      %p73 = scmp.eq.s32.totalorder %s14, 1
      %p74 = por %p72, %p73
      %p75 = scmp.ne.s32.totalorder %s66, %s67
      %p76 = scmp.eq.s32.totalorder %s14, 0
      %p77 = por %p75, %p76
      %p78 = scmp.ne.s32.totalorder %s66, %s67
      %p79 = scmp.eq.s32.totalorder %s15, 1
      %p80 = por %p78, %p79
      %p82 = scmp.ne.s32.totalorder %s67, %s81
      %p83 = scmp.eq.s32.totalorder %s15, 0
      %p84 = por %p82, %p83
      %s85 = ssub.s32 %s9, %s16
      %p86 = scmp.eq.s32.totalorder %s85, 0
      %s88 = sadd.s32 %s87, 1
      %s89 = scalar_select %p86, %s87, %s88
      %p92 = pneg %p86
      %p93 = scmp.eq.s32.totalorder %s9, 1
      %p94 = por %p92, %p93
      %p95 = scmp.ne.s32.totalorder %s87, %s90
      %p96 = scmp.eq.s32.totalorder %s9, 0
      %p97 = por %p95, %p96
      %p98 = scmp.ne.s32.totalorder %s87, %s90
      %p99 = scmp.eq.s32.totalorder %s14, 1
      %p100 = por %p98, %p99
      %p101 = scmp.ne.s32.totalorder %s90, %s91
      %p102 = scmp.eq.s32.totalorder %s14, 0
      %p103 = por %p101, %p102
      %p104 = scmp.ne.s32.totalorder %s90, %s91
      %p105 = scmp.eq.s32.totalorder %s15, 1
      %p106 = por %p104, %p105
      %p108 = scmp.ne.s32.totalorder %s91, %s107
      %p109 = scmp.eq.s32.totalorder %s15, 0
      %p110 = por %p108, %p109
      %p111 = scmp.le.s32.totalorder 1, %s9
      %p112 = scmp.lt.s32.totalorder %s9, 3
      %p113 = pnand %p111, %p112
      %p114 = pneg %p113
      // Predicated region
      $region9: #{simple_conv_net_forward.9} parent=5 // pred_check
        _
      $region10: #{simple_conv_net_forward.9} parent=5 // pred_check_branch
        %116 = sbr.rel (%p113) target = $region12
      $region11: #{simple_conv_net_forward.9} parent=5 // pred_region
        %s117 = ssub.s32 %s9, 1
        // Predicated region
        $region13: #{simple_conv_net_forward.9} parent=11 // pred_check
          %p118 = pneg %p30
        $region14: #{simple_conv_net_forward.9} parent=11 // pred_check_branch
          %120 = sbr.rel (%p118) target = $region16
        $region15: #{simple_conv_net_forward.9} parent=11 // pred_region
          _
        $region16: #{simple_conv_net_forward.9} parent=11 // pred_fallthru
          _
        // Predicated region
        $region17: #{simple_conv_net_forward.9} parent=11 // pred_check
          %p121 = pneg %p77
        $region18: #{simple_conv_net_forward.9} parent=11 // pred_check_branch
          %123 = sbr.rel (%p121) target = $region20
        $region19: #{simple_conv_net_forward.9} parent=11 // pred_region
          _
        $region20: #{simple_conv_net_forward.9} parent=11 // pred_fallthru
          _
      $region12: #{simple_conv_net_forward.9} parent=5 // pred_fallthru
        _
      %p124 = scmp.lt.s32.totalorder %s9, 2
      // Predicated region
      $region21: #{simple_conv_net_forward.9} parent=5 // pred_check
        %p125 = pneg %p124
      $region22: #{simple_conv_net_forward.9} parent=5 // pred_check_branch
        %127 = sbr.rel (%p125) target = $region24
      $region23: #{simple_conv_net_forward.9} parent=5 // pred_region
        // Predicated region
        $region25: #{simple_conv_net_forward.9} parent=23 // pred_check
          %p128 = pneg %p50
        $region26: #{simple_conv_net_forward.9} parent=23 // pred_check_branch
          %130 = sbr.rel (%p128) target = $region28
        $region27: #{simple_conv_net_forward.9} parent=23 // pred_region
          %s131 = sand.u32 %s40, 1
          %s132 = sand.u32 %s40, 1
          %s133 = smul.addr %s132, 576
          %s134 = scalar_lea.vmem [#allocation2], %s133
          %s135 = smul.u32 16, %s9
          %s136 = smul.addr %s135, 4
          %s137 = scalar_lea.vmem %s1, %s136
          // Predicated region
          $region29: #{simple_conv_net_forward.9} parent=27 // pred_check
            _
          $region30: #{simple_conv_net_forward.9} parent=27 // pred_check_branch
            %139 = sbr.rel (0) target = $region32
          $region31: #{simple_conv_net_forward.9} parent=27 // pred_region
            // Predicated region
            $region33: #{simple_conv_net_forward.9} parent=31 // pred_check
              _
            $region34: #{simple_conv_net_forward.9} parent=31 // pred_check_branch
              %141 = sbr.rel (0) target = $region36
            $region35: #{simple_conv_net_forward.9} parent=31 // pred_region
              loop: start=0, step=1, limit=1
              $region37: #{simple_conv_net_forward.9} parent=35 // loop_pre_header
                _
              $region38: #{simple_conv_net_forward.9} parent=35 // loop_header
                %s143 = sphi 0, %s147
                %p144 = scmp.ge.s32.totalorder %s143, 1
                %s148 = sphi %s137, %s137
                %s149 = sphi %s134, %s134
              $region39: #{simple_conv_net_forward.9} parent=35 // loop_header_branch
                %146 = sbr.rel (%p144) target = $region43
              $region40: #{simple_conv_net_forward.9} parent=35 // loop_body
                %v150 = vld [vmem:[%s148] sm:$0xff]
                %151 = vst [vmem:[%s149] sm:$0xff] %v150
                %v152 = vld [vmem:[%s148 + $0x8] sm:$0xff]
                %153 = vst [vmem:[%s149 + $0x8] sm:$0xff] %v152
                %v154 = vld [vmem:[%s148 + $0x10] sm:$0xff]
                %155 = vst [vmem:[%s149 + $0x10] sm:$0xff] %v154
                %v156 = vld [vmem:[%s148 + $0x18] sm:$0xff]
                %157 = vst [vmem:[%s149 + $0x18] sm:$0xff] %v156
                %v158 = vld [vmem:[%s148 + $0x20] sm:$0xff]
                %159 = vst [vmem:[%s149 + $0x20] sm:$0xff] %v158
                %v160 = vld [vmem:[%s148 + $0x28] sm:$0xff]
                %161 = vst [vmem:[%s149 + $0x28] sm:$0xff] %v160
                %v162 = vld [vmem:[%s148 + $0x30] sm:$0xff]
                %163 = vst [vmem:[%s149 + $0x30] sm:$0xff] %v162
                %v164 = vld [vmem:[%s148 + $0x38] sm:$0xff]
                %165 = vst [vmem:[%s149 + $0x38] sm:$0xff] %v164
                %v166 = vld [vmem:[%s148 + $0x80] sm:$0xff]
                %167 = vst [vmem:[%s149 + $0x40] sm:$0xff] %v166
                %v168 = vld [vmem:[%s148 + $0x88] sm:$0xff]
                %169 = vst [vmem:[%s149 + $0x48] sm:$0xff] %v168
                %v170 = vld [vmem:[%s148 + $0x90] sm:$0xff]
                %171 = vst [vmem:[%s149 + $0x50] sm:$0xff] %v170
                %v172 = vld [vmem:[%s148 + $0x98] sm:$0xff]
                %173 = vst [vmem:[%s149 + $0x58] sm:$0xff] %v172
                %v174 = vld [vmem:[%s148 + $0xa0] sm:$0xff]
                %175 = vst [vmem:[%s149 + $0x60] sm:$0xff] %v174
                %v176 = vld [vmem:[%s148 + $0xa8] sm:$0xff]
                %177 = vst [vmem:[%s149 + $0x68] sm:$0xff] %v176
                %v178 = vld [vmem:[%s148 + $0xb0] sm:$0xff]
                %179 = vst [vmem:[%s149 + $0x70] sm:$0xff] %v178
                %v180 = vld [vmem:[%s148 + $0xb8] sm:$0xff]
                %181 = vst [vmem:[%s149 + $0x78] sm:$0xff] %v180
                %v182 = vld [vmem:[%s148 + $0x100] sm:$0xff]
                %183 = vst [vmem:[%s149 + $0x80] sm:$0xff] %v182
                %v184 = vld [vmem:[%s148 + $0x108] sm:$0xff]
                %185 = vst [vmem:[%s149 + $0x88] sm:$0xff] %v184
                %v186 = vld [vmem:[%s148 + $0x110] sm:$0xff]
                %187 = vst [vmem:[%s149 + $0x90] sm:$0xff] %v186
                %v188 = vld [vmem:[%s148 + $0x118] sm:$0xff]
                %189 = vst [vmem:[%s149 + $0x98] sm:$0xff] %v188
                %v190 = vld [vmem:[%s148 + $0x120] sm:$0xff]
                %191 = vst [vmem:[%s149 + $0xa0] sm:$0xff] %v190
                %v192 = vld [vmem:[%s148 + $0x128] sm:$0xff]
                %193 = vst [vmem:[%s149 + $0xa8] sm:$0xff] %v192
                %v194 = vld [vmem:[%s148 + $0x130] sm:$0xff]
                %195 = vst [vmem:[%s149 + $0xb0] sm:$0xff] %v194
                %v196 = vld [vmem:[%s148 + $0x138] sm:$0xff]
                %197 = vst [vmem:[%s149 + $0xb8] sm:$0xff] %v196
                %v198 = vld [vmem:[%s148 + $0x180] sm:$0xff]
                %199 = vst [vmem:[%s149 + $0xc0] sm:$0xff] %v198
                %v200 = vld [vmem:[%s148 + $0x188] sm:$0xff]
                %201 = vst [vmem:[%s149 + $0xc8] sm:$0xff] %v200
                %v202 = vld [vmem:[%s148 + $0x190] sm:$0xff]
                %203 = vst [vmem:[%s149 + $0xd0] sm:$0xff] %v202
                %v204 = vld [vmem:[%s148 + $0x198] sm:$0xff]
                %205 = vst [vmem:[%s149 + $0xd8] sm:$0xff] %v204
                %v206 = vld [vmem:[%s148 + $0x1a0] sm:$0xff]
                %207 = vst [vmem:[%s149 + $0xe0] sm:$0xff] %v206
                %v208 = vld [vmem:[%s148 + $0x1a8] sm:$0xff]
                %209 = vst [vmem:[%s149 + $0xe8] sm:$0xff] %v208
                %v210 = vld [vmem:[%s148 + $0x1b0] sm:$0xff]
                %211 = vst [vmem:[%s149 + $0xf0] sm:$0xff] %v210
                %v212 = vld [vmem:[%s148 + $0x1b8] sm:$0xff]
                %213 = vst [vmem:[%s149 + $0xf8] sm:$0xff] %v212
                %v214 = vld [vmem:[%s148 + $0x200] sm:$0xff]
                %215 = vst [vmem:[%s149 + $0x100] sm:$0xff] %v214
                %v216 = vld [vmem:[%s148 + $0x208] sm:$0xff]
                %217 = vst [vmem:[%s149 + $0x108] sm:$0xff] %v216
                %v218 = vld [vmem:[%s148 + $0x210] sm:$0xff]
                %219 = vst [vmem:[%s149 + $0x110] sm:$0xff] %v218
                %v220 = vld [vmem:[%s148 + $0x218] sm:$0xff]
                %221 = vst [vmem:[%s149 + $0x118] sm:$0xff] %v220
                %v222 = vld [vmem:[%s148 + $0x220] sm:$0xff]
                %223 = vst [vmem:[%s149 + $0x120] sm:$0xff] %v222
                %v224 = vld [vmem:[%s148 + $0x228] sm:$0xff]
                %225 = vst [vmem:[%s149 + $0x128] sm:$0xff] %v224
                %v226 = vld [vmem:[%s148 + $0x230] sm:$0xff]
                %227 = vst [vmem:[%s149 + $0x130] sm:$0xff] %v226
                %v228 = vld [vmem:[%s148 + $0x238] sm:$0xff]
                %229 = vst [vmem:[%s149 + $0x138] sm:$0xff] %v228
                %v230 = vld [vmem:[%s148 + $0x280] sm:$0xff]
                %231 = vst [vmem:[%s149 + $0x140] sm:$0xff] %v230
                %v232 = vld [vmem:[%s148 + $0x288] sm:$0xff]
                %233 = vst [vmem:[%s149 + $0x148] sm:$0xff] %v232
                %v234 = vld [vmem:[%s148 + $0x290] sm:$0xff]
                %235 = vst [vmem:[%s149 + $0x150] sm:$0xff] %v234
                %v236 = vld [vmem:[%s148 + $0x298] sm:$0xff]
                %237 = vst [vmem:[%s149 + $0x158] sm:$0xff] %v236
                %v238 = vld [vmem:[%s148 + $0x2a0] sm:$0xff]
                %239 = vst [vmem:[%s149 + $0x160] sm:$0xff] %v238
                %v240 = vld [vmem:[%s148 + $0x2a8] sm:$0xff]
                %241 = vst [vmem:[%s149 + $0x168] sm:$0xff] %v240
                %v242 = vld [vmem:[%s148 + $0x2b0] sm:$0xff]
                %243 = vst [vmem:[%s149 + $0x170] sm:$0xff] %v242
                %v244 = vld [vmem:[%s148 + $0x2b8] sm:$0xff]
                %245 = vst [vmem:[%s149 + $0x178] sm:$0xff] %v244
                %v246 = vld [vmem:[%s148 + $0x300] sm:$0xff]
                %247 = vst [vmem:[%s149 + $0x180] sm:$0xff] %v246
                %v248 = vld [vmem:[%s148 + $0x308] sm:$0xff]
                %249 = vst [vmem:[%s149 + $0x188] sm:$0xff] %v248
                %v250 = vld [vmem:[%s148 + $0x310] sm:$0xff]
                %251 = vst [vmem:[%s149 + $0x190] sm:$0xff] %v250
                %v252 = vld [vmem:[%s148 + $0x318] sm:$0xff]
                %253 = vst [vmem:[%s149 + $0x198] sm:$0xff] %v252
                %v254 = vld [vmem:[%s148 + $0x320] sm:$0xff]
                %255 = vst [vmem:[%s149 + $0x1a0] sm:$0xff] %v254
                %v256 = vld [vmem:[%s148 + $0x328] sm:$0xff]
                %257 = vst [vmem:[%s149 + $0x1a8] sm:$0xff] %v256
                %v258 = vld [vmem:[%s148 + $0x330] sm:$0xff]
                %259 = vst [vmem:[%s149 + $0x1b0] sm:$0xff] %v258
                %v260 = vld [vmem:[%s148 + $0x338] sm:$0xff]
                %261 = vst [vmem:[%s149 + $0x1b8] sm:$0xff] %v260
                %v262 = vld [vmem:[%s148 + $0x380] sm:$0xff]
                %263 = vst [vmem:[%s149 + $0x1c0] sm:$0xff] %v262
                %v264 = vld [vmem:[%s148 + $0x388] sm:$0xff]
                %265 = vst [vmem:[%s149 + $0x1c8] sm:$0xff] %v264
                %v266 = vld [vmem:[%s148 + $0x390] sm:$0xff]
                %267 = vst [vmem:[%s149 + $0x1d0] sm:$0xff] %v266
                %v268 = vld [vmem:[%s148 + $0x398] sm:$0xff]
                %269 = vst [vmem:[%s149 + $0x1d8] sm:$0xff] %v268
                %v270 = vld [vmem:[%s148 + $0x3a0] sm:$0xff]
                %271 = vst [vmem:[%s149 + $0x1e0] sm:$0xff] %v270
                %v272 = vld [vmem:[%s148 + $0x3a8] sm:$0xff]
                %273 = vst [vmem:[%s149 + $0x1e8] sm:$0xff] %v272
                %v274 = vld [vmem:[%s148 + $0x3b0] sm:$0xff]
                %275 = vst [vmem:[%s149 + $0x1f0] sm:$0xff] %v274
                %v276 = vld [vmem:[%s148 + $0x3b8] sm:$0xff]
                %277 = vst [vmem:[%s149 + $0x1f8] sm:$0xff] %v276
                %v278 = vld [vmem:[%s148 + $0x400] sm:$0xff]
                %279 = vst [vmem:[%s149 + $0x200] sm:$0xff] %v278
                %v280 = vld [vmem:[%s148 + $0x408] sm:$0xff]
                %281 = vst [vmem:[%s149 + $0x208] sm:$0xff] %v280
                %v282 = vld [vmem:[%s148 + $0x410] sm:$0xff]
                %283 = vst [vmem:[%s149 + $0x210] sm:$0xff] %v282
                %v284 = vld [vmem:[%s148 + $0x418] sm:$0xff]
                %285 = vst [vmem:[%s149 + $0x218] sm:$0xff] %v284
                %v286 = vld [vmem:[%s148 + $0x420] sm:$0xff]
                %287 = vst [vmem:[%s149 + $0x220] sm:$0xff] %v286
                %v288 = vld [vmem:[%s148 + $0x428] sm:$0xff]
                %289 = vst [vmem:[%s149 + $0x228] sm:$0xff] %v288
                %v290 = vld [vmem:[%s148 + $0x430] sm:$0xff]
                %291 = vst [vmem:[%s149 + $0x230] sm:$0xff] %v290
                %v292 = vld [vmem:[%s148 + $0x438] sm:$0xff]
                %293 = vst [vmem:[%s149 + $0x238] sm:$0xff] %v292
              $region41: #{simple_conv_net_forward.9} parent=35 // loop_footer
                %s147 = sadd.s32 1, %s143
              $region42: #{simple_conv_net_forward.9} parent=35 // loop_footer_branch
                %142 = sbr.rel target = $region38
              $region43: #{simple_conv_net_forward.9} parent=35 // loop_exit
                _
            $region36: #{simple_conv_net_forward.9} parent=31 // pred_fallthru
              _
            // Predicated region
            $region44: #{simple_conv_net_forward.9} parent=31 // pred_check
              _
            $region45: #{simple_conv_net_forward.9} parent=31 // pred_check_branch
              %295 = sbr.rel target = $region47
            $region46: #{simple_conv_net_forward.9} parent=31 // pred_region
              _
            $region47: #{simple_conv_net_forward.9} parent=31 // pred_fallthru
              _
          $region32: #{simple_conv_net_forward.9} parent=27 // pred_fallthru
            _
          %296 = vnop
        $region28: #{simple_conv_net_forward.9} parent=23 // pred_fallthru
          _
      $region24: #{simple_conv_net_forward.9} parent=5 // pred_fallthru
        _
      %p297 = scmp.le.s32.totalorder 1, %s9
      %p298 = scmp.lt.s32.totalorder %s9, 3
      %p299 = pnand %p297, %p298
      %p300 = pneg %p299
      // Predicated region
      $region48: #{simple_conv_net_forward.9} parent=5 // pred_check
        _
      $region49: #{simple_conv_net_forward.9} parent=5 // pred_check_branch
        %302 = sbr.rel (%p299) target = $region51
      $region50: #{simple_conv_net_forward.9} parent=5 // pred_region
        %s303 = ssub.s32 %s9, 1
        %s304 = sand.u32 %s43, 1
        %s305 = sand.u32 %s43, 1
        %s306 = smul.addr %s305, 576
        %s307 = scalar_lea.vmem [#allocation2], %s306
        // Predicated region
        $region52: #{simple_conv_net_forward.9} parent=50 // pred_check
          %p308 = pneg %p56
        $region53: #{simple_conv_net_forward.9} parent=50 // pred_check_branch
          %310 = sbr.rel (%p308) target = $region55
        $region54: #{simple_conv_net_forward.9} parent=50 // pred_region
          _
        $region55: #{simple_conv_net_forward.9} parent=50 // pred_fallthru
          _
        %p311 = pneg %p30
        %p312 = pneg %p27
        %s313 = sand.u32 %s43, 1
        %s314 = sand.u32 %s43, 1
        %s315 = smul.addr %s314, 576
        %s316 = scalar_lea.vmem [#allocation2], %s315
        %p317 = pneg %p56
        %p318 = pneg %p53
        %p319 = pneg %p77
        %p320 = pneg %p74
        %p321 = pneg %p103
        %p322 = pneg %p100
        %s323 = sand.u32 %s90, 1
        %s324 = sand.u32 %s90, 1
        %s325 = smul.addr %s324, 256
        %s326 = scalar_lea.vmem [#allocation3], %s325
        %s327 = smul.u32 16, %s14
        %s328 = smul.u32 16, %s14
        %v330 = vld [vmem:[%s0] sm:$0xf]
        %v331 = vld [vmem:[%s0 + $0x4] sm:$0xf]
        %v332 = vld [vmem:[%s307] sm:$0xff]
        %v333 = vld [vmem:[%s307 + $0x8] sm:$0xff]
        %v334 = vld [vmem:[%s307 + $0x10] sm:$0xff]
        %v335 = vld [vmem:[%s307 + $0x18] sm:$0xff]
        %v336 = vld [vmem:[%s307 + $0x20] sm:$0xff]
        %v337 = vld [vmem:[%s307 + $0x28] sm:$0xff]
        %v338 = vld [vmem:[%s307 + $0x30] sm:$0xff]
        %v339 = vld [vmem:[%s307 + $0x38] sm:$0xff]
        %v340 = vld [vmem:[%s307 + $0x40] sm:$0xff]
        %v341 = vld [vmem:[%s307 + $0x48] sm:$0xff]
        %v342 = vld [vmem:[%s307 + $0x50] sm:$0xff]
        %v343 = vld [vmem:[%s307 + $0x58] sm:$0xff]
        %v344 = vld [vmem:[%s307 + $0x60] sm:$0xff]
        %v345 = vld [vmem:[%s307 + $0x68] sm:$0xff]
        %v346 = vld [vmem:[%s307 + $0x70] sm:$0xff]
        %v347 = vld [vmem:[%s307 + $0x78] sm:$0xff]
        %v348 = vld [vmem:[%s307 + $0x80] sm:$0xff]
        %v349 = vld [vmem:[%s307 + $0x88] sm:$0xff]
        %v350 = vld [vmem:[%s307 + $0x90] sm:$0xff]
        %v351 = vld [vmem:[%s307 + $0x98] sm:$0xff]
        %v352 = vld [vmem:[%s307 + $0xa0] sm:$0xff]
        %v353 = vld [vmem:[%s307 + $0xa8] sm:$0xff]
        %v354 = vld [vmem:[%s307 + $0xb0] sm:$0xff]
        %v355 = vld [vmem:[%s307 + $0xb8] sm:$0xff]
        %v356 = vld [vmem:[%s307 + $0xc0] sm:$0xff]
        %v357 = vld [vmem:[%s307 + $0xc8] sm:$0xff]
        %v358 = vld [vmem:[%s307 + $0xd0] sm:$0xff]
        %v359 = vld [vmem:[%s307 + $0xd8] sm:$0xff]
        %v360 = vld [vmem:[%s307 + $0xe0] sm:$0xff]
        %v361 = vld [vmem:[%s307 + $0xe8] sm:$0xff]
        %v362 = vld [vmem:[%s307 + $0xf0] sm:$0xff]
        %v363 = vld [vmem:[%s307 + $0xf8] sm:$0xff]
        %v364 = vld [vmem:[%s307 + $0x100] sm:$0xff]
        %v365 = vld [vmem:[%s307 + $0x108] sm:$0xff]
        %v366 = vld [vmem:[%s307 + $0x110] sm:$0xff]
        %v367 = vld [vmem:[%s307 + $0x118] sm:$0xff]
        %v368 = vld [vmem:[%s307 + $0x120] sm:$0xff]
        %v369 = vld [vmem:[%s307 + $0x128] sm:$0xff]
        %v370 = vld [vmem:[%s307 + $0x130] sm:$0xff]
        %v371 = vld [vmem:[%s307 + $0x138] sm:$0xff]
        %v372 = vld [vmem:[%s307 + $0x140] sm:$0xff]
        %v373 = vld [vmem:[%s307 + $0x148] sm:$0xff]
        %v374 = vld [vmem:[%s307 + $0x150] sm:$0xff]
        %v375 = vld [vmem:[%s307 + $0x158] sm:$0xff]
        %v376 = vld [vmem:[%s307 + $0x160] sm:$0xff]
        %v377 = vld [vmem:[%s307 + $0x168] sm:$0xff]
        %v378 = vld [vmem:[%s307 + $0x170] sm:$0xff]
        %v379 = vld [vmem:[%s307 + $0x178] sm:$0xff]
        %v380 = vld [vmem:[%s307 + $0x180] sm:$0xff]
        %v381 = vld [vmem:[%s307 + $0x188] sm:$0xff]
        %v382 = vld [vmem:[%s307 + $0x190] sm:$0xff]
        %v383 = vld [vmem:[%s307 + $0x198] sm:$0xff]
        %v384 = vld [vmem:[%s307 + $0x1a0] sm:$0xff]
        %v385 = vld [vmem:[%s307 + $0x1a8] sm:$0xff]
        %v386 = vld [vmem:[%s307 + $0x1b0] sm:$0xff]
        %v387 = vld [vmem:[%s307 + $0x1b8] sm:$0xff]
        %v388 = vld [vmem:[%s307 + $0x1c0] sm:$0xff]
        %v389 = vld [vmem:[%s307 + $0x1c8] sm:$0xff]
        %v390 = vld [vmem:[%s307 + $0x1d0] sm:$0xff]
        %v391 = vld [vmem:[%s307 + $0x1d8] sm:$0xff]
        %v392 = vld [vmem:[%s307 + $0x1e0] sm:$0xff]
        %v393 = vld [vmem:[%s307 + $0x1e8] sm:$0xff]
        %v394 = vld [vmem:[%s307 + $0x1f0] sm:$0xff]
        %v395 = vld [vmem:[%s307 + $0x1f8] sm:$0xff]
        %v396 = vld [vmem:[%s307 + $0x200] sm:$0xff]
        %v397 = vld [vmem:[%s307 + $0x208] sm:$0xff]
        %v398 = vld [vmem:[%s307 + $0x210] sm:$0xff]
        %v399 = vld [vmem:[%s307 + $0x218] sm:$0xff]
        %v400 = vld [vmem:[%s307 + $0x220] sm:$0xff]
        %v401 = vld [vmem:[%s307 + $0x228] sm:$0xff]
        %v402 = vld [vmem:[%s307 + $0x230] sm:$0xff]
        %v403 = vld [vmem:[%s307 + $0x238] sm:$0xff]
        %v404 = vld [vmem:[%s2] sm:$0xff]
        %v405 = vld [vmem:[%s2 + $0x8] sm:$0xff]
        %407 = vset.pattern.permute.xlu0 0
        %408 = vperm.xlu0 %407, %v404
        %v409 = vpop.permute.xlu0 %408
        %412 = vset.pattern.permute.xlu0 0
        %413 = vperm.xlu0 %412, %v405
        %v414 = vpop.permute.xlu0 %413
        %v418 = vunpack.c.l.b16 %v330
        %v419 = vunpack.c.l.b16 %v331
        %v420 = vpack.c.b16 %v419, %v418
        %v493 = vunpack.c.l.b16 %v332
        %v494 = vunpack.c.h.b16 %v332
        %v495 = vunpack.c.l.b16 %v333
        %v496 = vunpack.c.h.b16 %v333
        %v497 = vunpack.c.l.b16 %v334
        %v498 = vunpack.c.h.b16 %v334
        %v499 = vunpack.c.l.b16 %v335
        %v500 = vunpack.c.h.b16 %v335
        %v501 = vunpack.c.l.b16 %v336
        %v502 = vunpack.c.h.b16 %v336
        %v503 = vunpack.c.l.b16 %v337
        %v504 = vunpack.c.h.b16 %v337
        %v505 = vunpack.c.l.b16 %v338
        %v506 = vunpack.c.h.b16 %v338
        %v507 = vunpack.c.l.b16 %v339
        %v508 = vunpack.c.h.b16 %v339
        %v509 = vunpack.c.l.b16 %v340
        %v510 = vunpack.c.h.b16 %v340
        %v511 = vunpack.c.l.b16 %v341
        %v512 = vunpack.c.h.b16 %v341
        %v513 = vunpack.c.l.b16 %v342
        %v514 = vunpack.c.h.b16 %v342
        %v515 = vunpack.c.l.b16 %v343
        %v516 = vunpack.c.h.b16 %v343
        %v517 = vunpack.c.l.b16 %v344
        %v518 = vunpack.c.h.b16 %v344
        %v519 = vunpack.c.l.b16 %v345
        %v520 = vunpack.c.h.b16 %v345
        %v521 = vunpack.c.l.b16 %v346
        %v522 = vunpack.c.h.b16 %v346
        %v523 = vunpack.c.l.b16 %v347
        %v524 = vunpack.c.h.b16 %v347
        %v525 = vunpack.c.l.b16 %v348
        %v526 = vunpack.c.h.b16 %v348
        %v527 = vunpack.c.l.b16 %v349
        %v528 = vunpack.c.h.b16 %v349
        %v529 = vunpack.c.l.b16 %v350
        %v530 = vunpack.c.h.b16 %v350
        %v531 = vunpack.c.l.b16 %v351
        %v532 = vunpack.c.h.b16 %v351
        %v533 = vunpack.c.l.b16 %v352
        %v534 = vunpack.c.h.b16 %v352
        %v535 = vunpack.c.l.b16 %v353
        %v536 = vunpack.c.h.b16 %v353
        %v537 = vunpack.c.l.b16 %v354
        %v538 = vunpack.c.h.b16 %v354
        %v539 = vunpack.c.l.b16 %v355
        %v540 = vunpack.c.h.b16 %v355
        %v541 = vunpack.c.l.b16 %v356
        %v542 = vunpack.c.h.b16 %v356
        %v543 = vunpack.c.l.b16 %v357
        %v544 = vunpack.c.h.b16 %v357
        %v545 = vunpack.c.l.b16 %v358
        %v546 = vunpack.c.h.b16 %v358
        %v547 = vunpack.c.l.b16 %v359
        %v548 = vunpack.c.h.b16 %v359
        %v549 = vunpack.c.l.b16 %v360
        %v550 = vunpack.c.h.b16 %v360
        %v551 = vunpack.c.l.b16 %v361
        %v552 = vunpack.c.h.b16 %v361
        %v553 = vunpack.c.l.b16 %v362
        %v554 = vunpack.c.h.b16 %v362
        %v555 = vunpack.c.l.b16 %v363
        %v556 = vunpack.c.h.b16 %v363
        %v557 = vunpack.c.l.b16 %v364
        %v558 = vunpack.c.h.b16 %v364
        %v559 = vunpack.c.l.b16 %v365
        %v560 = vunpack.c.h.b16 %v365
        %v561 = vunpack.c.l.b16 %v366
        %v562 = vunpack.c.h.b16 %v366
        %v563 = vunpack.c.l.b16 %v367
        %v564 = vunpack.c.h.b16 %v367
        %v565 = vunpack.c.l.b16 %v368
        %v566 = vunpack.c.h.b16 %v368
        %v567 = vunpack.c.l.b16 %v369
        %v568 = vunpack.c.h.b16 %v369
        %v569 = vunpack.c.l.b16 %v370
        %v570 = vunpack.c.h.b16 %v370
        %v571 = vunpack.c.l.b16 %v371
        %v572 = vunpack.c.h.b16 %v371
        %v573 = vunpack.c.l.b16 %v372
        %v574 = vunpack.c.h.b16 %v372
        %v575 = vunpack.c.l.b16 %v373
        %v576 = vunpack.c.h.b16 %v373
        %v577 = vunpack.c.l.b16 %v374
        %v578 = vunpack.c.h.b16 %v374
        %v579 = vunpack.c.l.b16 %v375
        %v580 = vunpack.c.h.b16 %v375
        %v581 = vunpack.c.l.b16 %v376
        %v582 = vunpack.c.h.b16 %v376
        %v583 = vunpack.c.l.b16 %v377
        %v584 = vunpack.c.h.b16 %v377
        %v585 = vunpack.c.l.b16 %v378
        %v586 = vunpack.c.h.b16 %v378
        %v587 = vunpack.c.l.b16 %v379
        %v588 = vunpack.c.h.b16 %v379
        %v589 = vunpack.c.l.b16 %v380
        %v590 = vunpack.c.h.b16 %v380
        %v591 = vunpack.c.l.b16 %v381
        %v592 = vunpack.c.h.b16 %v381
        %v593 = vunpack.c.l.b16 %v382
        %v594 = vunpack.c.h.b16 %v382
        %v595 = vunpack.c.l.b16 %v383
        %v596 = vunpack.c.h.b16 %v383
        %v597 = vunpack.c.l.b16 %v384
        %v598 = vunpack.c.h.b16 %v384
        %v599 = vunpack.c.l.b16 %v385
        %v600 = vunpack.c.h.b16 %v385
        %v601 = vunpack.c.l.b16 %v386
        %v602 = vunpack.c.h.b16 %v386
        %v603 = vunpack.c.l.b16 %v387
        %v604 = vunpack.c.h.b16 %v387
        %v605 = vunpack.c.l.b16 %v388
        %v606 = vunpack.c.h.b16 %v388
        %v607 = vunpack.c.l.b16 %v389
        %v608 = vunpack.c.h.b16 %v389
        %v609 = vunpack.c.l.b16 %v390
        %v610 = vunpack.c.h.b16 %v390
        %v611 = vunpack.c.l.b16 %v391
        %v612 = vunpack.c.h.b16 %v391
        %v613 = vunpack.c.l.b16 %v392
        %v614 = vunpack.c.h.b16 %v392
        %v615 = vunpack.c.l.b16 %v393
        %v616 = vunpack.c.h.b16 %v393
        %v617 = vunpack.c.l.b16 %v394
        %v618 = vunpack.c.h.b16 %v394
        %v619 = vunpack.c.l.b16 %v395
        %v620 = vunpack.c.h.b16 %v395
        %v621 = vunpack.c.l.b16 %v396
        %v622 = vunpack.c.h.b16 %v396
        %v623 = vunpack.c.l.b16 %v397
        %v624 = vunpack.c.h.b16 %v397
        %v625 = vunpack.c.l.b16 %v398
        %v626 = vunpack.c.h.b16 %v398
        %v627 = vunpack.c.l.b16 %v399
        %v628 = vunpack.c.h.b16 %v399
        %v629 = vunpack.c.l.b16 %v400
        %v630 = vunpack.c.h.b16 %v400
        %v631 = vunpack.c.l.b16 %v401
        %v632 = vunpack.c.h.b16 %v401
        %v633 = vunpack.c.l.b16 %v402
        %v634 = vunpack.c.h.b16 %v402
        %v635 = vunpack.c.l.b16 %v403
        %v636 = vunpack.c.h.b16 %v403
        %v637 = vpack.c.b16 %v509, %v493
        %v638 = vpack.c.b16 %v510, %v494
        %v639 = vpack.c.b16 %v511, %v495
        %v640 = vpack.c.b16 %v512, %v496
        %v641 = vpack.c.b16 %v513, %v497
        %v642 = vpack.c.b16 %v514, %v498
        %v643 = vpack.c.b16 %v515, %v499
        %v644 = vpack.c.b16 %v516, %v500
        %v645 = vpack.c.b16 %v517, %v501
        %v646 = vpack.c.b16 %v518, %v502
        %v647 = vpack.c.b16 %v519, %v503
        %v648 = vpack.c.b16 %v520, %v504
        %v649 = vpack.c.b16 %v521, %v505
        %v650 = vpack.c.b16 %v522, %v506
        %v651 = vpack.c.b16 %v523, %v507
        %v652 = vpack.c.b16 %v524, %v508
        %v653 = vpack.c.b16 %v541, %v525
        %v654 = vpack.c.b16 %v542, %v526
        %v655 = vpack.c.b16 %v543, %v527
        %v656 = vpack.c.b16 %v544, %v528
        %v657 = vpack.c.b16 %v545, %v529
        %v658 = vpack.c.b16 %v546, %v530
        %v659 = vpack.c.b16 %v547, %v531
        %v660 = vpack.c.b16 %v548, %v532
        %v661 = vpack.c.b16 %v549, %v533
        %v662 = vpack.c.b16 %v550, %v534
        %v663 = vpack.c.b16 %v551, %v535
        %v664 = vpack.c.b16 %v552, %v536
        %v665 = vpack.c.b16 %v553, %v537
        %v666 = vpack.c.b16 %v554, %v538
        %v667 = vpack.c.b16 %v555, %v539
        %v668 = vpack.c.b16 %v556, %v540
        %v669 = vpack.c.b16 %v573, %v557
        %v670 = vpack.c.b16 %v574, %v558
        %v671 = vpack.c.b16 %v575, %v559
        %v672 = vpack.c.b16 %v576, %v560
        %v673 = vpack.c.b16 %v577, %v561
        %v674 = vpack.c.b16 %v578, %v562
        %v675 = vpack.c.b16 %v579, %v563
        %v676 = vpack.c.b16 %v580, %v564
        %v677 = vpack.c.b16 %v581, %v565
        %v678 = vpack.c.b16 %v582, %v566
        %v679 = vpack.c.b16 %v583, %v567
        %v680 = vpack.c.b16 %v584, %v568
        %v681 = vpack.c.b16 %v585, %v569
        %v682 = vpack.c.b16 %v586, %v570
        %v683 = vpack.c.b16 %v587, %v571
        %v684 = vpack.c.b16 %v588, %v572
        %v685 = vpack.c.b16 %v605, %v589
        %v686 = vpack.c.b16 %v606, %v590
        %v687 = vpack.c.b16 %v607, %v591
        %v688 = vpack.c.b16 %v608, %v592
        %v689 = vpack.c.b16 %v609, %v593
        %v690 = vpack.c.b16 %v610, %v594
        %v691 = vpack.c.b16 %v611, %v595
        %v692 = vpack.c.b16 %v612, %v596
        %v693 = vpack.c.b16 %v613, %v597
        %v694 = vpack.c.b16 %v614, %v598
        %v695 = vpack.c.b16 %v615, %v599
        %v696 = vpack.c.b16 %v616, %v600
        %v697 = vpack.c.b16 %v617, %v601
        %v698 = vpack.c.b16 %v618, %v602
        %v699 = vpack.c.b16 %v619, %v603
        %v700 = vpack.c.b16 %v620, %v604
        %v701 = vpack.c.b16 %v621, %v621
        %v702 = vpack.c.b16 %v622, %v622
        %v703 = vpack.c.b16 %v623, %v623
        %v704 = vpack.c.b16 %v624, %v624
        %v705 = vpack.c.b16 %v625, %v625
        %v706 = vpack.c.b16 %v626, %v626
        %v707 = vpack.c.b16 %v627, %v627
        %v708 = vpack.c.b16 %v628, %v628
        %v709 = vpack.c.b16 %v629, %v629
        %v710 = vpack.c.b16 %v630, %v630
        %v711 = vpack.c.b16 %v631, %v631
        %v712 = vpack.c.b16 %v632, %v632
        %v713 = vpack.c.b16 %v633, %v633
        %v714 = vpack.c.b16 %v634, %v634
        %v715 = vpack.c.b16 %v635, %v635
        %v716 = vpack.c.b16 %v636, %v636
        %vm781 = vcmask 588800
        %v783 = vsel %vm781, %v420, 0
        %vm785 = vcmask 1043456
        %v787 = vsel %vm785, %v701, 0
        %v790 = vsel %vm785, %v702, 0
        %v793 = vsel %vm785, %v703, 0
        %v796 = vsel %vm785, %v704, 0
        %v799 = vsel %vm785, %v705, 0
        %v802 = vsel %vm785, %v706, 0
        %v805 = vsel %vm785, %v707, 0
        %v808 = vsel %vm785, %v708, 0
        %v811 = vsel %vm785, %v709, 0
        %v814 = vsel %vm785, %v710, 0
        %v817 = vsel %vm785, %v711, 0
        %v820 = vsel %vm785, %v712, 0
        %v823 = vsel %vm785, %v713, 0
        %v826 = vsel %vm785, %v714, 0
        %v829 = vsel %vm785, %v715, 0
        %v832 = vsel %vm785, %v716, 0
        %834 = vmatpush.bf16.msra.mxu0 0
        %835 = vmatpush.bf16.msra.mxu0 0
        %836 = vmatpush.bf16.msra.mxu0 0
        %837 = vmatpush.bf16.msra.mxu0 %v787
        %838 = vmatpush.bf16.msra.mxu0 %v685
        %839 = vmatpush.bf16.msra.mxu0 %v669
        %840 = vmatpush.bf16.msra.mxu0 %v653
        %841 = vmatpush.bf16.msra.mxu0 %v637
        %842 = vmatmul.bf16.gmra.mxu0 %v783
        %v843 = vpop.f32.mrf.mxu0
        %v844 = vadd.f32 %v409, %v843
        %v845 = vpop.f32.mrf.mxu0
        %v846 = vadd.f32 %v414, %v845
        %847 = vdwg.mxu0
        %848 = vmatpush.bf16.msra.mxu0 0
        %849 = vmatpush.bf16.msra.mxu0 0
        %850 = vmatpush.bf16.msra.mxu0 0
        %851 = vmatpush.bf16.msra.mxu0 %v790
        %852 = vmatpush.bf16.msra.mxu0 %v686
        %853 = vmatpush.bf16.msra.mxu0 %v670
        %854 = vmatpush.bf16.msra.mxu0 %v654
        %855 = vmatpush.bf16.msra.mxu0 %v638
        %856 = vmatmul.bf16.gmra.mxu0 %v783
        %v857 = vpop.f32.mrf.mxu0
        %v858 = vadd.f32 %v409, %v857
        %v859 = vpop.f32.mrf.mxu0
        %v860 = vadd.f32 %v414, %v859
        %861 = vdwg.mxu0
        %862 = vmatpush.bf16.msra.mxu0 0
        %863 = vmatpush.bf16.msra.mxu0 0
        %864 = vmatpush.bf16.msra.mxu0 0
        %865 = vmatpush.bf16.msra.mxu0 %v793
        %866 = vmatpush.bf16.msra.mxu0 %v687
        %867 = vmatpush.bf16.msra.mxu0 %v671
        %868 = vmatpush.bf16.msra.mxu0 %v655
        %869 = vmatpush.bf16.msra.mxu0 %v639
        %870 = vmatmul.bf16.gmra.mxu0 %v783
        %v871 = vpop.f32.mrf.mxu0
        %v872 = vadd.f32 %v409, %v871
        %v873 = vpop.f32.mrf.mxu0
        %v874 = vadd.f32 %v414, %v873
        %875 = vdwg.mxu0
        %876 = vmatpush.bf16.msra.mxu0 0
        %877 = vmatpush.bf16.msra.mxu0 0
        %878 = vmatpush.bf16.msra.mxu0 0
        %879 = vmatpush.bf16.msra.mxu0 %v796
        %880 = vmatpush.bf16.msra.mxu0 %v688
        %881 = vmatpush.bf16.msra.mxu0 %v672
        %882 = vmatpush.bf16.msra.mxu0 %v656
        %883 = vmatpush.bf16.msra.mxu0 %v640
        %884 = vmatmul.bf16.gmra.mxu0 %v783
        %v885 = vpop.f32.mrf.mxu0
        %v886 = vadd.f32 %v409, %v885
        %v887 = vpop.f32.mrf.mxu0
        %v888 = vadd.f32 %v414, %v887
        %889 = vdwg.mxu0
        %890 = vmatpush.bf16.msra.mxu0 0
        %891 = vmatpush.bf16.msra.mxu0 0
        %892 = vmatpush.bf16.msra.mxu0 0
        %893 = vmatpush.bf16.msra.mxu0 %v799
        %894 = vmatpush.bf16.msra.mxu0 %v689
        %895 = vmatpush.bf16.msra.mxu0 %v673
        %896 = vmatpush.bf16.msra.mxu0 %v657
        %897 = vmatpush.bf16.msra.mxu0 %v641
        %898 = vmatmul.bf16.gmra.mxu0 %v783
        %v899 = vpop.f32.mrf.mxu0
        %v900 = vadd.f32 %v409, %v899
        %v901 = vpop.f32.mrf.mxu0
        %v902 = vadd.f32 %v414, %v901
        %903 = vdwg.mxu0
        %904 = vmatpush.bf16.msra.mxu0 0
        %905 = vmatpush.bf16.msra.mxu0 0
        %906 = vmatpush.bf16.msra.mxu0 0
        %907 = vmatpush.bf16.msra.mxu0 %v802
        %908 = vmatpush.bf16.msra.mxu0 %v690
        %909 = vmatpush.bf16.msra.mxu0 %v674
        %910 = vmatpush.bf16.msra.mxu0 %v658
        %911 = vmatpush.bf16.msra.mxu0 %v642
        %912 = vmatmul.bf16.gmra.mxu0 %v783
        %v913 = vpop.f32.mrf.mxu0
        %v914 = vadd.f32 %v409, %v913
        %v915 = vpop.f32.mrf.mxu0
        %v916 = vadd.f32 %v414, %v915
        %917 = vdwg.mxu0
        %918 = vmatpush.bf16.msra.mxu0 0
        %919 = vmatpush.bf16.msra.mxu0 0
        %920 = vmatpush.bf16.msra.mxu0 0
        %921 = vmatpush.bf16.msra.mxu0 %v805
        %922 = vmatpush.bf16.msra.mxu0 %v691
        %923 = vmatpush.bf16.msra.mxu0 %v675
        %924 = vmatpush.bf16.msra.mxu0 %v659
        %925 = vmatpush.bf16.msra.mxu0 %v643
        %926 = vmatmul.bf16.gmra.mxu0 %v783
        %v927 = vpop.f32.mrf.mxu0
        %v928 = vadd.f32 %v409, %v927
        %v929 = vpop.f32.mrf.mxu0
        %v930 = vadd.f32 %v414, %v929
        %931 = vdwg.mxu0
        %932 = vmatpush.bf16.msra.mxu0 0
        %933 = vmatpush.bf16.msra.mxu0 0
        %934 = vmatpush.bf16.msra.mxu0 0
        %935 = vmatpush.bf16.msra.mxu0 %v808
        %936 = vmatpush.bf16.msra.mxu0 %v692
        %937 = vmatpush.bf16.msra.mxu0 %v676
        %938 = vmatpush.bf16.msra.mxu0 %v660
        %939 = vmatpush.bf16.msra.mxu0 %v644
        %940 = vmatmul.bf16.gmra.mxu0 %v783
        %v941 = vpop.f32.mrf.mxu0
        %v942 = vadd.f32 %v409, %v941
        %v943 = vpop.f32.mrf.mxu0
        %v944 = vadd.f32 %v414, %v943
        %945 = vdwg.mxu0
        %946 = vmatpush.bf16.msra.mxu0 0
        %947 = vmatpush.bf16.msra.mxu0 0
        %948 = vmatpush.bf16.msra.mxu0 0
        %949 = vmatpush.bf16.msra.mxu0 %v811
        %950 = vmatpush.bf16.msra.mxu0 %v693
        %951 = vmatpush.bf16.msra.mxu0 %v677
        %952 = vmatpush.bf16.msra.mxu0 %v661
        %953 = vmatpush.bf16.msra.mxu0 %v645
        %954 = vmatmul.bf16.gmra.mxu0 %v783
        %v955 = vpop.f32.mrf.mxu0
        %v956 = vadd.f32 %v409, %v955
        %v957 = vpop.f32.mrf.mxu0
        %v958 = vadd.f32 %v414, %v957
        %959 = vdwg.mxu0
        %960 = vmatpush.bf16.msra.mxu0 0
        %961 = vmatpush.bf16.msra.mxu0 0
        %962 = vmatpush.bf16.msra.mxu0 0
        %963 = vmatpush.bf16.msra.mxu0 %v814
        %964 = vmatpush.bf16.msra.mxu0 %v694
        %965 = vmatpush.bf16.msra.mxu0 %v678
        %966 = vmatpush.bf16.msra.mxu0 %v662
        %967 = vmatpush.bf16.msra.mxu0 %v646
        %968 = vmatmul.bf16.gmra.mxu0 %v783
        %v969 = vpop.f32.mrf.mxu0
        %v970 = vadd.f32 %v409, %v969
        %v971 = vpop.f32.mrf.mxu0
        %v972 = vadd.f32 %v414, %v971
        %973 = vdwg.mxu0
        %974 = vmatpush.bf16.msra.mxu0 0
        %975 = vmatpush.bf16.msra.mxu0 0
        %976 = vmatpush.bf16.msra.mxu0 0
        %977 = vmatpush.bf16.msra.mxu0 %v817
        %978 = vmatpush.bf16.msra.mxu0 %v695
        %979 = vmatpush.bf16.msra.mxu0 %v679
        %980 = vmatpush.bf16.msra.mxu0 %v663
        %981 = vmatpush.bf16.msra.mxu0 %v647
        %982 = vmatmul.bf16.gmra.mxu0 %v783
        %v983 = vpop.f32.mrf.mxu0
        %v984 = vadd.f32 %v409, %v983
        %v985 = vpop.f32.mrf.mxu0
        %v986 = vadd.f32 %v414, %v985
        %987 = vdwg.mxu0
        %988 = vmatpush.bf16.msra.mxu0 0
        %989 = vmatpush.bf16.msra.mxu0 0
        %990 = vmatpush.bf16.msra.mxu0 0
        %991 = vmatpush.bf16.msra.mxu0 %v820
        %992 = vmatpush.bf16.msra.mxu0 %v696
        %993 = vmatpush.bf16.msra.mxu0 %v680
        %994 = vmatpush.bf16.msra.mxu0 %v664
        %995 = vmatpush.bf16.msra.mxu0 %v648
        %996 = vmatmul.bf16.gmra.mxu0 %v783
        %v997 = vpop.f32.mrf.mxu0
        %v998 = vadd.f32 %v409, %v997
        %v999 = vpop.f32.mrf.mxu0
        %v1000 = vadd.f32 %v414, %v999
        %1001 = vdwg.mxu0
        %1002 = vmatpush.bf16.msra.mxu0 0
        %1003 = vmatpush.bf16.msra.mxu0 0
        %1004 = vmatpush.bf16.msra.mxu0 0
        %1005 = vmatpush.bf16.msra.mxu0 %v823
        %1006 = vmatpush.bf16.msra.mxu0 %v697
        %1007 = vmatpush.bf16.msra.mxu0 %v681
        %1008 = vmatpush.bf16.msra.mxu0 %v665
        %1009 = vmatpush.bf16.msra.mxu0 %v649
        %1010 = vmatmul.bf16.gmra.mxu0 %v783
        %v1011 = vpop.f32.mrf.mxu0
        %v1012 = vadd.f32 %v409, %v1011
        %v1013 = vpop.f32.mrf.mxu0
        %v1014 = vadd.f32 %v414, %v1013
        %1015 = vdwg.mxu0
        %1016 = vmatpush.bf16.msra.mxu0 0
        %1017 = vmatpush.bf16.msra.mxu0 0
        %1018 = vmatpush.bf16.msra.mxu0 0
        %1019 = vmatpush.bf16.msra.mxu0 %v826
        %1020 = vmatpush.bf16.msra.mxu0 %v698
        %1021 = vmatpush.bf16.msra.mxu0 %v682
        %1022 = vmatpush.bf16.msra.mxu0 %v666
        %1023 = vmatpush.bf16.msra.mxu0 %v650
        %1024 = vmatmul.bf16.gmra.mxu0 %v783
        %v1025 = vpop.f32.mrf.mxu0
        %v1026 = vadd.f32 %v409, %v1025
        %v1027 = vpop.f32.mrf.mxu0
        %v1028 = vadd.f32 %v414, %v1027
        %1029 = vdwg.mxu0
        %1030 = vmatpush.bf16.msra.mxu0 0
        %1031 = vmatpush.bf16.msra.mxu0 0
        %1032 = vmatpush.bf16.msra.mxu0 0
        %1033 = vmatpush.bf16.msra.mxu0 %v829
        %1034 = vmatpush.bf16.msra.mxu0 %v699
        %1035 = vmatpush.bf16.msra.mxu0 %v683
        %1036 = vmatpush.bf16.msra.mxu0 %v667
        %1037 = vmatpush.bf16.msra.mxu0 %v651
        %1038 = vmatmul.bf16.gmra.mxu0 %v783
        %v1039 = vpop.f32.mrf.mxu0
        %v1040 = vadd.f32 %v409, %v1039
        %v1041 = vpop.f32.mrf.mxu0
        %v1042 = vadd.f32 %v414, %v1041
        %1043 = vdwg.mxu0
        %1044 = vmatpush.bf16.msra.mxu0 0
        %1045 = vmatpush.bf16.msra.mxu0 0
        %1046 = vmatpush.bf16.msra.mxu0 0
        %1047 = vmatpush.bf16.msra.mxu0 %v832
        %1048 = vmatpush.bf16.msra.mxu0 %v700
        %1049 = vmatpush.bf16.msra.mxu0 %v684
        %1050 = vmatpush.bf16.msra.mxu0 %v668
        %1051 = vmatpush.bf16.msra.mxu0 %v652
        %1052 = vmatmul.bf16.gmra.mxu0 %v783
        %v1053 = vpop.f32.mrf.mxu0
        %v1054 = vadd.f32 %v409, %v1053
        %v1055 = vpop.f32.mrf.mxu0
        %v1056 = vadd.f32 %v414, %v1055
        %1057 = vdwg.mxu0
        %v1058 = vmax.f32 %v844, 0.0
        %v1059 = vmax.f32 %v858, 0.0
        %v1060 = vmax.f32 %v872, 0.0
        %v1061 = vmax.f32 %v886, 0.0
        %v1062 = vmax.f32 %v900, 0.0
        %v1063 = vmax.f32 %v914, 0.0
        %v1064 = vmax.f32 %v928, 0.0
        %v1065 = vmax.f32 %v942, 0.0
        %v1066 = vmax.f32 %v956, 0.0
        %v1067 = vmax.f32 %v970, 0.0
        %v1068 = vmax.f32 %v984, 0.0
        %v1069 = vmax.f32 %v998, 0.0
        %v1070 = vmax.f32 %v1012, 0.0
        %v1071 = vmax.f32 %v1026, 0.0
        %v1072 = vmax.f32 %v1040, 0.0
        %v1073 = vmax.f32 %v1054, 0.0
        %v1074 = vmax.f32 %v846, 0.0
        %v1075 = vmax.f32 %v860, 0.0
        %v1076 = vmax.f32 %v874, 0.0
        %v1077 = vmax.f32 %v888, 0.0
        %v1078 = vmax.f32 %v902, 0.0
        %v1079 = vmax.f32 %v916, 0.0
        %v1080 = vmax.f32 %v930, 0.0
        %v1081 = vmax.f32 %v944, 0.0
        %v1082 = vmax.f32 %v958, 0.0
        %v1083 = vmax.f32 %v972, 0.0
        %v1084 = vmax.f32 %v986, 0.0
        %v1085 = vmax.f32 %v1000, 0.0
        %v1086 = vmax.f32 %v1014, 0.0
        %v1087 = vmax.f32 %v1028, 0.0
        %v1088 = vmax.f32 %v1042, 0.0
        %v1089 = vmax.f32 %v1056, 0.0
        %1090 = vst [vmem:[%s326] sm:$0xff] %v1058
        %1091 = vst [vmem:[%s326 + $0x8] sm:$0xff] %v1059
        %1092 = vst [vmem:[%s326 + $0x10] sm:$0xff] %v1060
        %1093 = vst [vmem:[%s326 + $0x18] sm:$0xff] %v1061
        %1094 = vst [vmem:[%s326 + $0x20] sm:$0xff] %v1062
        %1095 = vst [vmem:[%s326 + $0x28] sm:$0xff] %v1063
        %1096 = vst [vmem:[%s326 + $0x30] sm:$0xff] %v1064
        %1097 = vst [vmem:[%s326 + $0x38] sm:$0xff] %v1065
        %1098 = vst [vmem:[%s326 + $0x40] sm:$0xff] %v1066
        %1099 = vst [vmem:[%s326 + $0x48] sm:$0xff] %v1067
        %1100 = vst [vmem:[%s326 + $0x50] sm:$0xff] %v1068
        %1101 = vst [vmem:[%s326 + $0x58] sm:$0xff] %v1069
        %1102 = vst [vmem:[%s326 + $0x60] sm:$0xff] %v1070
        %1103 = vst [vmem:[%s326 + $0x68] sm:$0xff] %v1071
        %1104 = vst [vmem:[%s326 + $0x70] sm:$0xff] %v1072
        %1105 = vst [vmem:[%s326 + $0x78] sm:$0xff] %v1073
        %1106 = vst [vmem:[%s326 + $0x80] sm:$0xff] %v1074
        %1107 = vst [vmem:[%s326 + $0x88] sm:$0xff] %v1075
        %1108 = vst [vmem:[%s326 + $0x90] sm:$0xff] %v1076
        %1109 = vst [vmem:[%s326 + $0x98] sm:$0xff] %v1077
        %1110 = vst [vmem:[%s326 + $0xa0] sm:$0xff] %v1078
        %1111 = vst [vmem:[%s326 + $0xa8] sm:$0xff] %v1079
        %1112 = vst [vmem:[%s326 + $0xb0] sm:$0xff] %v1080
        %1113 = vst [vmem:[%s326 + $0xb8] sm:$0xff] %v1081
        %1114 = vst [vmem:[%s326 + $0xc0] sm:$0xff] %v1082
        %1115 = vst [vmem:[%s326 + $0xc8] sm:$0xff] %v1083
        %1116 = vst [vmem:[%s326 + $0xd0] sm:$0xff] %v1084
        %1117 = vst [vmem:[%s326 + $0xd8] sm:$0xff] %v1085
        %1118 = vst [vmem:[%s326 + $0xe0] sm:$0xff] %v1086
        %1119 = vst [vmem:[%s326 + $0xe8] sm:$0xff] %v1087
        %1120 = vst [vmem:[%s326 + $0xf0] sm:$0xff] %v1088
        %1121 = vst [vmem:[%s326 + $0xf8] sm:$0xff] %v1089
        %s1122 = sand.u32 %s90, 1
        %s1123 = sand.u32 %s90, 1
        %s1124 = smul.addr %s1123, 256
        %s1125 = scalar_lea.vmem [#allocation3], %s1124
        // Predicated region
        $region56: #{simple_conv_net_forward.9} parent=50 // pred_check
          %p1126 = pneg %p100
        $region57: #{simple_conv_net_forward.9} parent=50 // pred_check_branch
          %1128 = sbr.rel (%p1126) target = $region59
        $region58: #{simple_conv_net_forward.9} parent=50 // pred_region
          %s1129 = smul.u32 16, %s14
          %s1130 = smul.addr %s1129, 8
          %s1131 = scalar_lea.vmem %s3, %s1130
          // Predicated region
          $region60: #{simple_conv_net_forward.9} parent=58 // pred_check
            _
          $region61: #{simple_conv_net_forward.9} parent=58 // pred_check_branch
            %1133 = sbr.rel (0) target = $region63
          $region62: #{simple_conv_net_forward.9} parent=58 // pred_region
            // Predicated region
            $region64: #{simple_conv_net_forward.9} parent=62 // pred_check
              _
            $region65: #{simple_conv_net_forward.9} parent=62 // pred_check_branch
              %1135 = sbr.rel (0) target = $region67
            $region66: #{simple_conv_net_forward.9} parent=62 // pred_region
              loop: start=0, step=1, limit=1
              $region68: #{simple_conv_net_forward.9} parent=66 // loop_pre_header
                _
              $region69: #{simple_conv_net_forward.9} parent=66 // loop_header
                %s1137 = sphi 0, %s1141
                %p1138 = scmp.ge.s32.totalorder %s1137, 1
                %s1142 = sphi %s1125, %s1125
                %s1143 = sphi %s1131, %s1131
              $region70: #{simple_conv_net_forward.9} parent=66 // loop_header_branch
                %1140 = sbr.rel (%p1138) target = $region74
              $region71: #{simple_conv_net_forward.9} parent=66 // loop_body
                %v1144 = vld [vmem:[%s1142] sm:$0xff]
                %1145 = vst [vmem:[%s1143] sm:$0xff] %v1144
                %v1146 = vld [vmem:[%s1142 + $0x8] sm:$0xff]
                %1147 = vst [vmem:[%s1143 + $0x8] sm:$0xff] %v1146
                %v1148 = vld [vmem:[%s1142 + $0x10] sm:$0xff]
                %1149 = vst [vmem:[%s1143 + $0x10] sm:$0xff] %v1148
                %v1150 = vld [vmem:[%s1142 + $0x18] sm:$0xff]
                %1151 = vst [vmem:[%s1143 + $0x18] sm:$0xff] %v1150
                %v1152 = vld [vmem:[%s1142 + $0x20] sm:$0xff]
                %1153 = vst [vmem:[%s1143 + $0x20] sm:$0xff] %v1152
                %v1154 = vld [vmem:[%s1142 + $0x28] sm:$0xff]
                %1155 = vst [vmem:[%s1143 + $0x28] sm:$0xff] %v1154
                %v1156 = vld [vmem:[%s1142 + $0x30] sm:$0xff]
                %1157 = vst [vmem:[%s1143 + $0x30] sm:$0xff] %v1156
                %v1158 = vld [vmem:[%s1142 + $0x38] sm:$0xff]
                %1159 = vst [vmem:[%s1143 + $0x38] sm:$0xff] %v1158
                %v1160 = vld [vmem:[%s1142 + $0x40] sm:$0xff]
                %1161 = vst [vmem:[%s1143 + $0x40] sm:$0xff] %v1160
                %v1162 = vld [vmem:[%s1142 + $0x48] sm:$0xff]
                %1163 = vst [vmem:[%s1143 + $0x48] sm:$0xff] %v1162
                %v1164 = vld [vmem:[%s1142 + $0x50] sm:$0xff]
                %1165 = vst [vmem:[%s1143 + $0x50] sm:$0xff] %v1164
                %v1166 = vld [vmem:[%s1142 + $0x58] sm:$0xff]
                %1167 = vst [vmem:[%s1143 + $0x58] sm:$0xff] %v1166
                %v1168 = vld [vmem:[%s1142 + $0x60] sm:$0xff]
                %1169 = vst [vmem:[%s1143 + $0x60] sm:$0xff] %v1168
                %v1170 = vld [vmem:[%s1142 + $0x68] sm:$0xff]
                %1171 = vst [vmem:[%s1143 + $0x68] sm:$0xff] %v1170
                %v1172 = vld [vmem:[%s1142 + $0x70] sm:$0xff]
                %1173 = vst [vmem:[%s1143 + $0x70] sm:$0xff] %v1172
                %v1174 = vld [vmem:[%s1142 + $0x78] sm:$0xff]
                %1175 = vst [vmem:[%s1143 + $0x78] sm:$0xff] %v1174
                %v1176 = vld [vmem:[%s1142 + $0x80] sm:$0xff]
                %1177 = vst [vmem:[%s1143 + $0x100] sm:$0xff] %v1176
                %v1178 = vld [vmem:[%s1142 + $0x88] sm:$0xff]
                %1179 = vst [vmem:[%s1143 + $0x108] sm:$0xff] %v1178
                %v1180 = vld [vmem:[%s1142 + $0x90] sm:$0xff]
                %1181 = vst [vmem:[%s1143 + $0x110] sm:$0xff] %v1180
                %v1182 = vld [vmem:[%s1142 + $0x98] sm:$0xff]
                %1183 = vst [vmem:[%s1143 + $0x118] sm:$0xff] %v1182
                %v1184 = vld [vmem:[%s1142 + $0xa0] sm:$0xff]
                %1185 = vst [vmem:[%s1143 + $0x120] sm:$0xff] %v1184
                %v1186 = vld [vmem:[%s1142 + $0xa8] sm:$0xff]
                %1187 = vst [vmem:[%s1143 + $0x128] sm:$0xff] %v1186
                %v1188 = vld [vmem:[%s1142 + $0xb0] sm:$0xff]
                %1189 = vst [vmem:[%s1143 + $0x130] sm:$0xff] %v1188
                %v1190 = vld [vmem:[%s1142 + $0xb8] sm:$0xff]
                %1191 = vst [vmem:[%s1143 + $0x138] sm:$0xff] %v1190
                %v1192 = vld [vmem:[%s1142 + $0xc0] sm:$0xff]
                %1193 = vst [vmem:[%s1143 + $0x140] sm:$0xff] %v1192
                %v1194 = vld [vmem:[%s1142 + $0xc8] sm:$0xff]
                %1195 = vst [vmem:[%s1143 + $0x148] sm:$0xff] %v1194
                %v1196 = vld [vmem:[%s1142 + $0xd0] sm:$0xff]
                %1197 = vst [vmem:[%s1143 + $0x150] sm:$0xff] %v1196
                %v1198 = vld [vmem:[%s1142 + $0xd8] sm:$0xff]
                %1199 = vst [vmem:[%s1143 + $0x158] sm:$0xff] %v1198
                %v1200 = vld [vmem:[%s1142 + $0xe0] sm:$0xff]
                %1201 = vst [vmem:[%s1143 + $0x160] sm:$0xff] %v1200
                %v1202 = vld [vmem:[%s1142 + $0xe8] sm:$0xff]
                %1203 = vst [vmem:[%s1143 + $0x168] sm:$0xff] %v1202
                %v1204 = vld [vmem:[%s1142 + $0xf0] sm:$0xff]
                %1205 = vst [vmem:[%s1143 + $0x170] sm:$0xff] %v1204
                %v1206 = vld [vmem:[%s1142 + $0xf8] sm:$0xff]
                %1207 = vst [vmem:[%s1143 + $0x178] sm:$0xff] %v1206
              $region72: #{simple_conv_net_forward.9} parent=66 // loop_footer
                %s1141 = sadd.s32 1, %s1137
              $region73: #{simple_conv_net_forward.9} parent=66 // loop_footer_branch
                %1136 = sbr.rel target = $region69
              $region74: #{simple_conv_net_forward.9} parent=66 // loop_exit
                _
            $region67: #{simple_conv_net_forward.9} parent=62 // pred_fallthru
              _
            // Predicated region
            $region75: #{simple_conv_net_forward.9} parent=62 // pred_check
              _
            $region76: #{simple_conv_net_forward.9} parent=62 // pred_check_branch
              %1209 = sbr.rel target = $region78
            $region77: #{simple_conv_net_forward.9} parent=62 // pred_region
              _
            $region78: #{simple_conv_net_forward.9} parent=62 // pred_fallthru
              _
          $region63: #{simple_conv_net_forward.9} parent=58 // pred_fallthru
            _
          %1210 = vnop
        $region59: #{simple_conv_net_forward.9} parent=50 // pred_fallthru
          _
      $region51: #{simple_conv_net_forward.9} parent=5 // pred_fallthru
        _
      %p1211 = scmp.le.s32.totalorder 2, %s9
      // Predicated region
      $region79: #{simple_conv_net_forward.9} parent=5 // pred_check
        %p1212 = pneg %p1211
      $region80: #{simple_conv_net_forward.9} parent=5 // pred_check_branch
        %1214 = sbr.rel (%p1212) target = $region82
      $region81: #{simple_conv_net_forward.9} parent=5 // pred_region
        %s1215 = ssub.s32 %s9, 2
        // Predicated region
        $region83: #{simple_conv_net_forward.9} parent=81 // pred_check
          %p1216 = pneg %p106
        $region84: #{simple_conv_net_forward.9} parent=81 // pred_check_branch
          %1218 = sbr.rel (%p1216) target = $region86
        $region85: #{simple_conv_net_forward.9} parent=81 // pred_region
          %s1219 = sand.u32 %s91, 1
          %s1220 = sand.u32 %s91, 1
          %s1221 = smul.addr %s1220, 256
          %s1222 = scalar_lea.vmem [#allocation3], %s1221
        $region86: #{simple_conv_net_forward.9} parent=81 // pred_fallthru
          _
      $region82: #{simple_conv_net_forward.9} parent=5 // pred_fallthru
        _
    $region6: #{simple_conv_net_forward.9} parent=1 // loop_footer
      %s13 = sadd.s32 1, %s9
    $region7: #{simple_conv_net_forward.9} parent=1 // loop_footer_branch
      %8 = sbr.rel target = $region3
    $region8: #{simple_conv_net_forward.9} parent=1 // loop_exit
      _

// kernel: simple_conv_net_forward.10
$region0: #{simple_conv_net_forward.10}
  #allocation0 [shape = 'u32[]', space=smem, size = 0x4, offset = 0x4, fixed_abs, tag = 'smem constant byte address 0x4 - core index']
  #allocation1 [shape = 'u32[72,128]{1,0:T(1,128)}', space=vmem, size = 0x9000, scoped, tag = 'internal scratch']
  %s0 = inlined_call_operand.vmem [shape: bf16[32,144], index: 0, kind: input, shape index: {}]
  %s1 = inlined_call_operand.vmem [shape: bf16[144,252], index: 1, kind: input, shape index: {}]
  %s2 = inlined_call_operand.vmem [shape: f32[32,1], index: 2, kind: input, shape index: {}]
  %s3 = inlined_call_operand.vmem [shape: f32[32,252], index: 3, kind: output, shape index: {}]
  %s4 = sld [smem:[#allocation0]]
  $region22: #{simple_conv_net_forward.10} parent=0
    _
  %s6 = ssub.s32 1, %s4
  %s7 = scalar_select 0, %s6, %s4
  // Predicated region
  $region2: #{simple_conv_net_forward.10} parent=0 // pred_check
    _
  $region3: #{simple_conv_net_forward.10} parent=0 // pred_check_branch
    %9 = sbr.rel (0) target = $region5
  $region4: #{simple_conv_net_forward.10} parent=0 // pred_region
    _
  $region5: #{simple_conv_net_forward.10} parent=0 // pred_fallthru
    _
  // Predicated region
  $region6: #{simple_conv_net_forward.10} parent=0 // pred_check
    _
  $region7: #{simple_conv_net_forward.10} parent=0 // pred_check_branch
    %11 = sbr.rel (0) target = $region9
  $region8: #{simple_conv_net_forward.10} parent=0 // pred_region
    _
  $region9: #{simple_conv_net_forward.10} parent=0 // pred_fallthru
    _
  // Predicated region
  $region10: #{simple_conv_net_forward.10} parent=0 // pred_check
    _
  $region11: #{simple_conv_net_forward.10} parent=0 // pred_check_branch
    %13 = sbr.rel (0) target = $region13
  $region12: #{simple_conv_net_forward.10} parent=0 // pred_region
    _
  $region13: #{simple_conv_net_forward.10} parent=0 // pred_fallthru
    _
  %v15 = vld [vmem:[%s0] sm:$0xff]
  %v16 = vld [vmem:[%s0 + $0x8] sm:$0xff]
  %v17 = vld [vmem:[%s0 + $0x10] sm:$0xff]
  %v18 = vld [vmem:[%s0 + $0x18] sm:$0xff]
  %v19 = vld [vmem:[%s1] sm:$0xff]
  %v20 = vld [vmem:[%s1 + $0x8] sm:$0xff]
  %v21 = vld [vmem:[%s1 + $0x10] sm:$0xff]
  %v22 = vld [vmem:[%s1 + $0x18] sm:$0xff]
  %v23 = vld [vmem:[%s1 + $0x20] sm:$0xff]
  %v24 = vld [vmem:[%s1 + $0x28] sm:$0xff]
  %v25 = vld [vmem:[%s1 + $0x30] sm:$0xff]
  %v26 = vld [vmem:[%s1 + $0x38] sm:$0xff]
  %v27 = vld [vmem:[%s1 + $0x40] sm:$0xff]
  %v28 = vld [vmem:[%s1 + $0x48] sm:$0xff]
  %v29 = vld [vmem:[%s1 + $0x50] sm:$0xff]
  %v30 = vld [vmem:[%s1 + $0x58] sm:$0xff]
  %v31 = vld [vmem:[%s1 + $0x60] sm:$0xff]
  %v32 = vld [vmem:[%s1 + $0x68] sm:$0xff]
  %v33 = vld [vmem:[%s1 + $0x70] sm:$0xff]
  %v34 = vld [vmem:[%s1 + $0x78] sm:$0xff]
  %v35 = vld [vmem:[%s1 + $0x80] sm:$0xff]
  %v36 = vld [vmem:[%s1 + $0x88] sm:$0xff]
  %v37 = vld [vmem:[%s2] sm:$0xff]
  %v38 = vld [vmem:[%s2 + $0x8] sm:$0xff]
  %v39 = vld [vmem:[%s2 + $0x10] sm:$0xff]
  %v40 = vld [vmem:[%s2 + $0x18] sm:$0xff]
  %42 = vset.pattern.permute.xlu0 0
  %43 = vperm.xlu0 %42, %v37
  %v44 = vpop.permute.xlu0 %43
  %47 = vset.pattern.permute.xlu0 0
  %48 = vperm.xlu0 %47, %v38
  %v49 = vpop.permute.xlu0 %48
  %52 = vset.pattern.permute.xlu0 0
  %53 = vperm.xlu0 %52, %v39
  %v54 = vpop.permute.xlu0 %53
  %57 = vset.pattern.permute.xlu0 0
  %58 = vperm.xlu0 %57, %v40
  %v59 = vpop.permute.xlu0 %58
  %v65 = vunpack.c.l.b16 %v15
  %v66 = vunpack.c.h.b16 %v15
  %v67 = vunpack.c.l.b16 %v16
  %v68 = vunpack.c.h.b16 %v16
  %v69 = vunpack.c.l.b16 %v17
  %v70 = vunpack.c.h.b16 %v17
  %v71 = vunpack.c.l.b16 %v18
  %v72 = vunpack.c.h.b16 %v18
  %v73 = vpack.c.b16 %v67, %v65
  %v74 = vpack.c.b16 %v68, %v66
  %v75 = vpack.c.b16 %v71, %v69
  %v76 = vpack.c.b16 %v72, %v70
  %v97 = vunpack.c.l.b16 %v19
  %v98 = vunpack.c.h.b16 %v19
  %v99 = vunpack.c.l.b16 %v20
  %v100 = vunpack.c.h.b16 %v20
  %v101 = vunpack.c.l.b16 %v21
  %v102 = vunpack.c.h.b16 %v21
  %v103 = vunpack.c.l.b16 %v22
  %v104 = vunpack.c.h.b16 %v22
  %v105 = vunpack.c.l.b16 %v23
  %v106 = vunpack.c.h.b16 %v23
  %v107 = vunpack.c.l.b16 %v24
  %v108 = vunpack.c.h.b16 %v24
  %v109 = vunpack.c.l.b16 %v25
  %v110 = vunpack.c.h.b16 %v25
  %v111 = vunpack.c.l.b16 %v26
  %v112 = vunpack.c.h.b16 %v26
  %v113 = vunpack.c.l.b16 %v27
  %v114 = vunpack.c.h.b16 %v27
  %v115 = vunpack.c.l.b16 %v28
  %v116 = vunpack.c.h.b16 %v28
  %v117 = vunpack.c.l.b16 %v29
  %v118 = vunpack.c.h.b16 %v29
  %v119 = vunpack.c.l.b16 %v30
  %v120 = vunpack.c.h.b16 %v30
  %v121 = vunpack.c.l.b16 %v31
  %v122 = vunpack.c.h.b16 %v31
  %v123 = vunpack.c.l.b16 %v32
  %v124 = vunpack.c.h.b16 %v32
  %v125 = vunpack.c.l.b16 %v33
  %v126 = vunpack.c.h.b16 %v33
  %v127 = vunpack.c.l.b16 %v34
  %v128 = vunpack.c.h.b16 %v34
  %v129 = vunpack.c.l.b16 %v35
  %v130 = vunpack.c.h.b16 %v35
  %v131 = vunpack.c.l.b16 %v36
  %v132 = vunpack.c.h.b16 %v36
  %v133 = vpack.c.b16 %v99, %v97
  %v134 = vpack.c.b16 %v100, %v98
  %v135 = vpack.c.b16 %v103, %v101
  %v136 = vpack.c.b16 %v104, %v102
  %v137 = vpack.c.b16 %v107, %v105
  %v138 = vpack.c.b16 %v108, %v106
  %v139 = vpack.c.b16 %v111, %v109
  %v140 = vpack.c.b16 %v112, %v110
  %v141 = vpack.c.b16 %v115, %v113
  %v142 = vpack.c.b16 %v116, %v114
  %v143 = vpack.c.b16 %v119, %v117
  %v144 = vpack.c.b16 %v120, %v118
  %v145 = vpack.c.b16 %v123, %v121
  %v146 = vpack.c.b16 %v124, %v122
  %v147 = vpack.c.b16 %v127, %v125
  %v148 = vpack.c.b16 %v128, %v126
  %v149 = vpack.c.b16 %v131, %v129
  %v150 = vpack.c.b16 %v132, %v130
  %vm169 = vcmask 130048
  %v171 = vsel %vm169, %v74, 0
  %v174 = vsel %vm169, %v76, 0
  %176 = vmatpush.bf16.msra.mxu0 %v147
  %177 = vmatpush.bf16.msra.mxu0 %v145
  %178 = vmatpush.bf16.msra.mxu0 %v143
  %179 = vmatpush.bf16.msra.mxu0 %v141
  %180 = vmatpush.bf16.msra.mxu0 %v139
  %181 = vmatpush.bf16.msra.mxu0 %v137
  %182 = vmatpush.bf16.msra.mxu0 %v135
  %183 = vmatpush.bf16.msra.mxu0 %v133
  %184 = vmatmul.bf16.gmra.mxu0 %v73
  %v185 = vpop.f32.mrf.mxu0
  %v186 = vadd.f32 %v44, %v185
  %v187 = vpop.f32.mrf.mxu0
  %v188 = vadd.f32 %v49, %v187
  %189 = vmatmul.bf16.gmra.mxu0 %v75
  %v190 = vpop.f32.mrf.mxu0
  %v191 = vadd.f32 %v54, %v190
  %v192 = vpop.f32.mrf.mxu0
  %v193 = vadd.f32 %v59, %v192
  %194 = vdwg.mxu0
  %195 = vmatpush.bf16.msra.mxu0 0
  %196 = vmatpush.bf16.msra.mxu0 0
  %197 = vmatpush.bf16.msra.mxu0 0
  %198 = vmatpush.bf16.msra.mxu0 0
  %199 = vmatpush.bf16.msra.mxu0 0
  %200 = vmatpush.bf16.msra.mxu0 0
  %201 = vmatpush.bf16.msra.mxu0 0
  %202 = vmatpush.bf16.msra.mxu0 %v149
  %203 = vmatmul.bf16.gmra.mxu0 %v171
  %v204 = vpop.f32.mrf.mxu0
  %v205 = vadd.f32 %v186, %v204
  %v206 = vpop.f32.mrf.mxu0
  %v207 = vadd.f32 %v188, %v206
  %208 = vmatmul.bf16.gmra.mxu0 %v174
  %v209 = vpop.f32.mrf.mxu0
  %v210 = vadd.f32 %v191, %v209
  %v211 = vpop.f32.mrf.mxu0
  %v212 = vadd.f32 %v193, %v211
  %213 = vdwg.mxu0
  %214 = vmatpush.bf16.msra.mxu0 %v148
  %215 = vmatpush.bf16.msra.mxu0 %v146
  %216 = vmatpush.bf16.msra.mxu0 %v144
  %217 = vmatpush.bf16.msra.mxu0 %v142
  %218 = vmatpush.bf16.msra.mxu0 %v140
  %219 = vmatpush.bf16.msra.mxu0 %v138
  %220 = vmatpush.bf16.msra.mxu0 %v136
  %221 = vmatpush.bf16.msra.mxu0 %v134
  %222 = vmatmul.bf16.gmra.mxu0 %v73
  %v223 = vpop.f32.mrf.mxu0
  %v224 = vadd.f32 %v44, %v223
  %v225 = vpop.f32.mrf.mxu0
  %v226 = vadd.f32 %v49, %v225
  %227 = vmatmul.bf16.gmra.mxu0 %v75
  %v228 = vpop.f32.mrf.mxu0
  %v229 = vadd.f32 %v54, %v228
  %v230 = vpop.f32.mrf.mxu0
  %v231 = vadd.f32 %v59, %v230
  %232 = vdwg.mxu0
  %233 = vmatpush.bf16.msra.mxu0 0
  %234 = vmatpush.bf16.msra.mxu0 0
  %235 = vmatpush.bf16.msra.mxu0 0
  %236 = vmatpush.bf16.msra.mxu0 0
  %237 = vmatpush.bf16.msra.mxu0 0
  %238 = vmatpush.bf16.msra.mxu0 0
  %239 = vmatpush.bf16.msra.mxu0 0
  %240 = vmatpush.bf16.msra.mxu0 %v150
  %241 = vmatmul.bf16.gmra.mxu0 %v171
  %v242 = vpop.f32.mrf.mxu0
  %v243 = vadd.f32 %v224, %v242
  %v244 = vpop.f32.mrf.mxu0
  %v245 = vadd.f32 %v226, %v244
  %246 = vmatmul.bf16.gmra.mxu0 %v174
  %v247 = vpop.f32.mrf.mxu0
  %v248 = vadd.f32 %v229, %v247
  %v249 = vpop.f32.mrf.mxu0
  %v250 = vadd.f32 %v231, %v249
  %251 = vdwg.mxu0
  %v252 = vmax.f32 %v205, 0.0
  %v253 = vmax.f32 %v243, 0.0
  %v254 = vmax.f32 %v207, 0.0
  %v255 = vmax.f32 %v245, 0.0
  %v256 = vmax.f32 %v210, 0.0
  %v257 = vmax.f32 %v248, 0.0
  %v258 = vmax.f32 %v212, 0.0
  %v259 = vmax.f32 %v250, 0.0
  %260 = vst [vmem:[%s3] sm:$0xff] %v252
  %vm261 = vcmask 1014784
  %262 = vst.msk [vmem:[%s3 + $0x8] sm:$0xff] %vm261, %v253
  %263 = vst [vmem:[%s3 + $0x10] sm:$0xff] %v254
  %264 = vst.msk [vmem:[%s3 + $0x18] sm:$0xff] %vm261, %v255
  %265 = vst [vmem:[%s3 + $0x20] sm:$0xff] %v256
  %266 = vst.msk [vmem:[%s3 + $0x28] sm:$0xff] %vm261, %v257
  %267 = vst [vmem:[%s3 + $0x30] sm:$0xff] %v258
  %268 = vst.msk [vmem:[%s3 + $0x38] sm:$0xff] %vm261, %v259
  // Predicated region
  $region14: #{simple_conv_net_forward.10} parent=0 // pred_check
    _
  $region15: #{simple_conv_net_forward.10} parent=0 // pred_check_branch
    %270 = sbr.rel (0) target = $region17
  $region16: #{simple_conv_net_forward.10} parent=0 // pred_region
    _
  $region17: #{simple_conv_net_forward.10} parent=0 // pred_fallthru
    _
  // Predicated region
  $region18: #{simple_conv_net_forward.10} parent=0 // pred_check
    _
  $region19: #{simple_conv_net_forward.10} parent=0 // pred_check_branch
    %272 = sbr.rel (0) target = $region21
  $region20: #{simple_conv_net_forward.10} parent=0 // pred_region
    _
  $region21: #{simple_conv_net_forward.10} parent=0 // pred_fallthru
    _

// kernel: simple_conv_net_forward.11
$region0: #{simple_conv_net_forward.11}
  #allocation0 [shape = 'u32[]', space=smem, size = 0x4, offset = 0x4, fixed_abs, tag = 'smem constant byte address 0x4 - core index']
  #allocation1 [shape = 'u32[72,128]{1,0:T(1,128)}', space=vmem, size = 0x9000, scoped, tag = 'internal scratch']
  %s0 = inlined_call_operand.vmem [shape: bf16[10,384], index: 0, kind: input, shape index: {}]
  %s1 = inlined_call_operand.vmem [shape: bf16[384,2], index: 1, kind: input, shape index: {}]
  %s2 = inlined_call_operand.vmem [shape: f32[10,1], index: 2, kind: input, shape index: {}]
  %s3 = inlined_call_operand.vmem [shape: f32[10,2], index: 3, kind: output, shape index: {}]
  %s4 = sld [smem:[#allocation0]]
  $region22: #{simple_conv_net_forward.11} parent=0
    _
  %s6 = ssub.s32 1, %s4
  %s7 = scalar_select 0, %s6, %s4
  // Predicated region
  $region2: #{simple_conv_net_forward.11} parent=0 // pred_check
    _
  $region3: #{simple_conv_net_forward.11} parent=0 // pred_check_branch
    %9 = sbr.rel (0) target = $region5
  $region4: #{simple_conv_net_forward.11} parent=0 // pred_region
    _
  $region5: #{simple_conv_net_forward.11} parent=0 // pred_fallthru
    _
  // Predicated region
  $region6: #{simple_conv_net_forward.11} parent=0 // pred_check
    _
  $region7: #{simple_conv_net_forward.11} parent=0 // pred_check_branch
    %11 = sbr.rel (0) target = $region9
  $region8: #{simple_conv_net_forward.11} parent=0 // pred_region
    _
  $region9: #{simple_conv_net_forward.11} parent=0 // pred_fallthru
    _
  // Predicated region
  $region10: #{simple_conv_net_forward.11} parent=0 // pred_check
    _
  $region11: #{simple_conv_net_forward.11} parent=0 // pred_check_branch
    %13 = sbr.rel (0) target = $region13
  $region12: #{simple_conv_net_forward.11} parent=0 // pred_region
    _
  $region13: #{simple_conv_net_forward.11} parent=0 // pred_fallthru
    _
  %v14 = vld [vmem:[%s0] sm:$0xff]
  %v15 = vld [vmem:[%s0 + $0x8] sm:$0xf]
  %v16 = vld [vmem:[%s0 + $0xc] sm:$0x11]
  %v17 = vld [vmem:[%s0 + $0x14] sm:$0x1]
  %v18 = vld [vmem:[%s1] sm:$0xf]
  %v19 = vld [vmem:[%s1 + $0x4] sm:$0xf]
  %v20 = vld [vmem:[%s1 + $0x8] sm:$0xf]
  %v21 = vld [vmem:[%s1 + $0xc] sm:$0xf]
  %v22 = vld [vmem:[%s1 + $0x10] sm:$0xf]
  %v23 = vld [vmem:[%s1 + $0x14] sm:$0xf]
  %v24 = vld [vmem:[%s1 + $0x18] sm:$0xf]
  %v25 = vld [vmem:[%s1 + $0x1c] sm:$0xf]
  %v26 = vld [vmem:[%s1 + $0x20] sm:$0xf]
  %v27 = vld [vmem:[%s1 + $0x24] sm:$0xf]
  %v28 = vld [vmem:[%s1 + $0x28] sm:$0xf]
  %v29 = vld [vmem:[%s1 + $0x2c] sm:$0xf]
  %v30 = vld [vmem:[%s1 + $0x30] sm:$0xf]
  %v31 = vld [vmem:[%s1 + $0x34] sm:$0xf]
  %v32 = vld [vmem:[%s1 + $0x38] sm:$0xf]
  %v33 = vld [vmem:[%s1 + $0x3c] sm:$0xf]
  %v34 = vld [vmem:[%s1 + $0x40] sm:$0xf]
  %v35 = vld [vmem:[%s1 + $0x44] sm:$0xf]
  %v36 = vld [vmem:[%s1 + $0x48] sm:$0xf]
  %v37 = vld [vmem:[%s1 + $0x4c] sm:$0xf]
  %v38 = vld [vmem:[%s1 + $0x50] sm:$0xf]
  %v39 = vld [vmem:[%s1 + $0x54] sm:$0xf]
  %v40 = vld [vmem:[%s1 + $0x58] sm:$0xf]
  %v41 = vld [vmem:[%s1 + $0x5c] sm:$0xf]
  %v42 = vld [vmem:[%s1 + $0x60] sm:$0xf]
  %v43 = vld [vmem:[%s1 + $0x64] sm:$0xf]
  %v44 = vld [vmem:[%s1 + $0x68] sm:$0xf]
  %v45 = vld [vmem:[%s1 + $0x6c] sm:$0xf]
  %v46 = vld [vmem:[%s1 + $0x70] sm:$0xf]
  %v47 = vld [vmem:[%s1 + $0x74] sm:$0xf]
  %v48 = vld [vmem:[%s1 + $0x78] sm:$0xf]
  %v49 = vld [vmem:[%s1 + $0x7c] sm:$0xf]
  %v50 = vld [vmem:[%s1 + $0x80] sm:$0xf]
  %v51 = vld [vmem:[%s1 + $0x84] sm:$0xf]
  %v52 = vld [vmem:[%s1 + $0x88] sm:$0xf]
  %v53 = vld [vmem:[%s1 + $0x8c] sm:$0xf]
  %v54 = vld [vmem:[%s1 + $0x90] sm:$0xf]
  %v55 = vld [vmem:[%s1 + $0x94] sm:$0xf]
  %v56 = vld [vmem:[%s1 + $0x98] sm:$0xf]
  %v57 = vld [vmem:[%s1 + $0x9c] sm:$0xf]
  %v58 = vld [vmem:[%s1 + $0xa0] sm:$0xf]
  %v59 = vld [vmem:[%s1 + $0xa4] sm:$0xf]
  %v60 = vld [vmem:[%s1 + $0xa8] sm:$0xf]
  %v61 = vld [vmem:[%s1 + $0xac] sm:$0xf]
  %v62 = vld [vmem:[%s1 + $0xb0] sm:$0xf]
  %v63 = vld [vmem:[%s1 + $0xb4] sm:$0xf]
  %v64 = vld [vmem:[%s1 + $0xb8] sm:$0xf]
  %v65 = vld [vmem:[%s1 + $0xbc] sm:$0xf]
  %v66 = vld [vmem:[%s2] sm:$0xff]
  %v67 = vld [vmem:[%s2 + $0x8] sm:$0x3]
  %69 = vset.pattern.permute.xlu0 0
  %70 = vperm.xlu0 %69, %v66
  %v71 = vpop.permute.xlu0 %70
  %74 = vset.pattern.permute.xlu0 0
  %75 = vperm.xlu0 %74, %v67
  %v76 = vpop.permute.xlu0 %75
  %v82 = vunpack.c.l.b16 %v14
  %v83 = vunpack.c.h.b16 %v14
  %v84 = vunpack.c.l.b16 %v15
  %v85 = vunpack.c.l.b16 %v16
  %v86 = vunpack.c.h.b16 %v16
  %v87 = vunpack.c.l.b16 %v17
  %v88 = vpack.c.b16 %v85, %v82
  %v89 = vpack.c.b16 %v86, %v83
  %v90 = vpack.c.b16 %v87, %v84
  %v142 = vunpack.c.l.b16 %v18
  %v143 = vunpack.c.l.b16 %v19
  %v144 = vunpack.c.l.b16 %v20
  %v145 = vunpack.c.l.b16 %v21
  %v146 = vunpack.c.l.b16 %v22
  %v147 = vunpack.c.l.b16 %v23
  %v148 = vunpack.c.l.b16 %v24
  %v149 = vunpack.c.l.b16 %v25
  %v150 = vunpack.c.l.b16 %v26
  %v151 = vunpack.c.l.b16 %v27
  %v152 = vunpack.c.l.b16 %v28
  %v153 = vunpack.c.l.b16 %v29
  %v154 = vunpack.c.l.b16 %v30
  %v155 = vunpack.c.l.b16 %v31
  %v156 = vunpack.c.l.b16 %v32
  %v157 = vunpack.c.l.b16 %v33
  %v158 = vunpack.c.l.b16 %v34
  %v159 = vunpack.c.l.b16 %v35
  %v160 = vunpack.c.l.b16 %v36
  %v161 = vunpack.c.l.b16 %v37
  %v162 = vunpack.c.l.b16 %v38
  %v163 = vunpack.c.l.b16 %v39
  %v164 = vunpack.c.l.b16 %v40
  %v165 = vunpack.c.l.b16 %v41
  %v166 = vunpack.c.l.b16 %v42
  %v167 = vunpack.c.l.b16 %v43
  %v168 = vunpack.c.l.b16 %v44
  %v169 = vunpack.c.l.b16 %v45
  %v170 = vunpack.c.l.b16 %v46
  %v171 = vunpack.c.l.b16 %v47
  %v172 = vunpack.c.l.b16 %v48
  %v173 = vunpack.c.l.b16 %v49
  %v174 = vunpack.c.l.b16 %v50
  %v175 = vunpack.c.l.b16 %v51
  %v176 = vunpack.c.l.b16 %v52
  %v177 = vunpack.c.l.b16 %v53
  %v178 = vunpack.c.l.b16 %v54
  %v179 = vunpack.c.l.b16 %v55
  %v180 = vunpack.c.l.b16 %v56
  %v181 = vunpack.c.l.b16 %v57
  %v182 = vunpack.c.l.b16 %v58
  %v183 = vunpack.c.l.b16 %v59
  %v184 = vunpack.c.l.b16 %v60
  %v185 = vunpack.c.l.b16 %v61
  %v186 = vunpack.c.l.b16 %v62
  %v187 = vunpack.c.l.b16 %v63
  %v188 = vunpack.c.l.b16 %v64
  %v189 = vunpack.c.l.b16 %v65
  %v190 = vpack.c.b16 %v143, %v142
  %v191 = vpack.c.b16 %v145, %v144
  %v192 = vpack.c.b16 %v147, %v146
  %v193 = vpack.c.b16 %v149, %v148
  %v194 = vpack.c.b16 %v151, %v150
  %v195 = vpack.c.b16 %v153, %v152
  %v196 = vpack.c.b16 %v155, %v154
  %v197 = vpack.c.b16 %v157, %v156
  %v198 = vpack.c.b16 %v159, %v158
  %v199 = vpack.c.b16 %v161, %v160
  %v200 = vpack.c.b16 %v163, %v162
  %v201 = vpack.c.b16 %v165, %v164
  %v202 = vpack.c.b16 %v167, %v166
  %v203 = vpack.c.b16 %v169, %v168
  %v204 = vpack.c.b16 %v171, %v170
  %v205 = vpack.c.b16 %v173, %v172
  %v206 = vpack.c.b16 %v175, %v174
  %v207 = vpack.c.b16 %v177, %v176
  %v208 = vpack.c.b16 %v179, %v178
  %v209 = vpack.c.b16 %v181, %v180
  %v210 = vpack.c.b16 %v183, %v182
  %v211 = vpack.c.b16 %v185, %v184
  %v212 = vpack.c.b16 %v187, %v186
  %v213 = vpack.c.b16 %v189, %v188
  %238 = vmatpush.bf16.msra.mxu0 %v197
  %239 = vmatpush.bf16.msra.mxu0 %v196
  %240 = vmatpush.bf16.msra.mxu0 %v195
  %241 = vmatpush.bf16.msra.mxu0 %v194
  %242 = vmatpush.bf16.msra.mxu0 %v193
  %243 = vmatpush.bf16.msra.mxu0 %v192
  %244 = vmatpush.bf16.msra.mxu0 %v191
  %245 = vmatpush.bf16.msra.mxu0 %v190
  %246 = vmatmul.bf16.gmra.mxu0 %v88
  %v247 = vpop.f32.mrf.mxu0
  %v248 = vadd.f32 %v71, %v247
  %v249 = vpop.f32.mrf.mxu0
  %v250 = vadd.f32 %v76, %v249
  %251 = vdwg.mxu0
  %252 = vmatpush.bf16.msra.mxu0 %v205
  %253 = vmatpush.bf16.msra.mxu0 %v204
  %254 = vmatpush.bf16.msra.mxu0 %v203
  %255 = vmatpush.bf16.msra.mxu0 %v202
  %256 = vmatpush.bf16.msra.mxu0 %v201
  %257 = vmatpush.bf16.msra.mxu0 %v200
  %258 = vmatpush.bf16.msra.mxu0 %v199
  %259 = vmatpush.bf16.msra.mxu0 %v198
  %260 = vmatmul.bf16.gmra.mxu0 %v89
  %v261 = vpop.f32.mrf.mxu0
  %v262 = vadd.f32 %v248, %v261
  %v263 = vpop.f32.mrf.mxu0
  %v264 = vadd.f32 %v250, %v263
  %265 = vdwg.mxu0
  %266 = vmatpush.bf16.msra.mxu0 %v213
  %267 = vmatpush.bf16.msra.mxu0 %v212
  %268 = vmatpush.bf16.msra.mxu0 %v211
  %269 = vmatpush.bf16.msra.mxu0 %v210
  %270 = vmatpush.bf16.msra.mxu0 %v209
  %271 = vmatpush.bf16.msra.mxu0 %v208
  %272 = vmatpush.bf16.msra.mxu0 %v207
  %273 = vmatpush.bf16.msra.mxu0 %v206
  %274 = vmatmul.bf16.gmra.mxu0 %v90
  %v275 = vpop.f32.mrf.mxu0
  %v276 = vadd.f32 %v262, %v275
  %v277 = vpop.f32.mrf.mxu0
  %v278 = vadd.f32 %v264, %v277
  %279 = vdwg.mxu0
  %vm280 = vcmask 15360
  %281 = vst.msk [vmem:[%s3] sm:$0xff] %vm280, %v276
  %vm282 = vcmask 9216
  %283 = vst.msk [vmem:[%s3 + $0x8] sm:$0x3] %vm282, %v278
  // Predicated region
  $region14: #{simple_conv_net_forward.11} parent=0 // pred_check
    _
  $region15: #{simple_conv_net_forward.11} parent=0 // pred_check_branch
    %285 = sbr.rel (0) target = $region17
  $region16: #{simple_conv_net_forward.11} parent=0 // pred_region
    _
  $region17: #{simple_conv_net_forward.11} parent=0 // pred_fallthru
    _
  // Predicated region
  $region18: #{simple_conv_net_forward.11} parent=0 // pred_check
    _
  $region19: #{simple_conv_net_forward.11} parent=0 // pred_check_branch
    %287 = sbr.rel (0) target = $region21
  $region20: #{simple_conv_net_forward.11} parent=0 // pred_region
    _
  $region21: #{simple_conv_net_forward.11} parent=0 // pred_fallthru
    _

</llo_original>
